<compile_context>
chip_gen: v7x
topology: tpu7x:2x2x1
jax: 0.10.0
libtpu: 0.0.40
codegen_flags: <defaults>
</compile_context>

<pallas_src>
import numpy as np
import jax
import jax.numpy as jnp
from jax import lax, random
from jax.experimental import pallas as pl
from jax.experimental.pallas import tpu as pltpu


# ----------------------------------------------------------------------------
# Geometry of the conv stack (k=4, s=2, p=1)
# ----------------------------------------------------------------------------
def conv_geometry(input_dim, hidden_dims, spatial):
    geom = []
    H = W = spatial
    dims = [input_dim] + list(hidden_dims)
    for l in range(len(hidden_dims)):
        Ho, Wo = H // 2, W // 2
        geom.append(dict(Cin=dims[l], Cout=dims[l + 1], H=H, W=W,
                         Ho=Ho, Wo=Wo, Hp=H + 2, Wp=W + 2))
        H, W = Ho, Wo
    return geom


# ----------------------------------------------------------------------------
# Deterministic "torch-like" parameters (BN in eval mode)
# ----------------------------------------------------------------------------
def make_params(key, input_dim, hidden_dims, n_classes, latent_dim):
    eps_bn = 1e-5
    keys = iter(random.split(key, 64))
    params = {"conv_layers": []}
    dims = [input_dim] + list(hidden_dims)
    for i in range(len(hidden_dims)):
        cin, cout = dims[i], dims[i + 1]
        w = 0.1 * random.normal(next(keys), (cout, cin, 4, 4), jnp.float32)   # OIHW
        if i == 0:  # first block has no BatchNorm and the conv has no bias
            scale = jnp.ones((cout,), jnp.float32)
            shift = jnp.zeros((cout,), jnp.float32)
        else:       # BN2d (eval mode) folded into per-channel scale/shift
            gamma = 1.0 + 0.1 * random.normal(next(keys), (cout,), jnp.float32)
            beta = 0.1 * random.normal(next(keys), (cout,), jnp.float32)
            rmean = 0.05 * random.normal(next(keys), (cout,), jnp.float32)
            rvar = 1.0 + 0.1 * jnp.abs(random.normal(next(keys), (cout,), jnp.float32))
            scale = gamma / jnp.sqrt(rvar + eps_bn)
            shift = beta - rmean * scale
        params["conv_layers"].append(dict(w_conv=w, scale=scale, shift=shift,
                                          alpha=jnp.full((1,), 0.25, jnp.float32)))

    fin = hidden_dims[-1] * 2 * 2
    w_h = 0.05 * random.normal(next(keys), (latent_dim, fin), jnp.float32)
    b_h = 0.1 * random.normal(next(keys), (latent_dim,), jnp.float32)
    gamma = 1.0 + 0.1 * random.normal(next(keys), (latent_dim,), jnp.float32)
    beta = 0.1 * random.normal(next(keys), (latent_dim,), jnp.float32)
    rmean = 0.05 * random.normal(next(keys), (latent_dim,), jnp.float32)
    rvar = 1.0 + 0.1 * jnp.abs(random.normal(next(keys), (latent_dim,), jnp.float32))
    h_scale = gamma / jnp.sqrt(rvar + eps_bn)
    h_shift = (b_h - rmean) * h_scale + beta
    params["hidden"] = dict(w=w_h, b=b_h, scale=h_scale, shift=h_shift,
                            alpha=jnp.full((1,), 0.25, jnp.float32))

    kin = latent_dim + n_classes
    params["mu"] = dict(w=0.1 * random.normal(next(keys), (latent_dim, kin), jnp.float32),
                        b=0.1 * random.normal(next(keys), (latent_dim,), jnp.float32))
    params["ls"] = dict(w=0.1 * random.normal(next(keys), (latent_dim, kin), jnp.float32),
                        b=0.1 * random.normal(next(keys), (latent_dim,), jnp.float32))
    return params


# ----------------------------------------------------------------------------
# Host-side packing of parameters into kernel operands
# ----------------------------------------------------------------------------
def pack_params(params, geom, B, latent_dim, n_classes):
    weights = []
    alphas = []
    for g, layer in zip(geom, params["conv_layers"]):
        Cin, Cout = g["Cin"], g["Cout"]
        Ho, Wo, Hp, Wp = g["Ho"], g["Wo"], g["Hp"], g["Wp"]
        Wc = np.asarray(layer["w_conv"], np.float32)          # (Cout, Cin, 4, 4)
        scale = np.asarray(layer["scale"], np.float32)
        shift = np.asarray(layer["shift"], np.float32)
        # A[i]: banded W-direction matrix for H-tap i, BN scale folded into columns.
        A = np.zeros((4, Wp * Cin, Wo * Cout), np.float32)
        for i in range(4):
            for j in range(4):
                blk = Wc[:, :, i, j].T * scale[None, :]       # (Cin, Cout), scaled
                for wo in range(Wo):
                    w = 2 * wo + j                            # padded column index
                    A[i, w * Cin:(w + 1) * Cin, wo * Cout:(wo + 1) * Cout] = blk
        # S[i]: selects padded input row 2*ho + i for every (b, ho)  (block-diag over b).
        S = np.zeros((4, B * Ho, B * Hp), np.float32)
        for i in range(4):
            for b in range(B):
                for ho in range(Ho):
                    S[i, b * Ho + ho, b * Hp + 2 * ho + i] = 1.0
        shift_t = np.tile(shift, Wo).reshape(1, Wo * Cout)    # per (wo, co) column shift
        weights += [jnp.asarray(S), jnp.asarray(A), jnp.asarray(shift_t)]
        alphas.append(float(layer["alpha"][0]))

    g = geom[-1]
    Ho_l, Wo_l, Cout_l = g["Ho"], g["Wo"], g["Cout"]
    row_len = Wo_l * Cout_l
    fin = Ho_l * row_len
    # flatten-selection: picks, for every batch element, the last-conv output row `ho`.
    fsel = np.zeros((Ho_l, B, B * Ho_l), np.float32)
    for ho in range(Ho_l):
        for b in range(B):
            fsel[ho, b, b * Ho_l + ho] = 1.0
    weights.append(jnp.asarray(fsel))

    # hidden Linear+BN: permute torch's NCHW-flatten rows into our NHWC (ho,wo,co) order
    # and fold the BN scale into the weight columns; only a shift remains in-kernel.
    Wh = np.asarray(params["hidden"]["w"], np.float32)        # (L, fin), torch order
    h_scale = np.asarray(params["hidden"]["scale"], np.float32)
    h_shift = np.asarray(params["hidden"]["shift"], np.float32)
    perm = np.zeros((fin,), np.int64)
    for ho in range(Ho_l):
        for wo in range(Wo_l):
            for co in range(Cout_l):
                r_ours = ho * row_len + wo * Cout_l + co
                r_torch = co * (Ho_l * Wo_l) + ho * Wo_l + wo
                perm[r_ours] = r_torch
    wh = Wh.T[perm, :] * h_scale[None, :]                     # (fin, L)
    weights += [jnp.asarray(wh), jnp.asarray(h_shift.reshape(1, latent_dim))]
    alphas.append(float(params["hidden"]["alpha"][0]))

    # heads: one combined (L+K, 2L) weight, split by [hidden | y] input rows (no concat).
    Wmu = np.asarray(params["mu"]["w"], np.float32)
    bmu = np.asarray(params["mu"]["b"], np.float32)
    Wls = np.asarray(params["ls"]["w"], np.float32)
    bls = np.asarray(params["ls"]["b"], np.float32)
    Whd = np.concatenate([Wmu.T, Wls.T], axis=1)              # (L+K, 2L) = [mu | ls]
    weights += [jnp.asarray(Whd[:latent_dim, :]),
                jnp.asarray(Whd[latent_dim:, :]),
                jnp.asarray(np.concatenate([bmu, bls]).reshape(1, 2 * latent_dim))]
    weights.append(jnp.asarray(np.array(alphas, np.float32)))  # PReLU alphas -> SMEM
    return weights


# ----------------------------------------------------------------------------
# The single fused Pallas kernel
# ----------------------------------------------------------------------------
def make_kernel(geom, B, latent_dim, n_classes):
    n_conv = len(geom)
    L = latent_dim

    def kernel(*refs):
        it = iter(refs)
        act_ref = next(it)                                    # (B*Hp1, Wp1*Cin1)
        y_ref = next(it)                                      # (B, K)
        eps_ref = next(it)                                    # (B, L)
        conv_refs = [(next(it), next(it), next(it)) for _ in range(n_conv)]  # (S, A, shift)
        fsel_ref = next(it)
        wh_ref = next(it)
        shh_ref = next(it)
        whd_h_ref = next(it)
        whd_y_ref = next(it)
        bhd_ref = next(it)
        alpha_ref = next(it)                                  # SMEM (n_conv+1,)
        out_ref = next(it)                                    # (B, 3L) = [z | mu | ls]
        act_scratch = [next(it) for _ in range(n_conv - 1)]   # padded VMEM activations

        # zero the padded scratch activations: their borders implement the conv padding
        for sref in act_scratch:
            sref[...] = jnp.zeros_like(sref)

        h = act_ref[...]
        for l, (g, (s_ref, a_ref, sh_ref)) in enumerate(zip(geom, conv_refs)):
            # conv = sum over the 4 H-taps of (row-select) @ (W-banded weight)
            acc = None
            for i in range(4):
                rows_i = jnp.dot(s_ref[i], h,
                                 preferred_element_type=jnp.float32)   # (B*Ho, Wp*Cin)
                contrib = jnp.dot(rows_i, a_ref[i],
                                  preferred_element_type=jnp.float32)  # (B*Ho, Wo*Cout)
                acc = contrib if acc is None else acc + contrib
            z = acc + sh_ref[...]                    # BN shift (scale folded into A)
            alpha = alpha_ref[l]
            hout = jnp.where(z >= 0.0, z, alpha * z)  # PReLU
            if l + 1 < n_conv:
                nxt = geom[l + 1]
                dst = act_scratch[l]
                Ho, Wo, Cout = g["Ho"], g["Wo"], g["Cout"]
                Hp_n, Cin_n = nxt["Hp"], nxt["Cin"]
                c0 = Cin_n                            # skip left pad column
                c1 = Cin_n + Wo * Cout
                for b in range(B):                    # write interior of padded buffer
                    dst[b * Hp_n + 1:b * Hp_n + 1 + Ho, c0:c1] = hout[b * Ho:(b + 1) * Ho, :]
                h = dst[...]
            else:
                h = hout                              # (B*Ho_last, Wo_last*Cout_last)

        # --- flatten (NHWC; torch order handled by host-side weight permutation) + hidden
        g = geom[-1]
        Ho_l = g["Ho"]
        row_len = g["Wo"] * g["Cout"]
        hid = None
        for ho in range(Ho_l):
            rows = jnp.dot(fsel_ref[ho], h, preferred_element_type=jnp.float32)  # (B, row_len)
            part = jnp.dot(rows, wh_ref[ho * row_len:(ho + 1) * row_len, :],
                           preferred_element_type=jnp.float32)                   # (B, L)
            hid = part if hid is None else hid + part
        hid = hid + shh_ref[...]
        alpha_h = alpha_ref[n_conv]
        hid = jnp.where(hid >= 0.0, hid, alpha_h * hid)

        # --- combined mu/logsigma head (weight split over [hidden | y] rows, no concat)
        head = (jnp.dot(hid, whd_h_ref[...], preferred_element_type=jnp.float32)
                + jnp.dot(y_ref[...], whd_y_ref[...], preferred_element_type=jnp.float32)
                + bhd_ref[...])                                                  # (B, 2L)
        mu = head[:, :L]
        ls = head[:, L:]
        zlat = eps_ref[...] * jnp.exp(0.5 * ls) + mu
        out_ref[:, 0:L] = zlat
        out_ref[:, L:3 * L] = head                    # [mu | logsigma]

    return kernel


# ----------------------------------------------------------------------------
# Forward builder
# ----------------------------------------------------------------------------
def _full_spec(shape):
    return pl.BlockSpec(shape, lambda: tuple(0 for _ in shape))


def build_forward(geom, weights, B, n_classes, latent_dim):
    L = latent_dim
    g0 = geom[0]
    act_shape = (B * g0["Hp"], g0["Wp"] * g0["Cin"])

    in_specs = [_full_spec(act_shape), _full_spec((B, n_classes)), _full_spec((B, L))]
    in_specs += [_full_spec(tuple(w.shape)) for w in weights[:-1]]
    in_specs.append(pl.BlockSpec(memory_space=pltpu.MemorySpace.SMEM))   # PReLU alphas

    scratch_shapes = [pltpu.VMEM((B * g["Hp"], g["Wp"] * g["Cin"]), jnp.float32)
                      for g in geom[1:]]

    # advisory cost estimate for XLA scheduling
    flops = 0
    for g in geom:
        M, Kr, Kc, N = B * g["Ho"], B * g["Hp"], g["Wp"] * g["Cin"], g["Wo"] * g["Cout"]
        flops += 4 * 2 * (M * Kr * Kc + M * Kc * N)
    gl = geom[-1]
    row_len = gl["Wo"] * gl["Cout"]
    flops += gl["Ho"] * 2 * (B * (B * gl["Ho"]) * row_len + B * row_len * L)
    flops += 2 * B * (L + n_classes) * 2 * L
    bytes_accessed = (int(np.prod(act_shape)) + B * n_classes + B * L + B * 3 * L) * 4
    bytes_accessed += sum(int(np.prod(w.shape)) * 4 for w in weights)
    cost = pl.CostEstimate(flops=int(flops), transcendentals=int(B * L),
                           bytes_accessed=int(bytes_accessed))

    fused = pl.pallas_call(
        make_kernel(geom, B, latent_dim, n_classes),
        out_shape=jax.ShapeDtypeStruct((B, 3 * L), jnp.float32),
        in_specs=in_specs,
        out_specs=_full_spec((B, 3 * L)),
        scratch_shapes=scratch_shapes,
        cost_estimate=cost,
    )

    def forward(x_nchw, y, eps):
        # Only remaining host glue: NCHW -> padded NHWC rows, flattened as (b*h', w'*cin).
        xt = jnp.transpose(x_nchw, (0, 2, 3, 1))
        xp = jnp.pad(xt, ((0, 0), (1, 1), (1, 1), (0, 0)))
        act1 = xp.reshape(B * g0["Hp"], g0["Wp"] * g0["Cin"])
        out = fused(act1, y, eps, *weights)
        return out[:, :L], out[:, L:2 * L], out[:, 2 * L:3 * L]

    return jax.jit(forward)


# ----------------------------------------------------------------------------
# Pure-JAX reference (matches the PyTorch module, BN in eval mode)
# ----------------------------------------------------------------------------
def ref_forward(x_nchw, y, params, eps):
    h = x_nchw
    for layer in params["conv_layers"]:
        h = lax.conv_general_dilated(h, layer["w_conv"], (2, 2), ((1, 1), (1, 1)),
                                     dimension_numbers=("NCHW", "OIHW", "NCHW"))
        h = h * layer["scale"][None, :, None, None] + layer["shift"][None, :, None, None]
        h = jnp.where(h >= 0, h, layer["alpha"][0] * h)
    flat = h.reshape(h.shape[0], -1)
    hid = (flat @ params["hidden"]["w"].T) * params["hidden"]["scale"] + params["hidden"]["shift"]
    hid = jnp.where(hid >= 0, hid, params["hidden"]["alpha"][0] * hid)
    hy = jnp.concatenate([hid, y], axis=1)
    mu = hy @ params["mu"]["w"].T + params["mu"]["b"]
    ls = hy @ params["ls"]["w"].T + params["ls"]["b"]
    z = eps * jnp.exp(0.5 * ls) + mu
    return z, mu, ls


# ----------------------------------------------------------------------------
if __name__ == "__main__":
    B, INPUT_DIM, SPATIAL = 2, 4, 16
    HIDDEN_DIMS = [8, 16, 32]          # 16 -> 8 -> 4 -> 2 spatial (hidden_dims[-1]*2*2 = 128)
    N_COMPONENTS, LATENT_DIM = 3, 16

    root = random.PRNGKey(0)
    k_x, k_y, k_p, k_eps = random.split(root, 4)
    x = random.normal(k_x, (B, INPUT_DIM, SPATIAL, SPATIAL), jnp.float32)    # NCHW like torch
    y = jax.nn.softmax(random.normal(k_y, (B, N_COMPONENTS), jnp.float32), axis=-1)
    eps = random.normal(k_eps, (B, LATENT_DIM), jnp.float32)                 # reparam noise

    params = make_params(k_p, INPUT_DIM, HIDDEN_DIMS, N_COMPONENTS, LATENT_DIM)
    geom = conv_geometry(INPUT_DIM, HIDDEN_DIMS, SPATIAL)
    weights = pack_params(params, geom, B, LATENT_DIM, N_COMPONENTS)
    forward = build_forward(geom, weights, B, N_COMPONENTS, LATENT_DIM)

    z, mu, logsigma = forward(x, y, eps)
    z = jax.block_until_ready(z)
    mu = jax.block_until_ready(mu)
    logsigma = jax.block_until_ready(logsigma)

    z_r, mu_r, ls_r = ref_forward(x, y, params, eps)
    assert z.shape == (B, LATENT_DIM)
    assert mu.shape == (B, LATENT_DIM) and logsigma.shape == (B, LATENT_DIM)
    assert jnp.allclose(mu, mu_r, rtol=1e-4, atol=1e-4), float(jnp.max(jnp.abs(mu - mu_r)))
    assert jnp.allclose(logsigma, ls_r, rtol=1e-4, atol=1e-4), float(jnp.max(jnp.abs(logsigma - ls_r)))
    assert jnp.allclose(z, z_r, rtol=1e-4, atol=1e-4), float(jnp.max(jnp.abs(z - z_r)))

    print("KERNEL_OK")
</pallas_src>

<mosaic_0001>
module attributes {stable_mosaic.version = 11 : i64} {
  func.func @kernel(%arg0: memref<36x72xf32, #tpu.memory_space<vmem>>, %arg1: memref<2x3xf32, #tpu.memory_space<vmem>>, %arg2: memref<2x16xf32, #tpu.memory_space<vmem>>, %arg3: memref<4x16x36xf32, #tpu.memory_space<vmem>>, %arg4: memref<4x72x64xf32, #tpu.memory_space<vmem>>, %arg5: memref<1x64xf32, #tpu.memory_space<vmem>>, %arg6: memref<4x8x20xf32, #tpu.memory_space<vmem>>, %arg7: memref<4x80x64xf32, #tpu.memory_space<vmem>>, %arg8: memref<1x64xf32, #tpu.memory_space<vmem>>, %arg9: memref<4x4x12xf32, #tpu.memory_space<vmem>>, %arg10: memref<4x96x64xf32, #tpu.memory_space<vmem>>, %arg11: memref<1x64xf32, #tpu.memory_space<vmem>>, %arg12: memref<2x2x4xf32, #tpu.memory_space<vmem>>, %arg13: memref<128x16xf32, #tpu.memory_space<vmem>>, %arg14: memref<1x16xf32, #tpu.memory_space<vmem>>, %arg15: memref<16x32xf32, #tpu.memory_space<vmem>>, %arg16: memref<3x32xf32, #tpu.memory_space<vmem>>, %arg17: memref<1x32xf32, #tpu.memory_space<vmem>>, %arg18: memref<4xf32, #tpu.memory_space<smem>>, %arg19: memref<2x48xf32, #tpu.memory_space<vmem>>, %arg20: memref<20x80xf32, #tpu.memory_space<vmem>>, %arg21: memref<12x96xf32, #tpu.memory_space<vmem>>) attributes {dimension_semantics = [], scalar_prefetch = 0 : i64, scratch_operands = 2 : i64, tpu.core_type = #tpu.core_type<tc>} {
    %cst = arith.constant 0.000000e+00 : f32
    %0 = vector.broadcast %cst : f32 to vector<20x80xf32>
    %c0 = arith.constant 0 : index
    %c0_0 = arith.constant 0 : index
    %1 = vector.load %arg20[%c0, %c0_0] : memref<20x80xf32, #tpu.memory_space<vmem>>, vector<20x80xf32>
    tpu.vector_store %arg20[%c0, %c0_0], %0 {strides = array<i32>} : memref<20x80xf32, #tpu.memory_space<vmem>>, vector<20x80xf32>,
    %cst_1 = arith.constant 0.000000e+00 : f32
    %2 = vector.broadcast %cst_1 : f32 to vector<12x96xf32>
    %c0_2 = arith.constant 0 : index
    %c0_3 = arith.constant 0 : index
    %3 = vector.load %arg21[%c0_2, %c0_3] : memref<12x96xf32, #tpu.memory_space<vmem>>, vector<12x96xf32>
    tpu.vector_store %arg21[%c0_2, %c0_3], %2 {strides = array<i32>} : memref<12x96xf32, #tpu.memory_space<vmem>>, vector<12x96xf32>,
    %c0_4 = arith.constant 0 : index
    %c0_5 = arith.constant 0 : index
    %4 = vector.load %arg0[%c0_4, %c0_5] : memref<36x72xf32, #tpu.memory_space<vmem>>, vector<36x72xf32>
    %c0_6 = arith.constant 0 : index
    %c0_7 = arith.constant 0 : index
    %c0_8 = arith.constant 0 : index
    %5 = vector.load %arg3[%c0_6, %c0_7, %c0_8] : memref<4x16x36xf32, #tpu.memory_space<vmem>>, vector<1x16x36xf32>
    %6 = vector.shape_cast %5 : vector<1x16x36xf32> to vector<16x36xf32>
    %cst_9 = arith.constant dense<0.000000e+00> : vector<16x72xf32>
    %7 = tpu.matmul %6, %4, %cst_9 {dimension_numbers = #tpu.dot_dimension_numbers<[1], [0], [0], [1], [0, 0, 1, 1], [], []>} : vector<16x36xf32>, vector<36x72xf32>, vector<16x72xf32> -> vector<16x72xf32>
    %c0_10 = arith.constant 0 : index
    %c0_11 = arith.constant 0 : index
    %c0_12 = arith.constant 0 : index
    %8 = vector.load %arg4[%c0_10, %c0_11, %c0_12] : memref<4x72x64xf32, #tpu.memory_space<vmem>>, vector<1x72x64xf32>
    %9 = vector.shape_cast %8 : vector<1x72x64xf32> to vector<72x64xf32>
    %cst_13 = arith.constant dense<0.000000e+00> : vector<16x64xf32>
    %10 = tpu.matmul %7, %9, %cst_13 {dimension_numbers = #tpu.dot_dimension_numbers<[1], [0], [0], [1], [0, 0, 1, 1], [], []>} : vector<16x72xf32>, vector<72x64xf32>, vector<16x64xf32> -> vector<16x64xf32>
    %c1 = arith.constant 1 : index
    %c0_14 = arith.constant 0 : index
    %c0_15 = arith.constant 0 : index
    %11 = vector.load %arg3[%c1, %c0_14, %c0_15] : memref<4x16x36xf32, #tpu.memory_space<vmem>>, vector<1x16x36xf32>
    %12 = vector.shape_cast %11 : vector<1x16x36xf32> to vector<16x36xf32>
    %cst_16 = arith.constant dense<0.000000e+00> : vector<16x72xf32>
    %13 = tpu.matmul %12, %4, %cst_16 {dimension_numbers = #tpu.dot_dimension_numbers<[1], [0], [0], [1], [0, 0, 1, 1], [], []>} : vector<16x36xf32>, vector<36x72xf32>, vector<16x72xf32> -> vector<16x72xf32>
    %c1_17 = arith.constant 1 : index
    %c0_18 = arith.constant 0 : index
    %c0_19 = arith.constant 0 : index
    %14 = vector.load %arg4[%c1_17, %c0_18, %c0_19] : memref<4x72x64xf32, #tpu.memory_space<vmem>>, vector<1x72x64xf32>
    %15 = vector.shape_cast %14 : vector<1x72x64xf32> to vector<72x64xf32>
    %cst_20 = arith.constant dense<0.000000e+00> : vector<16x64xf32>
    %16 = tpu.matmul %13, %15, %cst_20 {dimension_numbers = #tpu.dot_dimension_numbers<[1], [0], [0], [1], [0, 0, 1, 1], [], []>} : vector<16x72xf32>, vector<72x64xf32>, vector<16x64xf32> -> vector<16x64xf32>
    %17 = arith.addf %10, %16 : vector<16x64xf32>
    %c2 = arith.constant 2 : index
    %c0_21 = arith.constant 0 : index
    %c0_22 = arith.constant 0 : index
    %18 = vector.load %arg3[%c2, %c0_21, %c0_22] : memref<4x16x36xf32, #tpu.memory_space<vmem>>, vector<1x16x36xf32>
    %19 = vector.shape_cast %18 : vector<1x16x36xf32> to vector<16x36xf32>
    %cst_23 = arith.constant dense<0.000000e+00> : vector<16x72xf32>
    %20 = tpu.matmul %19, %4, %cst_23 {dimension_numbers = #tpu.dot_dimension_numbers<[1], [0], [0], [1], [0, 0, 1, 1], [], []>} : vector<16x36xf32>, vector<36x72xf32>, vector<16x72xf32> -> vector<16x72xf32>
    %c2_24 = arith.constant 2 : index
    %c0_25 = arith.constant 0 : index
    %c0_26 = arith.constant 0 : index
    %21 = vector.load %arg4[%c2_24, %c0_25, %c0_26] : memref<4x72x64xf32, #tpu.memory_space<vmem>>, vector<1x72x64xf32>
    %22 = vector.shape_cast %21 : vector<1x72x64xf32> to vector<72x64xf32>
    %cst_27 = arith.constant dense<0.000000e+00> : vector<16x64xf32>
    %23 = tpu.matmul %20, %22, %cst_27 {dimension_numbers = #tpu.dot_dimension_numbers<[1], [0], [0], [1], [0, 0, 1, 1], [], []>} : vector<16x72xf32>, vector<72x64xf32>, vector<16x64xf32> -> vector<16x64xf32>
    %24 = arith.addf %17, %23 : vector<16x64xf32>
    %c3 = arith.constant 3 : index
    %c0_28 = arith.constant 0 : index
    %c0_29 = arith.constant 0 : index
    %25 = vector.load %arg3[%c3, %c0_28, %c0_29] : memref<4x16x36xf32, #tpu.memory_space<vmem>>, vector<1x16x36xf32>
    %26 = vector.shape_cast %25 : vector<1x16x36xf32> to vector<16x36xf32>
    %cst_30 = arith.constant dense<0.000000e+00> : vector<16x72xf32>
    %27 = tpu.matmul %26, %4, %cst_30 {dimension_numbers = #tpu.dot_dimension_numbers<[1], [0], [0], [1], [0, 0, 1, 1], [], []>} : vector<16x36xf32>, vector<36x72xf32>, vector<16x72xf32> -> vector<16x72xf32>
    %c3_31 = arith.constant 3 : index
    %c0_32 = arith.constant 0 : index
    %c0_33 = arith.constant 0 : index
    %28 = vector.load %arg4[%c3_31, %c0_32, %c0_33] : memref<4x72x64xf32, #tpu.memory_space<vmem>>, vector<1x72x64xf32>
    %29 = vector.shape_cast %28 : vector<1x72x64xf32> to vector<72x64xf32>
    %cst_34 = arith.constant dense<0.000000e+00> : vector<16x64xf32>
    %30 = tpu.matmul %27, %29, %cst_34 {dimension_numbers = #tpu.dot_dimension_numbers<[1], [0], [0], [1], [0, 0, 1, 1], [], []>} : vector<16x72xf32>, vector<72x64xf32>, vector<16x64xf32> -> vector<16x64xf32>
    %31 = arith.addf %24, %30 : vector<16x64xf32>
    %c0_35 = arith.constant 0 : index
    %c0_36 = arith.constant 0 : index
    %32 = vector.load %arg5[%c0_35, %c0_36] : memref<1x64xf32, #tpu.memory_space<vmem>>, vector<1x64xf32>
    %33 = vector.broadcast %32 : vector<1x64xf32> to vector<16x64xf32>
    %34 = arith.addf %31, %33 : vector<16x64xf32>
    %c0_37 = arith.constant 0 : index
    %35 = memref.load %arg18[%c0_37] : memref<4xf32, #tpu.memory_space<smem>>
    %cst_38 = arith.constant 0.000000e+00 : f32
    %36 = vector.broadcast %cst_38 : f32 to vector<16x64xf32>
    %37 = arith.cmpf oge, %34, %36 : vector<16x64xf32>
    %38 = vector.broadcast %35 : f32 to vector<16x64xf32>
    %39 = arith.mulf %38, %34 : vector<16x64xf32>
    %40 = arith.select %37, %34, %39 : vector<16x64xi1>, vector<16x64xf32>
    %41 = vector.extract_strided_slice %40 {offsets = [0, 0], sizes = [8, 64], strides = [1, 1]} : vector<16x64xf32> to vector<8x64xf32>
    %c1_39 = arith.constant 1 : index
    %c8 = arith.constant 8 : index
    %42 = vector.load %arg20[%c1_39, %c8] : memref<20x80xf32, #tpu.memory_space<vmem>>, vector<8x64xf32>
    tpu.vector_store %arg20[%c1_39, %c8], %41 {strides = array<i32>} : memref<20x80xf32, #tpu.memory_space<vmem>>, vector<8x64xf32>,
    %43 = vector.extract_strided_slice %40 {offsets = [8, 0], sizes = [8, 64], strides = [1, 1]} : vector<16x64xf32> to vector<8x64xf32>
    %c11 = arith.constant 11 : index
    %c8_40 = arith.constant 8 : index
    %44 = vector.load %arg20[%c11, %c8_40] : memref<20x80xf32, #tpu.memory_space<vmem>>, vector<8x64xf32>
    tpu.vector_store %arg20[%c11, %c8_40], %43 {strides = array<i32>} : memref<20x80xf32, #tpu.memory_space<vmem>>, vector<8x64xf32>,
    %c0_41 = arith.constant 0 : index
    %c0_42 = arith.constant 0 : index
    %45 = vector.load %arg20[%c0_41, %c0_42] : memref<20x80xf32, #tpu.memory_space<vmem>>, vector<20x80xf32>
    %c0_43 = arith.constant 0 : index
    %c0_44 = arith.constant 0 : index
    %c0_45 = arith.constant 0 : index
    %46 = vector.load %arg6[%c0_43, %c0_44, %c0_45] : memref<4x8x20xf32, #tpu.memory_space<vmem>>, vector<1x8x20xf32>
    %47 = vector.shape_cast %46 : vector<1x8x20xf32> to vector<8x20xf32>
    %cst_46 = arith.constant dense<0.000000e+00> : vector<8x80xf32>
    %48 = tpu.matmul %47, %45, %cst_46 {dimension_numbers = #tpu.dot_dimension_numbers<[1], [0], [0], [1], [0, 0, 1, 1], [], []>} : vector<8x20xf32>, vector<20x80xf32>, vector<8x80xf32> -> vector<8x80xf32>
    %c0_47 = arith.constant 0 : index
    %c0_48 = arith.constant 0 : index
    %c0_49 = arith.constant 0 : index
    %49 = vector.load %arg7[%c0_47, %c0_48, %c0_49] : memref<4x80x64xf32, #tpu.memory_space<vmem>>, vector<1x80x64xf32>
    %50 = vector.shape_cast %49 : vector<1x80x64xf32> to vector<80x64xf32>
    %cst_50 = arith.constant dense<0.000000e+00> : vector<8x64xf32>
    %51 = tpu.matmul %48, %50, %cst_50 {dimension_numbers = #tpu.dot_dimension_numbers<[1], [0], [0], [1], [0, 0, 1, 1], [], []>} : vector<8x80xf32>, vector<80x64xf32>, vector<8x64xf32> -> vector<8x64xf32>
    %c1_51 = arith.constant 1 : index
    %c0_52 = arith.constant 0 : index
    %c0_53 = arith.constant 0 : index
    %52 = vector.load %arg6[%c1_51, %c0_52, %c0_53] : memref<4x8x20xf32, #tpu.memory_space<vmem>>, vector<1x8x20xf32>
    %53 = vector.shape_cast %52 : vector<1x8x20xf32> to vector<8x20xf32>
    %cst_54 = arith.constant dense<0.000000e+00> : vector<8x80xf32>
    %54 = tpu.matmul %53, %45, %cst_54 {dimension_numbers = #tpu.dot_dimension_numbers<[1], [0], [0], [1], [0, 0, 1, 1], [], []>} : vector<8x20xf32>, vector<20x80xf32>, vector<8x80xf32> -> vector<8x80xf32>
    %c1_55 = arith.constant 1 : index
    %c0_56 = arith.constant 0 : index
    %c0_57 = arith.constant 0 : index
    %55 = vector.load %arg7[%c1_55, %c0_56, %c0_57] : memref<4x80x64xf32, #tpu.memory_space<vmem>>, vector<1x80x64xf32>
    %56 = vector.shape_cast %55 : vector<1x80x64xf32> to vector<80x64xf32>
    %cst_58 = arith.constant dense<0.000000e+00> : vector<8x64xf32>
    %57 = tpu.matmul %54, %56, %cst_58 {dimension_numbers = #tpu.dot_dimension_numbers<[1], [0], [0], [1], [0, 0, 1, 1], [], []>} : vector<8x80xf32>, vector<80x64xf32>, vector<8x64xf32> -> vector<8x64xf32>
    %58 = arith.addf %51, %57 : vector<8x64xf32>
    %c2_59 = arith.constant 2 : index
    %c0_60 = arith.constant 0 : index
    %c0_61 = arith.constant 0 : index
    %59 = vector.load %arg6[%c2_59, %c0_60, %c0_61] : memref<4x8x20xf32, #tpu.memory_space<vmem>>, vector<1x8x20xf32>
    %60 = vector.shape_cast %59 : vector<1x8x20xf32> to vector<8x20xf32>
    %cst_62 = arith.constant dense<0.000000e+00> : vector<8x80xf32>
    %61 = tpu.matmul %60, %45, %cst_62 {dimension_numbers = #tpu.dot_dimension_numbers<[1], [0], [0], [1], [0, 0, 1, 1], [], []>} : vector<8x20xf32>, vector<20x80xf32>, vector<8x80xf32> -> vector<8x80xf32>
    %c2_63 = arith.constant 2 : index
    %c0_64 = arith.constant 0 : index
    %c0_65 = arith.constant 0 : index
    %62 = vector.load %arg7[%c2_63, %c0_64, %c0_65] : memref<4x80x64xf32, #tpu.memory_space<vmem>>, vector<1x80x64xf32>
    %63 = vector.shape_cast %62 : vector<1x80x64xf32> to vector<80x64xf32>
    %cst_66 = arith.constant dense<0.000000e+00> : vector<8x64xf32>
    %64 = tpu.matmul %61, %63, %cst_66 {dimension_numbers = #tpu.dot_dimension_numbers<[1], [0], [0], [1], [0, 0, 1, 1], [], []>} : vector<8x80xf32>, vector<80x64xf32>, vector<8x64xf32> -> vector<8x64xf32>
    %65 = arith.addf %58, %64 : vector<8x64xf32>
    %c3_67 = arith.constant 3 : index
    %c0_68 = arith.constant 0 : index
    %c0_69 = arith.constant 0 : index
    %66 = vector.load %arg6[%c3_67, %c0_68, %c0_69] : memref<4x8x20xf32, #tpu.memory_space<vmem>>, vector<1x8x20xf32>
    %67 = vector.shape_cast %66 : vector<1x8x20xf32> to vector<8x20xf32>
    %cst_70 = arith.constant dense<0.000000e+00> : vector<8x80xf32>
    %68 = tpu.matmul %67, %45, %cst_70 {dimension_numbers = #tpu.dot_dimension_numbers<[1], [0], [0], [1], [0, 0, 1, 1], [], []>} : vector<8x20xf32>, vector<20x80xf32>, vector<8x80xf32> -> vector<8x80xf32>
    %c3_71 = arith.constant 3 : index
    %c0_72 = arith.constant 0 : index
    %c0_73 = arith.constant 0 : index
    %69 = vector.load %arg7[%c3_71, %c0_72, %c0_73] : memref<4x80x64xf32, #tpu.memory_space<vmem>>, vector<1x80x64xf32>
    %70 = vector.shape_cast %69 : vector<1x80x64xf32> to vector<80x64xf32>
    %cst_74 = arith.constant dense<0.000000e+00> : vector<8x64xf32>
    %71 = tpu.matmul %68, %70, %cst_74 {dimension_numbers = #tpu.dot_dimension_numbers<[1], [0], [0], [1], [0, 0, 1, 1], [], []>} : vector<8x80xf32>, vector<80x64xf32>, vector<8x64xf32> -> vector<8x64xf32>
    %72 = arith.addf %65, %71 : vector<8x64xf32>
    %c0_75 = arith.constant 0 : index
    %c0_76 = arith.constant 0 : index
    %73 = vector.load %arg8[%c0_75, %c0_76] : memref<1x64xf32, #tpu.memory_space<vmem>>, vector<1x64xf32>
    %74 = vector.broadcast %73 : vector<1x64xf32> to vector<8x64xf32>
    %75 = arith.addf %72, %74 : vector<8x64xf32>
    %c1_77 = arith.constant 1 : index
    %76 = memref.load %arg18[%c1_77] : memref<4xf32, #tpu.memory_space<smem>>
    %cst_78 = arith.constant 0.000000e+00 : f32
    %77 = vector.broadcast %cst_78 : f32 to vector<8x64xf32>
    %78 = arith.cmpf oge, %75, %77 : vector<8x64xf32>
    %79 = vector.broadcast %76 : f32 to vector<8x64xf32>
    %80 = arith.mulf %79, %75 : vector<8x64xf32>
    %81 = arith.select %78, %75, %80 : vector<8x64xi1>, vector<8x64xf32>
    %82 = vector.extract_strided_slice %81 {offsets = [0, 0], sizes = [4, 64], strides = [1, 1]} : vector<8x64xf32> to vector<4x64xf32>
    %c1_79 = arith.constant 1 : index
    %c16 = arith.constant 16 : index
    %83 = vector.load %arg21[%c1_79, %c16] : memref<12x96xf32, #tpu.memory_space<vmem>>, vector<4x64xf32>
    tpu.vector_store %arg21[%c1_79, %c16], %82 {strides = array<i32>} : memref<12x96xf32, #tpu.memory_space<vmem>>, vector<4x64xf32>,
    %84 = vector.extract_strided_slice %81 {offsets = [4, 0], sizes = [4, 64], strides = [1, 1]} : vector<8x64xf32> to vector<4x64xf32>
    %c7 = arith.constant 7 : index
    %c16_80 = arith.constant 16 : index
    %85 = vector.load %arg21[%c7, %c16_80] : memref<12x96xf32, #tpu.memory_space<vmem>>, vector<4x64xf32>
    tpu.vector_store %arg21[%c7, %c16_80], %84 {strides = array<i32>} : memref<12x96xf32, #tpu.memory_space<vmem>>, vector<4x64xf32>,
    %c0_81 = arith.constant 0 : index
    %c0_82 = arith.constant 0 : index
    %86 = vector.load %arg21[%c0_81, %c0_82] : memref<12x96xf32, #tpu.memory_space<vmem>>, vector<12x96xf32>
    %c0_83 = arith.constant 0 : index
    %c0_84 = arith.constant 0 : index
    %c0_85 = arith.constant 0 : index
    %87 = vector.load %arg9[%c0_83, %c0_84, %c0_85] : memref<4x4x12xf32, #tpu.memory_space<vmem>>, vector<1x4x12xf32>
    %88 = vector.shape_cast %87 : vector<1x4x12xf32> to vector<4x12xf32>
    %cst_86 = arith.constant dense<0.000000e+00> : vector<4x96xf32>
    %89 = tpu.matmul %88, %86, %cst_86 {dimension_numbers = #tpu.dot_dimension_numbers<[1], [0], [0], [1], [0, 0, 1, 1], [], []>} : vector<4x12xf32>, vector<12x96xf32>, vector<4x96xf32> -> vector<4x96xf32>
    %c0_87 = arith.constant 0 : index
    %c0_88 = arith.constant 0 : index
    %c0_89 = arith.constant 0 : index
    %90 = vector.load %arg10[%c0_87, %c0_88, %c0_89] : memref<4x96x64xf32, #tpu.memory_space<vmem>>, vector<1x96x64xf32>
    %91 = vector.shape_cast %90 : vector<1x96x64xf32> to vector<96x64xf32>
    %cst_90 = arith.constant dense<0.000000e+00> : vector<4x64xf32>
    %92 = tpu.matmul %89, %91, %cst_90 {dimension_numbers = #tpu.dot_dimension_numbers<[1], [0], [0], [1], [0, 0, 1, 1], [], []>} : vector<4x96xf32>, vector<96x64xf32>, vector<4x64xf32> -> vector<4x64xf32>
    %c1_91 = arith.constant 1 : index
    %c0_92 = arith.constant 0 : index
    %c0_93 = arith.constant 0 : index
    %93 = vector.load %arg9[%c1_91, %c0_92, %c0_93] : memref<4x4x12xf32, #tpu.memory_space<vmem>>, vector<1x4x12xf32>
    %94 = vector.shape_cast %93 : vector<1x4x12xf32> to vector<4x12xf32>
    %cst_94 = arith.constant dense<0.000000e+00> : vector<4x96xf32>
    %95 = tpu.matmul %94, %86, %cst_94 {dimension_numbers = #tpu.dot_dimension_numbers<[1], [0], [0], [1], [0, 0, 1, 1], [], []>} : vector<4x12xf32>, vector<12x96xf32>, vector<4x96xf32> -> vector<4x96xf32>
    %c1_95 = arith.constant 1 : index
    %c0_96 = arith.constant 0 : index
    %c0_97 = arith.constant 0 : index
    %96 = vector.load %arg10[%c1_95, %c0_96, %c0_97] : memref<4x96x64xf32, #tpu.memory_space<vmem>>, vector<1x96x64xf32>
    %97 = vector.shape_cast %96 : vector<1x96x64xf32> to vector<96x64xf32>
    %cst_98 = arith.constant dense<0.000000e+00> : vector<4x64xf32>
    %98 = tpu.matmul %95, %97, %cst_98 {dimension_numbers = #tpu.dot_dimension_numbers<[1], [0], [0], [1], [0, 0, 1, 1], [], []>} : vector<4x96xf32>, vector<96x64xf32>, vector<4x64xf32> -> vector<4x64xf32>
    %99 = arith.addf %92, %98 : vector<4x64xf32>
    %c2_99 = arith.constant 2 : index
    %c0_100 = arith.constant 0 : index
    %c0_101 = arith.constant 0 : index
    %100 = vector.load %arg9[%c2_99, %c0_100, %c0_101] : memref<4x4x12xf32, #tpu.memory_space<vmem>>, vector<1x4x12xf32>
    %101 = vector.shape_cast %100 : vector<1x4x12xf32> to vector<4x12xf32>
    %cst_102 = arith.constant dense<0.000000e+00> : vector<4x96xf32>
    %102 = tpu.matmul %101, %86, %cst_102 {dimension_numbers = #tpu.dot_dimension_numbers<[1], [0], [0], [1], [0, 0, 1, 1], [], []>} : vector<4x12xf32>, vector<12x96xf32>, vector<4x96xf32> -> vector<4x96xf32>
    %c2_103 = arith.constant 2 : index
    %c0_104 = arith.constant 0 : index
    %c0_105 = arith.constant 0 : index
    %103 = vector.load %arg10[%c2_103, %c0_104, %c0_105] : memref<4x96x64xf32, #tpu.memory_space<vmem>>, vector<1x96x64xf32>
    %104 = vector.shape_cast %103 : vector<1x96x64xf32> to vector<96x64xf32>
    %cst_106 = arith.constant dense<0.000000e+00> : vector<4x64xf32>
    %105 = tpu.matmul %102, %104, %cst_106 {dimension_numbers = #tpu.dot_dimension_numbers<[1], [0], [0], [1], [0, 0, 1, 1], [], []>} : vector<4x96xf32>, vector<96x64xf32>, vector<4x64xf32> -> vector<4x64xf32>
    %106 = arith.addf %99, %105 : vector<4x64xf32>
    %c3_107 = arith.constant 3 : index
    %c0_108 = arith.constant 0 : index
    %c0_109 = arith.constant 0 : index
    %107 = vector.load %arg9[%c3_107, %c0_108, %c0_109] : memref<4x4x12xf32, #tpu.memory_space<vmem>>, vector<1x4x12xf32>
    %108 = vector.shape_cast %107 : vector<1x4x12xf32> to vector<4x12xf32>
    %cst_110 = arith.constant dense<0.000000e+00> : vector<4x96xf32>
    %109 = tpu.matmul %108, %86, %cst_110 {dimension_numbers = #tpu.dot_dimension_numbers<[1], [0], [0], [1], [0, 0, 1, 1], [], []>} : vector<4x12xf32>, vector<12x96xf32>, vector<4x96xf32> -> vector<4x96xf32>
    %c3_111 = arith.constant 3 : index
    %c0_112 = arith.constant 0 : index
    %c0_113 = arith.constant 0 : index
    %110 = vector.load %arg10[%c3_111, %c0_112, %c0_113] : memref<4x96x64xf32, #tpu.memory_space<vmem>>, vector<1x96x64xf32>
    %111 = vector.shape_cast %110 : vector<1x96x64xf32> to vector<96x64xf32>
    %cst_114 = arith.constant dense<0.000000e+00> : vector<4x64xf32>
    %112 = tpu.matmul %109, %111, %cst_114 {dimension_numbers = #tpu.dot_dimension_numbers<[1], [0], [0], [1], [0, 0, 1, 1], [], []>} : vector<4x96xf32>, vector<96x64xf32>, vector<4x64xf32> -> vector<4x64xf32>
    %113 = arith.addf %106, %112 : vector<4x64xf32>
    %c0_115 = arith.constant 0 : index
    %c0_116 = arith.constant 0 : index
    %114 = vector.load %arg11[%c0_115, %c0_116] : memref<1x64xf32, #tpu.memory_space<vmem>>, vector<1x64xf32>
    %115 = vector.broadcast %114 : vector<1x64xf32> to vector<4x64xf32>
    %116 = arith.addf %113, %115 : vector<4x64xf32>
    %c2_117 = arith.constant 2 : index
    %117 = memref.load %arg18[%c2_117] : memref<4xf32, #tpu.memory_space<smem>>
    %cst_118 = arith.constant 0.000000e+00 : f32
    %118 = vector.broadcast %cst_118 : f32 to vector<4x64xf32>
    %119 = arith.cmpf oge, %116, %118 : vector<4x64xf32>
    %120 = vector.broadcast %117 : f32 to vector<4x64xf32>
    %121 = arith.mulf %120, %116 : vector<4x64xf32>
    %122 = arith.select %119, %116, %121 : vector<4x64xi1>, vector<4x64xf32>
    %c0_119 = arith.constant 0 : index
    %c0_120 = arith.constant 0 : index
    %c0_121 = arith.constant 0 : index
    %123 = vector.load %arg12[%c0_119, %c0_120, %c0_121] : memref<2x2x4xf32, #tpu.memory_space<vmem>>, vector<1x2x4xf32>
    %124 = vector.shape_cast %123 : vector<1x2x4xf32> to vector<2x4xf32>
    %cst_122 = arith.constant dense<0.000000e+00> : vector<2x64xf32>
    %125 = tpu.matmul %124, %122, %cst_122 {dimension_numbers = #tpu.dot_dimension_numbers<[1], [0], [0], [1], [0, 0, 1, 1], [], []>} : vector<2x4xf32>, vector<4x64xf32>, vector<2x64xf32> -> vector<2x64xf32>
    %c0_123 = arith.constant 0 : index
    %c0_124 = arith.constant 0 : index
    %126 = vector.load %arg13[%c0_123, %c0_124] : memref<128x16xf32, #tpu.memory_space<vmem>>, vector<64x16xf32>
    %cst_125 = arith.constant dense<0.000000e+00> : vector<2x16xf32>
    %127 = tpu.matmul %125, %126, %cst_125 {dimension_numbers = #tpu.dot_dimension_numbers<[1], [0], [0], [1], [0, 0, 1, 1], [], []>} : vector<2x64xf32>, vector<64x16xf32>, vector<2x16xf32> -> vector<2x16xf32>
    %c1_126 = arith.constant 1 : index
    %c0_127 = arith.constant 0 : index
    %c0_128 = arith.constant 0 : index
    %128 = vector.load %arg12[%c1_126, %c0_127, %c0_128] : memref<2x2x4xf32, #tpu.memory_space<vmem>>, vector<1x2x4xf32>
    %129 = vector.shape_cast %128 : vector<1x2x4xf32> to vector<2x4xf32>
    %cst_129 = arith.constant dense<0.000000e+00> : vector<2x64xf32>
    %130 = tpu.matmul %129, %122, %cst_129 {dimension_numbers = #tpu.dot_dimension_numbers<[1], [0], [0], [1], [0, 0, 1, 1], [], []>} : vector<2x4xf32>, vector<4x64xf32>, vector<2x64xf32> -> vector<2x64xf32>
    %c64 = arith.constant 64 : index
    %c0_130 = arith.constant 0 : index
    %131 = vector.load %arg13[%c64, %c0_130] : memref<128x16xf32, #tpu.memory_space<vmem>>, vector<64x16xf32>
    %cst_131 = arith.constant dense<0.000000e+00> : vector<2x16xf32>
    %132 = tpu.matmul %130, %131, %cst_131 {dimension_numbers = #tpu.dot_dimension_numbers<[1], [0], [0], [1], [0, 0, 1, 1], [], []>} : vector<2x64xf32>, vector<64x16xf32>, vector<2x16xf32> -> vector<2x16xf32>
    %133 = arith.addf %127, %132 : vector<2x16xf32>
    %c0_132 = arith.constant 0 : index
    %c0_133 = arith.constant 0 : index
    %134 = vector.load %arg14[%c0_132, %c0_133] : memref<1x16xf32, #tpu.memory_space<vmem>>, vector<1x16xf32>
    %135 = vector.broadcast %134 : vector<1x16xf32> to vector<2x16xf32>
    %136 = arith.addf %133, %135 : vector<2x16xf32>
    %c3_134 = arith.constant 3 : index
    %137 = memref.load %arg18[%c3_134] : memref<4xf32, #tpu.memory_space<smem>>
    %cst_135 = arith.constant 0.000000e+00 : f32
    %138 = vector.broadcast %cst_135 : f32 to vector<2x16xf32>
    %139 = arith.cmpf oge, %136, %138 : vector<2x16xf32>
    %140 = vector.broadcast %137 : f32 to vector<2x16xf32>
    %141 = arith.mulf %140, %136 : vector<2x16xf32>
    %142 = arith.select %139, %136, %141 : vector<2x16xi1>, vector<2x16xf32>
    %c0_136 = arith.constant 0 : index
    %c0_137 = arith.constant 0 : index
    %143 = vector.load %arg15[%c0_136, %c0_137] : memref<16x32xf32, #tpu.memory_space<vmem>>, vector<16x32xf32>
    %cst_138 = arith.constant dense<0.000000e+00> : vector<2x32xf32>
    %144 = tpu.matmul %142, %143, %cst_138 {dimension_numbers = #tpu.dot_dimension_numbers<[1], [0], [0], [1], [0, 0, 1, 1], [], []>} : vector<2x16xf32>, vector<16x32xf32>, vector<2x32xf32> -> vector<2x32xf32>
    %c0_139 = arith.constant 0 : index
    %c0_140 = arith.constant 0 : index
    %145 = vector.load %arg1[%c0_139, %c0_140] : memref<2x3xf32, #tpu.memory_space<vmem>>, vector<2x3xf32>
    %c0_141 = arith.constant 0 : index
    %c0_142 = arith.constant 0 : index
    %146 = vector.load %arg16[%c0_141, %c0_142] : memref<3x32xf32, #tpu.memory_space<vmem>>, vector<3x32xf32>
    %cst_143 = arith.constant dense<0.000000e+00> : vector<2x32xf32>
    %147 = tpu.matmul %145, %146, %cst_143 {dimension_numbers = #tpu.dot_dimension_numbers<[1], [0], [0], [1], [0, 0, 1, 1], [], []>} : vector<2x3xf32>, vector<3x32xf32>, vector<2x32xf32> -> vector<2x32xf32>
    %148 = arith.addf %144, %147 : vector<2x32xf32>
    %c0_144 = arith.constant 0 : index
    %c0_145 = arith.constant 0 : index
    %149 = vector.load %arg17[%c0_144, %c0_145] : memref<1x32xf32, #tpu.memory_space<vmem>>, vector<1x32xf32>
    %150 = vector.broadcast %149 : vector<1x32xf32> to vector<2x32xf32>
    %151 = arith.addf %148, %150 : vector<2x32xf32>
    %152 = vector.extract_strided_slice %151 {offsets = [0, 0], sizes = [2, 16], strides = [1, 1]} : vector<2x32xf32> to vector<2x16xf32>
    %153 = vector.extract_strided_slice %151 {offsets = [0, 16], sizes = [2, 16], strides = [1, 1]} : vector<2x32xf32> to vector<2x16xf32>
    %c0_146 = arith.constant 0 : index
    %c0_147 = arith.constant 0 : index
    %154 = vector.load %arg2[%c0_146, %c0_147] : memref<2x16xf32, #tpu.memory_space<vmem>>, vector<2x16xf32>
    %cst_148 = arith.constant 5.000000e-01 : f32
    %155 = vector.broadcast %cst_148 : f32 to vector<2x16xf32>
    %156 = arith.mulf %155, %153 : vector<2x16xf32>
    %157 = math.exp %156 : vector<2x16xf32>
    %158 = arith.mulf %154, %157 : vector<2x16xf32>
    %159 = arith.addf %158, %152 : vector<2x16xf32>
    %c0_149 = arith.constant 0 : index
    %c0_150 = arith.constant 0 : index
    %160 = vector.load %arg19[%c0_149, %c0_150] : memref<2x48xf32, #tpu.memory_space<vmem>>, vector<2x16xf32>
    tpu.vector_store %arg19[%c0_149, %c0_150], %159 {strides = array<i32>} : memref<2x48xf32, #tpu.memory_space<vmem>>, vector<2x16xf32>,
    %c0_151 = arith.constant 0 : index
    %c16_152 = arith.constant 16 : index
    %161 = vector.load %arg19[%c0_151, %c16_152] : memref<2x48xf32, #tpu.memory_space<vmem>>, vector<2x32xf32>
    tpu.vector_store %arg19[%c0_151, %c16_152], %151 {strides = array<i32>} : memref<2x48xf32, #tpu.memory_space<vmem>>, vector<2x32xf32>,
    return
  }
}

</mosaic_0001>

<llo_original>
// kernel: forward.1
$region0: #{forward.1}
  #allocation0 [shape = 'u32[]', space=smem, size = 0x4, offset = 0x4, fixed_abs, tag = 'smem constant byte address 0x4 - core index']
  #allocation1 [shape = 'u32[144,128]{1,0:T(1,128)}', space=vmem, size = 0x12000, scoped, tag = 'internal scratch']
  #allocation2 [shape = 'f32[20,80]{1,0:T(8,128)}', space=vmem, size = 0x3000, scoped, tag = 'scratch operand']
  #allocation3 [shape = 'f32[12,96]{1,0:T(8,128)}', space=vmem, size = 0x2000, scoped, tag = 'scratch operand']
  %s0 = inlined_call_operand.vmem [shape: f32[36,72], index: 0, kind: input, shape index: {}]
  %s1 = inlined_call_operand.vmem [shape: f32[2,3], index: 1, kind: input, shape index: {}]
  %s2 = inlined_call_operand.hbm [shape: f32[2,16], index: 2, kind: input, shape index: {}]
  %s3 = inlined_call_operand.vmem [shape: f32[4,16,36], index: 3, kind: input, shape index: {}]
  %s4 = inlined_call_operand.hbm [shape: f32[4,72,64], index: 4, kind: input, shape index: {}]
  %s5 = inlined_call_operand.vmem [shape: f32[1,64], index: 5, kind: input, shape index: {}]
  %s6 = inlined_call_operand.hbm [shape: f32[4,8,20], index: 6, kind: input, shape index: {}]
  %s7 = inlined_call_operand.vmem [shape: f32[4,80,64], index: 7, kind: input, shape index: {}]
  %s8 = inlined_call_operand.vmem [shape: f32[1,64], index: 8, kind: input, shape index: {}]
  %s9 = inlined_call_operand.hbm [shape: f32[4,4,12], index: 9, kind: input, shape index: {}]
  %s10 = inlined_call_operand.vmem [shape: f32[4,96,64], index: 10, kind: input, shape index: {}]
  %s11 = inlined_call_operand.hbm [shape: f32[1,64], index: 11, kind: input, shape index: {}]
  %s12 = inlined_call_operand.hbm [shape: f32[2,2,4], index: 12, kind: input, shape index: {}]
  %s13 = inlined_call_operand.vmem [shape: f32[128,16], index: 13, kind: input, shape index: {}]
  %s14 = inlined_call_operand.hbm [shape: f32[1,16], index: 14, kind: input, shape index: {}]
  %s15 = inlined_call_operand.hbm [shape: f32[16,32], index: 15, kind: input, shape index: {}]
  %s16 = inlined_call_operand.hbm [shape: f32[3,32], index: 16, kind: input, shape index: {}]
  %s17 = inlined_call_operand.hbm [shape: f32[1,32], index: 17, kind: input, shape index: {}]
  %s18 = inlined_call_operand.vmem [shape: f32[4], index: 18, kind: input, shape index: {}]
  %s19 = inlined_call_operand.vmem [shape: f32[2,48], index: 19, kind: output, shape index: {}]
  %s20 = sld [smem:[#allocation0]]
  $region130: #{forward.1} parent=0
    _
  %s22 = ssub.s32 1, %s20
  %s23 = scalar_select 0, %s22, %s20
  $region1: #{forward.1} parent=0
    #allocation4 [shape = 'u8[1024]{0}', space=vmem, size = 0x400, scoped, tag = 'input window, operand 2, single buffered']
    #allocation5 [shape = 's32[1]{0}', space=sflag, size = 0x4, scoped, tag = 'scoped memory for forward.1']
    #allocation6 [shape = 's32[1]{0}', space=sflag, size = 0x4, scoped, tag = 'scoped memory for forward.1']
    #allocation7 [shape = 'u8[147456]{0}', space=vmem, size = 0x24000, scoped, tag = 'input window, operand 4, single buffered']
    #allocation8 [shape = 's32[1]{0}', space=sflag, size = 0x4, scoped, tag = 'scoped memory for forward.1']
    #allocation9 [shape = 'u8[16384]{0}', space=vmem, size = 0x4000, scoped, tag = 'input window, operand 6, single buffered']
    #allocation10 [shape = 'u8[8192]{0}', space=vmem, size = 0x2000, scoped, tag = 'input window, operand 9, single buffered']
    #allocation11 [shape = 's32[1]{0}', space=sflag, size = 0x4, scoped, tag = 'scoped memory for forward.1']
    #allocation12 [shape = 'u8[512]{0}', space=vmem, size = 0x400, scoped, tag = 'input window, operand 11, single buffered']
    #allocation13 [shape = 'u8[2048]{0}', space=vmem, size = 0x800, scoped, tag = 'input window, operand 12, single buffered']
    #allocation14 [shape = 's32[1]{0}', space=sflag, size = 0x4, scoped, tag = 'scoped memory for forward.1']
    #allocation15 [shape = 'u8[512]{0}', space=vmem, size = 0x400, scoped, tag = 'input window, operand 14, single buffered']
    #allocation16 [shape = 'u8[8192]{0}', space=vmem, size = 0x2000, scoped, tag = 'input window, operand 15, single buffered']
    #allocation17 [shape = 's32[1]{0}', space=sflag, size = 0x4, scoped, tag = 'scoped memory for forward.1']
    #allocation18 [shape = 'u8[2048]{0}', space=vmem, size = 0x800, scoped, tag = 'input window, operand 16, single buffered']
    #allocation19 [shape = 'u8[512]{0}', space=vmem, size = 0x400, scoped, tag = 'input window, operand 17, single buffered']
    #allocation20 [shape = 's32[1]{0}', space=sflag, size = 0x4, scoped, tag = 'scoped memory for forward.1']
    #allocation21 [shape = 'u8[512]{0}', space=smem, size = 0x200, scoped, tag = 'input window, operand 18, single buffered']
    %24 = vsyncpa [#allocation5], 0
    %25 = vsyncpa [#allocation8], 0
    %26 = vsyncpa [#allocation11], 0
    %27 = vsyncpa [#allocation14], 0
    %28 = vsyncpa [#allocation17], 0
    %29 = vsyncpa [#allocation20], 0
    %30 = vsyncpa [#allocation6], 0
    // Predicated region
    $region2: #{forward.1} parent=1 // pred_check
      _
    $region3: #{forward.1} parent=1 // pred_check_branch
      %32 = sbr.rel (0) target = $region5
    $region4: #{forward.1} parent=1 // pred_region
      _
    $region5: #{forward.1} parent=1 // pred_fallthru
      _
    // Predicated region
    $region6: #{forward.1} parent=1 // pred_check
      _
    $region7: #{forward.1} parent=1 // pred_check_branch
      %34 = sbr.rel (0) target = $region9
    $region8: #{forward.1} parent=1 // pred_region
      _
    $region9: #{forward.1} parent=1 // pred_fallthru
      _
    // Predicated region
    $region10: #{forward.1} parent=1 // pred_check
      _
    $region11: #{forward.1} parent=1 // pred_check_branch
      %36 = sbr.rel (0) target = $region13
    $region12: #{forward.1} parent=1 // pred_region
      %s38 = ssub.s32 32, 32
      %39 = vsyncadd [#allocation5], %s38
      %s41 = sshll.u32 [#allocation4], 4
      %s42 = int_to_ptr.vmem [resolvable:$true] %s41
      %44 = dma.hbm_to_vmem [thread:$0]  %s2, 32, %s42, [#allocation5]
    $region13: #{forward.1} parent=1 // pred_fallthru
      _
    // Predicated region
    $region14: #{forward.1} parent=1 // pred_check
      _
    $region15: #{forward.1} parent=1 // pred_check_branch
      %46 = sbr.rel (0) target = $region17
    $region16: #{forward.1} parent=1 // pred_region
      _
    $region17: #{forward.1} parent=1 // pred_fallthru
      _
    // Predicated region
    $region18: #{forward.1} parent=1 // pred_check
      _
    $region19: #{forward.1} parent=1 // pred_check_branch
      %48 = sbr.rel (0) target = $region21
    $region20: #{forward.1} parent=1 // pred_region
      %s50 = ssub.s32 4608, 4608
      %51 = vsyncadd [#allocation8], %s50
      %s52 = sshll.u32 [#allocation7], 4
      %s53 = int_to_ptr.vmem [resolvable:$true] %s52
      %58 = dma.hbm_to_vmem [thread:$0]  %s4, 4608, %s53, [#allocation8], 128, 128, 8
    $region21: #{forward.1} parent=1 // pred_fallthru
      _
    // Predicated region
    $region22: #{forward.1} parent=1 // pred_check
      _
    $region23: #{forward.1} parent=1 // pred_check_branch
      %60 = sbr.rel (0) target = $region25
    $region24: #{forward.1} parent=1 // pred_region
      _
    $region25: #{forward.1} parent=1 // pred_fallthru
      _
    // Predicated region
    $region26: #{forward.1} parent=1 // pred_check
      _
    $region27: #{forward.1} parent=1 // pred_check_branch
      %62 = sbr.rel (0) target = $region29
    $region28: #{forward.1} parent=1 // pred_region
      %s64 = ssub.s32 512, 512
      %65 = vsyncadd [#allocation8], %s64
      %s66 = sshll.u32 [#allocation9], 4
      %s67 = int_to_ptr.vmem [resolvable:$true] %s66
      %72 = dma.hbm_to_vmem [thread:$0]  %s6, 512, %s67, [#allocation8], 128, 128, 8
    $region29: #{forward.1} parent=1 // pred_fallthru
      _
    // Predicated region
    $region30: #{forward.1} parent=1 // pred_check
      _
    $region31: #{forward.1} parent=1 // pred_check_branch
      %74 = sbr.rel (0) target = $region33
    $region32: #{forward.1} parent=1 // pred_region
      _
    $region33: #{forward.1} parent=1 // pred_fallthru
      _
    // Predicated region
    $region34: #{forward.1} parent=1 // pred_check
      _
    $region35: #{forward.1} parent=1 // pred_check_branch
      %76 = sbr.rel (0) target = $region37
    $region36: #{forward.1} parent=1 // pred_region
      _
    $region37: #{forward.1} parent=1 // pred_fallthru
      _
    // Predicated region
    $region38: #{forward.1} parent=1 // pred_check
      _
    $region39: #{forward.1} parent=1 // pred_check_branch
      %78 = sbr.rel (0) target = $region41
    $region40: #{forward.1} parent=1 // pred_region
      %s80 = ssub.s32 256, 256
      %81 = vsyncadd [#allocation11], %s80
      %s82 = sshll.u32 [#allocation10], 4
      %s83 = int_to_ptr.vmem [resolvable:$true] %s82
      %88 = dma.hbm_to_vmem [thread:$0]  %s9, 256, %s83, [#allocation11], 64, 64, 4
    $region41: #{forward.1} parent=1 // pred_fallthru
      _
    // Predicated region
    $region42: #{forward.1} parent=1 // pred_check
      _
    $region43: #{forward.1} parent=1 // pred_check_branch
      %90 = sbr.rel (0) target = $region45
    $region44: #{forward.1} parent=1 // pred_region
      _
    $region45: #{forward.1} parent=1 // pred_fallthru
      _
    // Predicated region
    $region46: #{forward.1} parent=1 // pred_check
      _
    $region47: #{forward.1} parent=1 // pred_check_branch
      %92 = sbr.rel (0) target = $region49
    $region48: #{forward.1} parent=1 // pred_region
      %s94 = ssub.s32 16, 16
      %95 = vsyncadd [#allocation11], %s94
      %s97 = sshll.u32 [#allocation12], 4
      %s98 = int_to_ptr.vmem [resolvable:$true] %s97
      %100 = dma.hbm_to_vmem [thread:$0]  %s11, 16, %s98, [#allocation11]
    $region49: #{forward.1} parent=1 // pred_fallthru
      _
    // Predicated region
    $region50: #{forward.1} parent=1 // pred_check
      _
    $region51: #{forward.1} parent=1 // pred_check_branch
      %102 = sbr.rel (0) target = $region53
    $region52: #{forward.1} parent=1 // pred_region
      %s104 = ssub.s32 64, 64
      %105 = vsyncadd [#allocation14], %s104
      %s106 = sshll.u32 [#allocation13], 4
      %s107 = int_to_ptr.vmem [resolvable:$true] %s106
      %112 = dma.hbm_to_vmem [thread:$0]  %s12, 64, %s107, [#allocation14], 32, 32, 2
    $region53: #{forward.1} parent=1 // pred_fallthru
      _
    // Predicated region
    $region54: #{forward.1} parent=1 // pred_check
      _
    $region55: #{forward.1} parent=1 // pred_check_branch
      %114 = sbr.rel (0) target = $region57
    $region56: #{forward.1} parent=1 // pred_region
      _
    $region57: #{forward.1} parent=1 // pred_fallthru
      _
    // Predicated region
    $region58: #{forward.1} parent=1 // pred_check
      _
    $region59: #{forward.1} parent=1 // pred_check_branch
      %116 = sbr.rel (0) target = $region61
    $region60: #{forward.1} parent=1 // pred_region
      %s118 = ssub.s32 16, 16
      %119 = vsyncadd [#allocation14], %s118
      %s121 = sshll.u32 [#allocation15], 4
      %s122 = int_to_ptr.vmem [resolvable:$true] %s121
      %124 = dma.hbm_to_vmem [thread:$0]  %s14, 16, %s122, [#allocation14]
    $region61: #{forward.1} parent=1 // pred_fallthru
      _
    // Predicated region
    $region62: #{forward.1} parent=1 // pred_check
      _
    $region63: #{forward.1} parent=1 // pred_check_branch
      %126 = sbr.rel (0) target = $region65
    $region64: #{forward.1} parent=1 // pred_region
      %s128 = ssub.s32 256, 256
      %129 = vsyncadd [#allocation17], %s128
      %s130 = sshll.u32 [#allocation16], 4
      %s131 = int_to_ptr.vmem [resolvable:$true] %s130
      %136 = dma.hbm_to_vmem [thread:$0]  %s15, 256, %s131, [#allocation17], 128, 128, 8
    $region65: #{forward.1} parent=1 // pred_fallthru
      _
    // Predicated region
    $region66: #{forward.1} parent=1 // pred_check
      _
    $region67: #{forward.1} parent=1 // pred_check_branch
      %138 = sbr.rel (0) target = $region69
    $region68: #{forward.1} parent=1 // pred_region
      %s140 = ssub.s32 64, 64
      %141 = vsyncadd [#allocation17], %s140
      %s143 = sshll.u32 [#allocation18], 4
      %s144 = int_to_ptr.vmem [resolvable:$true] %s143
      %146 = dma.hbm_to_vmem [thread:$0]  %s16, 64, %s144, [#allocation17]
    $region69: #{forward.1} parent=1 // pred_fallthru
      _
    // Predicated region
    $region70: #{forward.1} parent=1 // pred_check
      _
    $region71: #{forward.1} parent=1 // pred_check_branch
      %148 = sbr.rel (0) target = $region73
    $region72: #{forward.1} parent=1 // pred_region
      %s150 = ssub.s32 16, 16
      %151 = vsyncadd [#allocation20], %s150
      %s153 = sshll.u32 [#allocation19], 4
      %s154 = int_to_ptr.vmem [resolvable:$true] %s153
      %156 = dma.hbm_to_vmem [thread:$0]  %s17, 16, %s154, [#allocation20]
    $region73: #{forward.1} parent=1 // pred_fallthru
      _
    // Predicated region
    $region74: #{forward.1} parent=1 // pred_check
      _
    $region75: #{forward.1} parent=1 // pred_check_branch
      %158 = sbr.rel (0) target = $region77
    $region76: #{forward.1} parent=1 // pred_region
      %s160 = ssub.s32 16, 16
      %161 = vsyncadd [#allocation6], %s160
      %s163 = sshll.u32 %s18, 4
      %s164 = int_to_ptr.vmem [resolvable:$true] %s163
      %166 = dma.vmem_to_smem %s164, 16, [#allocation21], [#allocation6]
    $region77: #{forward.1} parent=1 // pred_fallthru
      _
    // Predicated region
    $region78: #{forward.1} parent=1 // pred_check
      _
    $region79: #{forward.1} parent=1 // pred_check_branch
      %168 = sbr.rel (0) target = $region81
    $region80: #{forward.1} parent=1 // pred_region
      %169 = dma.done [#allocation5], 32
    $region81: #{forward.1} parent=1 // pred_fallthru
      _
    // Predicated region
    $region82: #{forward.1} parent=1 // pred_check
      _
    $region83: #{forward.1} parent=1 // pred_check_branch
      %171 = sbr.rel (0) target = $region85
    $region84: #{forward.1} parent=1 // pred_region
      %172 = dma.done [#allocation8], 4608
    $region85: #{forward.1} parent=1 // pred_fallthru
      _
    // Predicated region
    $region86: #{forward.1} parent=1 // pred_check
      _
    $region87: #{forward.1} parent=1 // pred_check_branch
      %174 = sbr.rel (0) target = $region89
    $region88: #{forward.1} parent=1 // pred_region
      %175 = dma.done [#allocation8], 512
    $region89: #{forward.1} parent=1 // pred_fallthru
      _
    // Predicated region
    $region90: #{forward.1} parent=1 // pred_check
      _
    $region91: #{forward.1} parent=1 // pred_check_branch
      %177 = sbr.rel (0) target = $region93
    $region92: #{forward.1} parent=1 // pred_region
      %178 = dma.done [#allocation11], 256
    $region93: #{forward.1} parent=1 // pred_fallthru
      _
    // Predicated region
    $region94: #{forward.1} parent=1 // pred_check
      _
    $region95: #{forward.1} parent=1 // pred_check_branch
      %180 = sbr.rel (0) target = $region97
    $region96: #{forward.1} parent=1 // pred_region
      %181 = dma.done [#allocation11], 16
    $region97: #{forward.1} parent=1 // pred_fallthru
      _
    // Predicated region
    $region98: #{forward.1} parent=1 // pred_check
      _
    $region99: #{forward.1} parent=1 // pred_check_branch
      %183 = sbr.rel (0) target = $region101
    $region100: #{forward.1} parent=1 // pred_region
      %184 = dma.done [#allocation14], 64
    $region101: #{forward.1} parent=1 // pred_fallthru
      _
    // Predicated region
    $region102: #{forward.1} parent=1 // pred_check
      _
    $region103: #{forward.1} parent=1 // pred_check_branch
      %186 = sbr.rel (0) target = $region105
    $region104: #{forward.1} parent=1 // pred_region
      %187 = dma.done [#allocation14], 16
    $region105: #{forward.1} parent=1 // pred_fallthru
      _
    // Predicated region
    $region106: #{forward.1} parent=1 // pred_check
      _
    $region107: #{forward.1} parent=1 // pred_check_branch
      %189 = sbr.rel (0) target = $region109
    $region108: #{forward.1} parent=1 // pred_region
      %190 = dma.done [#allocation17], 256
    $region109: #{forward.1} parent=1 // pred_fallthru
      _
    // Predicated region
    $region110: #{forward.1} parent=1 // pred_check
      _
    $region111: #{forward.1} parent=1 // pred_check_branch
      %192 = sbr.rel (0) target = $region113
    $region112: #{forward.1} parent=1 // pred_region
      %193 = dma.done [#allocation17], 64
    $region113: #{forward.1} parent=1 // pred_fallthru
      _
    // Predicated region
    $region114: #{forward.1} parent=1 // pred_check
      _
    $region115: #{forward.1} parent=1 // pred_check_branch
      %195 = sbr.rel (0) target = $region117
    $region116: #{forward.1} parent=1 // pred_region
      %196 = dma.done [#allocation20], 16
    $region117: #{forward.1} parent=1 // pred_fallthru
      _
    // Predicated region
    $region118: #{forward.1} parent=1 // pred_check
      _
    $region119: #{forward.1} parent=1 // pred_check_branch
      %198 = sbr.rel (0) target = $region121
    $region120: #{forward.1} parent=1 // pred_region
      %199 = dma.done [#allocation6], 16
    $region121: #{forward.1} parent=1 // pred_fallthru
      _
    %200 = sfence
    %vm201 = vcmask 654336
    %202 = vst.msk [vmem:[#allocation2] sm:$0xff] %vm201, 0.0
    %203 = vst.msk [vmem:[#allocation2 + $0x8] sm:$0xff] %vm201, 0.0
    %vm204 = vcmask 650240
    %205 = vst.msk [vmem:[#allocation2 + $0x10] sm:$0xf] %vm204, 0.0
    %vm206 = vcmask 785408
    %207 = vst.msk [vmem:[#allocation3] sm:$0xff] %vm206, 0.0
    %vm208 = vcmask 781312
    %209 = vst.msk [vmem:[#allocation3 + $0x8] sm:$0xf] %vm208, 0.0
    %v210 = vld [vmem:[%s0] sm:$0xff]
    %v211 = vld [vmem:[%s0 + $0x8] sm:$0xff]
    %v212 = vld [vmem:[%s0 + $0x10] sm:$0xff]
    %v213 = vld [vmem:[%s0 + $0x18] sm:$0xff]
    %v214 = vld [vmem:[%s0 + $0x20] sm:$0xf]
    %v215 = vld [vmem:[%s3] sm:$0xff]
    %v216 = vld [vmem:[%s3 + $0x8] sm:$0xff]
    %vm217 = vcmask 293888
    %v219 = vsel %vm217, %v215, 0
    %v222 = vsel %vm217, %v216, 0
    %vm224 = vcmask 1043456
    %v226 = vsel %vm224, %v214, 0
    %228 = vmatprep.subr.mxu0 0.0
    %229 = vmatpush1.msra.mxu0 %v210
    %230 = vmatprep.subr.mxu0 0.0
    %231 = vmatpush1.msra.mxu0 %v211
    %232 = vmatprep.subr.mxu0 0.0
    %233 = vmatpush1.msra.mxu0 %v212
    %234 = vmatprep.subr.mxu0 0.0
    %235 = vmatpush1.msra.mxu0 %v213
    %236 = vmatprep.subr.mxu0 0.0
    %237 = vmatpush1.msra.mxu0 %v226
    %238 = vmatprep.subr.mxu0 0.0
    %239 = vmatpush1.msra.mxu0 0.0
    %240 = vmatprep.subr.mxu0 0.0
    %241 = vmatpush1.msra.mxu0 0.0
    %242 = vmatprep.subr.mxu0 0.0
    %243 = vmatpush1.msra.mxu0 0.0
    %244 = vmatprep.subr.mxu0 0.0
    %245 = vmatpush1.msra.mxu0 0.0
    %246 = vmatprep.subr.mxu0 0.0
    %247 = vmatpush1.msra.mxu0 0.0
    %248 = vmatprep.subr.mxu0 0.0
    %249 = vmatpush1.msra.mxu0 0.0
    %250 = vmatprep.subr.mxu0 0.0
    %251 = vmatpush1.msra.mxu0 0.0
    %252 = vmatprep.subr.mxu0 0.0
    %253 = vmatpush1.msra.mxu0 0.0
    %254 = vmatprep.subr.mxu0 0.0
    %255 = vmatpush1.msra.mxu0 0.0
    %256 = vmatprep.subr.mxu0 0.0
    %257 = vmatpush1.msra.mxu0 0.0
    %258 = vmatprep.subr.mxu0 0.0
    %259 = vmatpush1.msra.mxu0 0.0
    %260 = vmatprep.subr.mxu0 0.0
    %261 = vmatpush1.msra.mxu0 0.0
    %262 = vmatprep.subr.mxu0 0.0
    %263 = vmatpush1.msra.mxu0 0.0
    %264 = vmatprep.subr.mxu0 0.0
    %265 = vmatpush1.msra.mxu0 0.0
    %266 = vmatprep.subr.mxu0 0.0
    %267 = vmatpush1.msra.mxu0 0.0
    %268 = vmatprep.subr.mxu0 0.0
    %269 = vmatpush1.msra.mxu0 0.0
    %270 = vmatprep.subr.mxu0 0.0
    %271 = vmatpush1.msra.mxu0 0.0
    %272 = vmatprep.subr.mxu0 0.0
    %273 = vmatpush1.msra.mxu0 0.0
    %274 = vmatprep.subr.mxu0 0.0
    %275 = vmatpush1.msra.mxu0 0.0
    %276 = vmatprep.subr.mxu0 0.0
    %277 = vmatpush1.msra.mxu0 0.0
    %278 = vmatprep.subr.mxu0 0.0
    %279 = vmatpush1.msra.mxu0 0.0
    %280 = vmatprep.subr.mxu0 0.0
    %281 = vmatpush1.msra.mxu0 0.0
    %282 = vmatprep.subr.mxu0 0.0
    %283 = vmatpush1.msra.mxu0 0.0
    %284 = vmatprep.subr.mxu0 0.0
    %285 = vmatpush1.msra.mxu0 0.0
    %286 = vmatprep.subr.mxu0 0.0
    %287 = vmatpush1.msra.mxu0 0.0
    %288 = vmatprep.subr.mxu0 0.0
    %289 = vmatpush1.msra.mxu0 0.0
    %290 = vmatprep.subr.mxu0 0.0
    %291 = vmatpush1.msra.mxu0 0.0
    %292 = vmatprep.mubr.f32.mxu0 0.0
    %293 = vmatmul.mubr.f32.gmra.mrb[0].mxu0 %v219
    %v294 = vpop.f32.mrb[0].mxu0
    %v295 = vadd.f32 0.0, %v294
    %v296 = vpop.f32.mrb[0].mxu0
    %297 = vmatprep.mubr.f32.mxu0 0.0
    %298 = vmatmul.mubr.f32.gmra.mrb[0].mxu0 %v222
    %v299 = vpop.f32.mrb[0].mxu0
    %v300 = vadd.f32 0.0, %v299
    %v301 = vpop.f32.mrb[0].mxu0
    %302 = vdwg.mxu0
    %v303 = vld [vmem:[#allocation7] sm:$0xff]
    %v304 = vld [vmem:[#allocation7 + $0x8] sm:$0xff]
    %v305 = vld [vmem:[#allocation7 + $0x10] sm:$0xff]
    %v306 = vld [vmem:[#allocation7 + $0x18] sm:$0xff]
    %v307 = vld [vmem:[#allocation7 + $0x20] sm:$0xff]
    %v308 = vld [vmem:[#allocation7 + $0x28] sm:$0xff]
    %v309 = vld [vmem:[#allocation7 + $0x30] sm:$0xff]
    %v310 = vld [vmem:[#allocation7 + $0x38] sm:$0xff]
    %v311 = vld [vmem:[#allocation7 + $0x40] sm:$0xff]
    %s312 = scalar_lea.vmem %s3, 16
    %v313 = vld [vmem:[%s312] sm:$0xff]
    %v314 = vld [vmem:[%s312 + $0x8] sm:$0xff]
    %v316 = vsel %vm217, %v313, 0
    %v319 = vsel %vm217, %v314, 0
    %321 = vmatprep.subr.mxu0 0.0
    %322 = vmatpush1.msra.mxu0 %v210
    %323 = vmatprep.subr.mxu0 0.0
    %324 = vmatpush1.msra.mxu0 %v211
    %325 = vmatprep.subr.mxu0 0.0
    %326 = vmatpush1.msra.mxu0 %v212
    %327 = vmatprep.subr.mxu0 0.0
    %328 = vmatpush1.msra.mxu0 %v213
    %329 = vmatprep.subr.mxu0 0.0
    %330 = vmatpush1.msra.mxu0 %v226
    %331 = vmatprep.subr.mxu0 0.0
    %332 = vmatpush1.msra.mxu0 0.0
    %333 = vmatprep.subr.mxu0 0.0
    %334 = vmatpush1.msra.mxu0 0.0
    %335 = vmatprep.subr.mxu0 0.0
    %336 = vmatpush1.msra.mxu0 0.0
    %337 = vmatprep.subr.mxu0 0.0
    %338 = vmatpush1.msra.mxu0 0.0
    %339 = vmatprep.subr.mxu0 0.0
    %340 = vmatpush1.msra.mxu0 0.0
    %341 = vmatprep.subr.mxu0 0.0
    %342 = vmatpush1.msra.mxu0 0.0
    %343 = vmatprep.subr.mxu0 0.0
    %344 = vmatpush1.msra.mxu0 0.0
    %345 = vmatprep.subr.mxu0 0.0
    %346 = vmatpush1.msra.mxu0 0.0
    %347 = vmatprep.subr.mxu0 0.0
    %348 = vmatpush1.msra.mxu0 0.0
    %349 = vmatprep.subr.mxu0 0.0
    %350 = vmatpush1.msra.mxu0 0.0
    %351 = vmatprep.subr.mxu0 0.0
    %352 = vmatpush1.msra.mxu0 0.0
    %353 = vmatprep.subr.mxu0 0.0
    %354 = vmatpush1.msra.mxu0 0.0
    %355 = vmatprep.subr.mxu0 0.0
    %356 = vmatpush1.msra.mxu0 0.0
    %357 = vmatprep.subr.mxu0 0.0
    %358 = vmatpush1.msra.mxu0 0.0
    %359 = vmatprep.subr.mxu0 0.0
    %360 = vmatpush1.msra.mxu0 0.0
    %361 = vmatprep.subr.mxu0 0.0
    %362 = vmatpush1.msra.mxu0 0.0
    %363 = vmatprep.subr.mxu0 0.0
    %364 = vmatpush1.msra.mxu0 0.0
    %365 = vmatprep.subr.mxu0 0.0
    %366 = vmatpush1.msra.mxu0 0.0
    %367 = vmatprep.subr.mxu0 0.0
    %368 = vmatpush1.msra.mxu0 0.0
    %369 = vmatprep.subr.mxu0 0.0
    %370 = vmatpush1.msra.mxu0 0.0
    %371 = vmatprep.subr.mxu0 0.0
    %372 = vmatpush1.msra.mxu0 0.0
    %373 = vmatprep.subr.mxu0 0.0
    %374 = vmatpush1.msra.mxu0 0.0
    %375 = vmatprep.subr.mxu0 0.0
    %376 = vmatpush1.msra.mxu0 0.0
    %377 = vmatprep.subr.mxu0 0.0
    %378 = vmatpush1.msra.mxu0 0.0
    %379 = vmatprep.subr.mxu0 0.0
    %380 = vmatpush1.msra.mxu0 0.0
    %381 = vmatprep.subr.mxu0 0.0
    %382 = vmatpush1.msra.mxu0 0.0
    %383 = vmatprep.subr.mxu0 0.0
    %384 = vmatpush1.msra.mxu0 0.0
    %385 = vmatprep.mubr.f32.mxu0 0.0
    %386 = vmatmul.mubr.f32.gmra.mrb[0].mxu0 %v316
    %v387 = vpop.f32.mrb[0].mxu0
    %v388 = vadd.f32 0.0, %v387
    %v389 = vpop.f32.mrb[0].mxu0
    %390 = vmatprep.mubr.f32.mxu0 0.0
    %391 = vmatmul.mubr.f32.gmra.mrb[0].mxu0 %v319
    %v392 = vpop.f32.mrb[0].mxu0
    %v393 = vadd.f32 0.0, %v392
    %v394 = vpop.f32.mrb[0].mxu0
    %395 = vdwg.mxu0
    %s396 = scalar_lea.vmem [#allocation7], 72
    %v397 = vld [vmem:[%s396] sm:$0xff]
    %v398 = vld [vmem:[%s396 + $0x8] sm:$0xff]
    %v399 = vld [vmem:[%s396 + $0x10] sm:$0xff]
    %v400 = vld [vmem:[%s396 + $0x18] sm:$0xff]
    %v401 = vld [vmem:[%s396 + $0x20] sm:$0xff]
    %v402 = vld [vmem:[%s396 + $0x28] sm:$0xff]
    %v403 = vld [vmem:[%s396 + $0x30] sm:$0xff]
    %v404 = vld [vmem:[%s396 + $0x38] sm:$0xff]
    %v405 = vld [vmem:[%s396 + $0x40] sm:$0xff]
    %vm406 = vcmask 588800
    %v408 = vsel %vm406, %v388, 0
    %v411 = vsel %vm406, %v393, 0
    %413 = vmatprep.subr.mxu0 0.0
    %414 = vmatpush1.msra.mxu0 %v397
    %415 = vmatprep.subr.mxu0 0.0
    %416 = vmatpush1.msra.mxu0 %v398
    %417 = vmatprep.subr.mxu0 0.0
    %418 = vmatpush1.msra.mxu0 %v399
    %419 = vmatprep.subr.mxu0 0.0
    %420 = vmatpush1.msra.mxu0 %v400
    %421 = vmatprep.subr.mxu0 0.0
    %422 = vmatpush1.msra.mxu0 %v401
    %423 = vmatprep.subr.mxu0 0.0
    %424 = vmatpush1.msra.mxu0 %v402
    %425 = vmatprep.subr.mxu0 0.0
    %426 = vmatpush1.msra.mxu0 %v403
    %427 = vmatprep.subr.mxu0 0.0
    %428 = vmatpush1.msra.mxu0 %v404
    %429 = vmatprep.subr.mxu0 0.0
    %430 = vmatpush1.msra.mxu0 %v405
    %431 = vmatprep.subr.mxu0 0.0
    %432 = vmatpush1.msra.mxu0 0.0
    %433 = vmatprep.subr.mxu0 0.0
    %434 = vmatpush1.msra.mxu0 0.0
    %435 = vmatprep.subr.mxu0 0.0
    %436 = vmatpush1.msra.mxu0 0.0
    %437 = vmatprep.subr.mxu0 0.0
    %438 = vmatpush1.msra.mxu0 0.0
    %439 = vmatprep.subr.mxu0 0.0
    %440 = vmatpush1.msra.mxu0 0.0
    %441 = vmatprep.subr.mxu0 0.0
    %442 = vmatpush1.msra.mxu0 0.0
    %443 = vmatprep.subr.mxu0 0.0
    %444 = vmatpush1.msra.mxu0 0.0
    %445 = vmatprep.subr.mxu0 0.0
    %446 = vmatpush1.msra.mxu0 0.0
    %447 = vmatprep.subr.mxu0 0.0
    %448 = vmatpush1.msra.mxu0 0.0
    %449 = vmatprep.subr.mxu0 0.0
    %450 = vmatpush1.msra.mxu0 0.0
    %451 = vmatprep.subr.mxu0 0.0
    %452 = vmatpush1.msra.mxu0 0.0
    %453 = vmatprep.subr.mxu0 0.0
    %454 = vmatpush1.msra.mxu0 0.0
    %455 = vmatprep.subr.mxu0 0.0
    %456 = vmatpush1.msra.mxu0 0.0
    %457 = vmatprep.subr.mxu0 0.0
    %458 = vmatpush1.msra.mxu0 0.0
    %459 = vmatprep.subr.mxu0 0.0
    %460 = vmatpush1.msra.mxu0 0.0
    %461 = vmatprep.subr.mxu0 0.0
    %462 = vmatpush1.msra.mxu0 0.0
    %463 = vmatprep.subr.mxu0 0.0
    %464 = vmatpush1.msra.mxu0 0.0
    %465 = vmatprep.subr.mxu0 0.0
    %466 = vmatpush1.msra.mxu0 0.0
    %467 = vmatprep.subr.mxu0 0.0
    %468 = vmatpush1.msra.mxu0 0.0
    %469 = vmatprep.subr.mxu0 0.0
    %470 = vmatpush1.msra.mxu0 0.0
    %471 = vmatprep.subr.mxu0 0.0
    %472 = vmatpush1.msra.mxu0 0.0
    %473 = vmatprep.subr.mxu0 0.0
    %474 = vmatpush1.msra.mxu0 0.0
    %475 = vmatprep.subr.mxu0 0.0
    %476 = vmatpush1.msra.mxu0 0.0
    %477 = vmatprep.mubr.f32.mxu0 0.0
    %478 = vmatmul.mubr.f32.gmra.mrb[0].mxu0 %v408
    %v479 = vpop.f32.mrb[0].mxu0
    %v480 = vadd.f32 0.0, %v479
    %v481 = vpop.f32.mrb[0].mxu0
    %482 = vmatprep.mubr.f32.mxu0 0.0
    %483 = vmatmul.mubr.f32.gmra.mrb[0].mxu0 %v411
    %v484 = vpop.f32.mrb[0].mxu0
    %v485 = vadd.f32 0.0, %v484
    %v486 = vpop.f32.mrb[0].mxu0
    %487 = vdwg.mxu0
    %v489 = vsel %vm406, %v295, 0
    %v492 = vsel %vm406, %v300, 0
    %494 = vmatprep.subr.mxu0 0.0
    %495 = vmatpush1.msra.mxu0 %v303
    %496 = vmatprep.subr.mxu0 0.0
    %497 = vmatpush1.msra.mxu0 %v304
    %498 = vmatprep.subr.mxu0 0.0
    %499 = vmatpush1.msra.mxu0 %v305
    %500 = vmatprep.subr.mxu0 0.0
    %501 = vmatpush1.msra.mxu0 %v306
    %502 = vmatprep.subr.mxu0 0.0
    %503 = vmatpush1.msra.mxu0 %v307
    %504 = vmatprep.subr.mxu0 0.0
    %505 = vmatpush1.msra.mxu0 %v308
    %506 = vmatprep.subr.mxu0 0.0
    %507 = vmatpush1.msra.mxu0 %v309
    %508 = vmatprep.subr.mxu0 0.0
    %509 = vmatpush1.msra.mxu0 %v310
    %510 = vmatprep.subr.mxu0 0.0
    %511 = vmatpush1.msra.mxu0 %v311
    %512 = vmatprep.subr.mxu0 0.0
    %513 = vmatpush1.msra.mxu0 0.0
    %514 = vmatprep.subr.mxu0 0.0
    %515 = vmatpush1.msra.mxu0 0.0
    %516 = vmatprep.subr.mxu0 0.0
    %517 = vmatpush1.msra.mxu0 0.0
    %518 = vmatprep.subr.mxu0 0.0
    %519 = vmatpush1.msra.mxu0 0.0
    %520 = vmatprep.subr.mxu0 0.0
    %521 = vmatpush1.msra.mxu0 0.0
    %522 = vmatprep.subr.mxu0 0.0
    %523 = vmatpush1.msra.mxu0 0.0
    %524 = vmatprep.subr.mxu0 0.0
    %525 = vmatpush1.msra.mxu0 0.0
    %526 = vmatprep.subr.mxu0 0.0
    %527 = vmatpush1.msra.mxu0 0.0
    %528 = vmatprep.subr.mxu0 0.0
    %529 = vmatpush1.msra.mxu0 0.0
    %530 = vmatprep.subr.mxu0 0.0
    %531 = vmatpush1.msra.mxu0 0.0
    %532 = vmatprep.subr.mxu0 0.0
    %533 = vmatpush1.msra.mxu0 0.0
    %534 = vmatprep.subr.mxu0 0.0
    %535 = vmatpush1.msra.mxu0 0.0
    %536 = vmatprep.subr.mxu0 0.0
    %537 = vmatpush1.msra.mxu0 0.0
    %538 = vmatprep.subr.mxu0 0.0
    %539 = vmatpush1.msra.mxu0 0.0
    %540 = vmatprep.subr.mxu0 0.0
    %541 = vmatpush1.msra.mxu0 0.0
    %542 = vmatprep.subr.mxu0 0.0
    %543 = vmatpush1.msra.mxu0 0.0
    %544 = vmatprep.subr.mxu0 0.0
    %545 = vmatpush1.msra.mxu0 0.0
    %546 = vmatprep.subr.mxu0 0.0
    %547 = vmatpush1.msra.mxu0 0.0
    %548 = vmatprep.subr.mxu0 0.0
    %549 = vmatpush1.msra.mxu0 0.0
    %550 = vmatprep.subr.mxu0 0.0
    %551 = vmatpush1.msra.mxu0 0.0
    %552 = vmatprep.subr.mxu0 0.0
    %553 = vmatpush1.msra.mxu0 0.0
    %554 = vmatprep.subr.mxu0 0.0
    %555 = vmatpush1.msra.mxu0 0.0
    %556 = vmatprep.subr.mxu0 0.0
    %557 = vmatpush1.msra.mxu0 0.0
    %558 = vmatprep.mubr.f32.mxu0 0.0
    %559 = vmatmul.mubr.f32.gmra.mrb[0].mxu0 %v489
    %v560 = vpop.f32.mrb[0].mxu0
    %v561 = vadd.f32 %v480, %v560
    %v562 = vpop.f32.mrb[0].mxu0
    %563 = vmatprep.mubr.f32.mxu0 0.0
    %564 = vmatmul.mubr.f32.gmra.mrb[0].mxu0 %v492
    %v565 = vpop.f32.mrb[0].mxu0
    %v566 = vadd.f32 %v485, %v565
    %v567 = vpop.f32.mrb[0].mxu0
    %568 = vdwg.mxu0
    %s569 = scalar_lea.vmem %s3, 32
    %v570 = vld [vmem:[%s569] sm:$0xff]
    %v571 = vld [vmem:[%s569 + $0x8] sm:$0xff]
    %v573 = vsel %vm217, %v570, 0
    %v576 = vsel %vm217, %v571, 0
    %578 = vmatprep.subr.mxu0 0.0
    %579 = vmatpush1.msra.mxu0 %v210
    %580 = vmatprep.subr.mxu0 0.0
    %581 = vmatpush1.msra.mxu0 %v211
    %582 = vmatprep.subr.mxu0 0.0
    %583 = vmatpush1.msra.mxu0 %v212
    %584 = vmatprep.subr.mxu0 0.0
    %585 = vmatpush1.msra.mxu0 %v213
    %586 = vmatprep.subr.mxu0 0.0
    %587 = vmatpush1.msra.mxu0 %v226
    %588 = vmatprep.subr.mxu0 0.0
    %589 = vmatpush1.msra.mxu0 0.0
    %590 = vmatprep.subr.mxu0 0.0
    %591 = vmatpush1.msra.mxu0 0.0
    %592 = vmatprep.subr.mxu0 0.0
    %593 = vmatpush1.msra.mxu0 0.0
    %594 = vmatprep.subr.mxu0 0.0
    %595 = vmatpush1.msra.mxu0 0.0
    %596 = vmatprep.subr.mxu0 0.0
    %597 = vmatpush1.msra.mxu0 0.0
    %598 = vmatprep.subr.mxu0 0.0
    %599 = vmatpush1.msra.mxu0 0.0
    %600 = vmatprep.subr.mxu0 0.0
    %601 = vmatpush1.msra.mxu0 0.0
    %602 = vmatprep.subr.mxu0 0.0
    %603 = vmatpush1.msra.mxu0 0.0
    %604 = vmatprep.subr.mxu0 0.0
    %605 = vmatpush1.msra.mxu0 0.0
    %606 = vmatprep.subr.mxu0 0.0
    %607 = vmatpush1.msra.mxu0 0.0
    %608 = vmatprep.subr.mxu0 0.0
    %609 = vmatpush1.msra.mxu0 0.0
    %610 = vmatprep.subr.mxu0 0.0
    %611 = vmatpush1.msra.mxu0 0.0
    %612 = vmatprep.subr.mxu0 0.0
    %613 = vmatpush1.msra.mxu0 0.0
    %614 = vmatprep.subr.mxu0 0.0
    %615 = vmatpush1.msra.mxu0 0.0
    %616 = vmatprep.subr.mxu0 0.0
    %617 = vmatpush1.msra.mxu0 0.0
    %618 = vmatprep.subr.mxu0 0.0
    %619 = vmatpush1.msra.mxu0 0.0
    %620 = vmatprep.subr.mxu0 0.0
    %621 = vmatpush1.msra.mxu0 0.0
    %622 = vmatprep.subr.mxu0 0.0
    %623 = vmatpush1.msra.mxu0 0.0
    %624 = vmatprep.subr.mxu0 0.0
    %625 = vmatpush1.msra.mxu0 0.0
    %626 = vmatprep.subr.mxu0 0.0
    %627 = vmatpush1.msra.mxu0 0.0
    %628 = vmatprep.subr.mxu0 0.0
    %629 = vmatpush1.msra.mxu0 0.0
    %630 = vmatprep.subr.mxu0 0.0
    %631 = vmatpush1.msra.mxu0 0.0
    %632 = vmatprep.subr.mxu0 0.0
    %633 = vmatpush1.msra.mxu0 0.0
    %634 = vmatprep.subr.mxu0 0.0
    %635 = vmatpush1.msra.mxu0 0.0
    %636 = vmatprep.subr.mxu0 0.0
    %637 = vmatpush1.msra.mxu0 0.0
    %638 = vmatprep.subr.mxu0 0.0
    %639 = vmatpush1.msra.mxu0 0.0
    %640 = vmatprep.subr.mxu0 0.0
    %641 = vmatpush1.msra.mxu0 0.0
    %642 = vmatprep.mubr.f32.mxu0 0.0
    %643 = vmatmul.mubr.f32.gmra.mrb[0].mxu0 %v573
    %v644 = vpop.f32.mrb[0].mxu0
    %v645 = vadd.f32 0.0, %v644
    %v646 = vpop.f32.mrb[0].mxu0
    %647 = vmatprep.mubr.f32.mxu0 0.0
    %648 = vmatmul.mubr.f32.gmra.mrb[0].mxu0 %v576
    %v649 = vpop.f32.mrb[0].mxu0
    %v650 = vadd.f32 0.0, %v649
    %v651 = vpop.f32.mrb[0].mxu0
    %652 = vdwg.mxu0
    %s653 = scalar_lea.vmem [#allocation7], 144
    %v654 = vld [vmem:[%s653] sm:$0xff]
    %v655 = vld [vmem:[%s653 + $0x8] sm:$0xff]
    %v656 = vld [vmem:[%s653 + $0x10] sm:$0xff]
    %v657 = vld [vmem:[%s653 + $0x18] sm:$0xff]
    %v658 = vld [vmem:[%s653 + $0x20] sm:$0xff]
    %v659 = vld [vmem:[%s653 + $0x28] sm:$0xff]
    %v660 = vld [vmem:[%s653 + $0x30] sm:$0xff]
    %v661 = vld [vmem:[%s653 + $0x38] sm:$0xff]
    %v662 = vld [vmem:[%s653 + $0x40] sm:$0xff]
    %v664 = vsel %vm406, %v645, 0
    %v667 = vsel %vm406, %v650, 0
    %669 = vmatprep.subr.mxu0 0.0
    %670 = vmatpush1.msra.mxu0 %v654
    %671 = vmatprep.subr.mxu0 0.0
    %672 = vmatpush1.msra.mxu0 %v655
    %673 = vmatprep.subr.mxu0 0.0
    %674 = vmatpush1.msra.mxu0 %v656
    %675 = vmatprep.subr.mxu0 0.0
    %676 = vmatpush1.msra.mxu0 %v657
    %677 = vmatprep.subr.mxu0 0.0
    %678 = vmatpush1.msra.mxu0 %v658
    %679 = vmatprep.subr.mxu0 0.0
    %680 = vmatpush1.msra.mxu0 %v659
    %681 = vmatprep.subr.mxu0 0.0
    %682 = vmatpush1.msra.mxu0 %v660
    %683 = vmatprep.subr.mxu0 0.0
    %684 = vmatpush1.msra.mxu0 %v661
    %685 = vmatprep.subr.mxu0 0.0
    %686 = vmatpush1.msra.mxu0 %v662
    %687 = vmatprep.subr.mxu0 0.0
    %688 = vmatpush1.msra.mxu0 0.0
    %689 = vmatprep.subr.mxu0 0.0
    %690 = vmatpush1.msra.mxu0 0.0
    %691 = vmatprep.subr.mxu0 0.0
    %692 = vmatpush1.msra.mxu0 0.0
    %693 = vmatprep.subr.mxu0 0.0
    %694 = vmatpush1.msra.mxu0 0.0
    %695 = vmatprep.subr.mxu0 0.0
    %696 = vmatpush1.msra.mxu0 0.0
    %697 = vmatprep.subr.mxu0 0.0
    %698 = vmatpush1.msra.mxu0 0.0
    %699 = vmatprep.subr.mxu0 0.0
    %700 = vmatpush1.msra.mxu0 0.0
    %701 = vmatprep.subr.mxu0 0.0
    %702 = vmatpush1.msra.mxu0 0.0
    %703 = vmatprep.subr.mxu0 0.0
    %704 = vmatpush1.msra.mxu0 0.0
    %705 = vmatprep.subr.mxu0 0.0
    %706 = vmatpush1.msra.mxu0 0.0
    %707 = vmatprep.subr.mxu0 0.0
    %708 = vmatpush1.msra.mxu0 0.0
    %709 = vmatprep.subr.mxu0 0.0
    %710 = vmatpush1.msra.mxu0 0.0
    %711 = vmatprep.subr.mxu0 0.0
    %712 = vmatpush1.msra.mxu0 0.0
    %713 = vmatprep.subr.mxu0 0.0
    %714 = vmatpush1.msra.mxu0 0.0
    %715 = vmatprep.subr.mxu0 0.0
    %716 = vmatpush1.msra.mxu0 0.0
    %717 = vmatprep.subr.mxu0 0.0
    %718 = vmatpush1.msra.mxu0 0.0
    %719 = vmatprep.subr.mxu0 0.0
    %720 = vmatpush1.msra.mxu0 0.0
    %721 = vmatprep.subr.mxu0 0.0
    %722 = vmatpush1.msra.mxu0 0.0
    %723 = vmatprep.subr.mxu0 0.0
    %724 = vmatpush1.msra.mxu0 0.0
    %725 = vmatprep.subr.mxu0 0.0
    %726 = vmatpush1.msra.mxu0 0.0
    %727 = vmatprep.subr.mxu0 0.0
    %728 = vmatpush1.msra.mxu0 0.0
    %729 = vmatprep.subr.mxu0 0.0
    %730 = vmatpush1.msra.mxu0 0.0
    %731 = vmatprep.subr.mxu0 0.0
    %732 = vmatpush1.msra.mxu0 0.0
    %733 = vmatprep.mubr.f32.mxu0 0.0
    %734 = vmatmul.mubr.f32.gmra.mrb[0].mxu0 %v664
    %v735 = vpop.f32.mrb[0].mxu0
    %v736 = vadd.f32 0.0, %v735
    %v737 = vpop.f32.mrb[0].mxu0
    %738 = vmatprep.mubr.f32.mxu0 0.0
    %739 = vmatmul.mubr.f32.gmra.mrb[0].mxu0 %v667
    %v740 = vpop.f32.mrb[0].mxu0
    %v741 = vadd.f32 0.0, %v740
    %v742 = vpop.f32.mrb[0].mxu0
    %743 = vdwg.mxu0
    %v744 = vadd.f32 %v561, %v736
    %v745 = vadd.f32 %v566, %v741
    %s746 = scalar_lea.vmem %s3, 48
    %v747 = vld [vmem:[%s746] sm:$0xff]
    %v748 = vld [vmem:[%s746 + $0x8] sm:$0xff]
    %v750 = vsel %vm217, %v747, 0
    %v753 = vsel %vm217, %v748, 0
    %755 = vmatprep.subr.mxu0 0.0
    %756 = vmatpush1.msra.mxu0 %v210
    %757 = vmatprep.subr.mxu0 0.0
    %758 = vmatpush1.msra.mxu0 %v211
    %759 = vmatprep.subr.mxu0 0.0
    %760 = vmatpush1.msra.mxu0 %v212
    %761 = vmatprep.subr.mxu0 0.0
    %762 = vmatpush1.msra.mxu0 %v213
    %763 = vmatprep.subr.mxu0 0.0
    %764 = vmatpush1.msra.mxu0 %v226
    %765 = vmatprep.subr.mxu0 0.0
    %766 = vmatpush1.msra.mxu0 0.0
    %767 = vmatprep.subr.mxu0 0.0
    %768 = vmatpush1.msra.mxu0 0.0
    %769 = vmatprep.subr.mxu0 0.0
    %770 = vmatpush1.msra.mxu0 0.0
    %771 = vmatprep.subr.mxu0 0.0
    %772 = vmatpush1.msra.mxu0 0.0
    %773 = vmatprep.subr.mxu0 0.0
    %774 = vmatpush1.msra.mxu0 0.0
    %775 = vmatprep.subr.mxu0 0.0
    %776 = vmatpush1.msra.mxu0 0.0
    %777 = vmatprep.subr.mxu0 0.0
    %778 = vmatpush1.msra.mxu0 0.0
    %779 = vmatprep.subr.mxu0 0.0
    %780 = vmatpush1.msra.mxu0 0.0
    %781 = vmatprep.subr.mxu0 0.0
    %782 = vmatpush1.msra.mxu0 0.0
    %783 = vmatprep.subr.mxu0 0.0
    %784 = vmatpush1.msra.mxu0 0.0
    %785 = vmatprep.subr.mxu0 0.0
    %786 = vmatpush1.msra.mxu0 0.0
    %787 = vmatprep.subr.mxu0 0.0
    %788 = vmatpush1.msra.mxu0 0.0
    %789 = vmatprep.subr.mxu0 0.0
    %790 = vmatpush1.msra.mxu0 0.0
    %791 = vmatprep.subr.mxu0 0.0
    %792 = vmatpush1.msra.mxu0 0.0
    %793 = vmatprep.subr.mxu0 0.0
    %794 = vmatpush1.msra.mxu0 0.0
    %795 = vmatprep.subr.mxu0 0.0
    %796 = vmatpush1.msra.mxu0 0.0
    %797 = vmatprep.subr.mxu0 0.0
    %798 = vmatpush1.msra.mxu0 0.0
    %799 = vmatprep.subr.mxu0 0.0
    %800 = vmatpush1.msra.mxu0 0.0
    %801 = vmatprep.subr.mxu0 0.0
    %802 = vmatpush1.msra.mxu0 0.0
    %803 = vmatprep.subr.mxu0 0.0
    %804 = vmatpush1.msra.mxu0 0.0
    %805 = vmatprep.subr.mxu0 0.0
    %806 = vmatpush1.msra.mxu0 0.0
    %807 = vmatprep.subr.mxu0 0.0
    %808 = vmatpush1.msra.mxu0 0.0
    %809 = vmatprep.subr.mxu0 0.0
    %810 = vmatpush1.msra.mxu0 0.0
    %811 = vmatprep.subr.mxu0 0.0
    %812 = vmatpush1.msra.mxu0 0.0
    %813 = vmatprep.subr.mxu0 0.0
    %814 = vmatpush1.msra.mxu0 0.0
    %815 = vmatprep.subr.mxu0 0.0
    %816 = vmatpush1.msra.mxu0 0.0
    %817 = vmatprep.subr.mxu0 0.0
    %818 = vmatpush1.msra.mxu0 0.0
    %819 = vmatprep.mubr.f32.mxu0 0.0
    %820 = vmatmul.mubr.f32.gmra.mrb[0].mxu0 %v750
    %v821 = vpop.f32.mrb[0].mxu0
    %v822 = vadd.f32 0.0, %v821
    %v823 = vpop.f32.mrb[0].mxu0
    %824 = vmatprep.mubr.f32.mxu0 0.0
    %825 = vmatmul.mubr.f32.gmra.mrb[0].mxu0 %v753
    %v826 = vpop.f32.mrb[0].mxu0
    %v827 = vadd.f32 0.0, %v826
    %v828 = vpop.f32.mrb[0].mxu0
    %829 = vdwg.mxu0
    %s830 = scalar_lea.vmem [#allocation7], 216
    %v831 = vld [vmem:[%s830] sm:$0xff]
    %v832 = vld [vmem:[%s830 + $0x8] sm:$0xff]
    %v833 = vld [vmem:[%s830 + $0x10] sm:$0xff]
    %v834 = vld [vmem:[%s830 + $0x18] sm:$0xff]
    %v835 = vld [vmem:[%s830 + $0x20] sm:$0xff]
    %v836 = vld [vmem:[%s830 + $0x28] sm:$0xff]
    %v837 = vld [vmem:[%s830 + $0x30] sm:$0xff]
    %v838 = vld [vmem:[%s830 + $0x38] sm:$0xff]
    %v839 = vld [vmem:[%s830 + $0x40] sm:$0xff]
    %v841 = vsel %vm406, %v822, 0
    %v844 = vsel %vm406, %v827, 0
    %846 = vmatprep.subr.mxu0 0.0
    %847 = vmatpush1.msra.mxu0 %v831
    %848 = vmatprep.subr.mxu0 0.0
    %849 = vmatpush1.msra.mxu0 %v832
    %850 = vmatprep.subr.mxu0 0.0
    %851 = vmatpush1.msra.mxu0 %v833
    %852 = vmatprep.subr.mxu0 0.0
    %853 = vmatpush1.msra.mxu0 %v834
    %854 = vmatprep.subr.mxu0 0.0
    %855 = vmatpush1.msra.mxu0 %v835
    %856 = vmatprep.subr.mxu0 0.0
    %857 = vmatpush1.msra.mxu0 %v836
    %858 = vmatprep.subr.mxu0 0.0
    %859 = vmatpush1.msra.mxu0 %v837
    %860 = vmatprep.subr.mxu0 0.0
    %861 = vmatpush1.msra.mxu0 %v838
    %862 = vmatprep.subr.mxu0 0.0
    %863 = vmatpush1.msra.mxu0 %v839
    %864 = vmatprep.subr.mxu0 0.0
    %865 = vmatpush1.msra.mxu0 0.0
    %866 = vmatprep.subr.mxu0 0.0
    %867 = vmatpush1.msra.mxu0 0.0
    %868 = vmatprep.subr.mxu0 0.0
    %869 = vmatpush1.msra.mxu0 0.0
    %870 = vmatprep.subr.mxu0 0.0
    %871 = vmatpush1.msra.mxu0 0.0
    %872 = vmatprep.subr.mxu0 0.0
    %873 = vmatpush1.msra.mxu0 0.0
    %874 = vmatprep.subr.mxu0 0.0
    %875 = vmatpush1.msra.mxu0 0.0
    %876 = vmatprep.subr.mxu0 0.0
    %877 = vmatpush1.msra.mxu0 0.0
    %878 = vmatprep.subr.mxu0 0.0
    %879 = vmatpush1.msra.mxu0 0.0
    %880 = vmatprep.subr.mxu0 0.0
    %881 = vmatpush1.msra.mxu0 0.0
    %882 = vmatprep.subr.mxu0 0.0
    %883 = vmatpush1.msra.mxu0 0.0
    %884 = vmatprep.subr.mxu0 0.0
    %885 = vmatpush1.msra.mxu0 0.0
    %886 = vmatprep.subr.mxu0 0.0
    %887 = vmatpush1.msra.mxu0 0.0
    %888 = vmatprep.subr.mxu0 0.0
    %889 = vmatpush1.msra.mxu0 0.0
    %890 = vmatprep.subr.mxu0 0.0
    %891 = vmatpush1.msra.mxu0 0.0
    %892 = vmatprep.subr.mxu0 0.0
    %893 = vmatpush1.msra.mxu0 0.0
    %894 = vmatprep.subr.mxu0 0.0
    %895 = vmatpush1.msra.mxu0 0.0
    %896 = vmatprep.subr.mxu0 0.0
    %897 = vmatpush1.msra.mxu0 0.0
    %898 = vmatprep.subr.mxu0 0.0
    %899 = vmatpush1.msra.mxu0 0.0
    %900 = vmatprep.subr.mxu0 0.0
    %901 = vmatpush1.msra.mxu0 0.0
    %902 = vmatprep.subr.mxu0 0.0
    %903 = vmatpush1.msra.mxu0 0.0
    %904 = vmatprep.subr.mxu0 0.0
    %905 = vmatpush1.msra.mxu0 0.0
    %906 = vmatprep.subr.mxu0 0.0
    %907 = vmatpush1.msra.mxu0 0.0
    %908 = vmatprep.subr.mxu0 0.0
    %909 = vmatpush1.msra.mxu0 0.0
    %910 = vmatprep.mubr.f32.mxu0 0.0
    %911 = vmatmul.mubr.f32.gmra.mrb[0].mxu0 %v841
    %v912 = vpop.f32.mrb[0].mxu0
    %v913 = vadd.f32 0.0, %v912
    %v914 = vpop.f32.mrb[0].mxu0
    %915 = vmatprep.mubr.f32.mxu0 0.0
    %916 = vmatmul.mubr.f32.gmra.mrb[0].mxu0 %v844
    %v917 = vpop.f32.mrb[0].mxu0
    %v918 = vadd.f32 0.0, %v917
    %v919 = vpop.f32.mrb[0].mxu0
    %920 = vdwg.mxu0
    %v921 = vadd.f32 %v744, %v913
    %v922 = vadd.f32 %v745, %v918
    %v923 = vld [vmem:[%s5] sm:$0x1]
    %v925 = vlaneseq
    %v926 = vshrl.u32 %v925, 7
    %v927 = vsub.s32 0, %v926
    %v928 = vrot.slane %v923, %v927
    %v930 = vadd.f32 %v921, %v928
    %v931 = vadd.f32 %v922, %v928
    %s932 = sld [smem:[#allocation21]]
    %vm933 = vcmp.ge.f32.partialorder %v930, 0.0
    %vm934 = vcmp.ge.f32.partialorder %v931, 0.0
    %v935 = vstv %s932
    %v936 = vmul.f32 %v935, %v930
    %v937 = vmul.f32 %v935, %v931
    %v938 = vsel %vm933, %v930, %v936
    %v939 = vsel %vm934, %v931, %v937
    %941 = vrot.lane.b32.xlu0 %v938, 8
    %v942 = vpop.permute.xlu0 %941
    %vm944 = vcmask 588864
    %945 = vst.msk [vmem:[#allocation2 + $0x1] sm:$0xff] %vm944, %v942
    %947 = vrot.lane.b32.xlu0 %v939, 8
    %v948 = vpop.permute.xlu0 %947
    %950 = vst.msk [vmem:[#allocation2 + $0xb] sm:$0xff] %vm944, %v948
    %v951 = vld [vmem:[#allocation2] sm:$0xff]
    %v952 = vld [vmem:[#allocation2 + $0x8] sm:$0xff]
    %v953 = vld [vmem:[#allocation2 + $0x10] sm:$0xf]
    %v954 = vld [vmem:[#allocation9] sm:$0xff]
    %vm955 = vcmask 162816
    %v957 = vsel %vm955, %v954, 0
    %v960 = vsel %vm224, %v953, 0
    %962 = vmatprep.subr.mxu0 0.0
    %963 = vmatpush1.msra.mxu0 %v951
    %964 = vmatprep.subr.mxu0 0.0
    %965 = vmatpush1.msra.mxu0 %v952
    %966 = vmatprep.subr.mxu0 0.0
    %967 = vmatpush1.msra.mxu0 %v960
    %968 = vmatprep.subr.mxu0 0.0
    %969 = vmatpush1.msra.mxu0 0.0
    %970 = vmatprep.subr.mxu0 0.0
    %971 = vmatpush1.msra.mxu0 0.0
    %972 = vmatprep.subr.mxu0 0.0
    %973 = vmatpush1.msra.mxu0 0.0
    %974 = vmatprep.subr.mxu0 0.0
    %975 = vmatpush1.msra.mxu0 0.0
    %976 = vmatprep.subr.mxu0 0.0
    %977 = vmatpush1.msra.mxu0 0.0
    %978 = vmatprep.subr.mxu0 0.0
    %979 = vmatpush1.msra.mxu0 0.0
    %980 = vmatprep.subr.mxu0 0.0
    %981 = vmatpush1.msra.mxu0 0.0
    %982 = vmatprep.subr.mxu0 0.0
    %983 = vmatpush1.msra.mxu0 0.0
    %984 = vmatprep.subr.mxu0 0.0
    %985 = vmatpush1.msra.mxu0 0.0
    %986 = vmatprep.subr.mxu0 0.0
    %987 = vmatpush1.msra.mxu0 0.0
    %988 = vmatprep.subr.mxu0 0.0
    %989 = vmatpush1.msra.mxu0 0.0
    %990 = vmatprep.subr.mxu0 0.0
    %991 = vmatpush1.msra.mxu0 0.0
    %992 = vmatprep.subr.mxu0 0.0
    %993 = vmatpush1.msra.mxu0 0.0
    %994 = vmatprep.subr.mxu0 0.0
    %995 = vmatpush1.msra.mxu0 0.0
    %996 = vmatprep.subr.mxu0 0.0
    %997 = vmatpush1.msra.mxu0 0.0
    %998 = vmatprep.subr.mxu0 0.0
    %999 = vmatpush1.msra.mxu0 0.0
    %1000 = vmatprep.subr.mxu0 0.0
    %1001 = vmatpush1.msra.mxu0 0.0
    %1002 = vmatprep.subr.mxu0 0.0
    %1003 = vmatpush1.msra.mxu0 0.0
    %1004 = vmatprep.subr.mxu0 0.0
    %1005 = vmatpush1.msra.mxu0 0.0
    %1006 = vmatprep.subr.mxu0 0.0
    %1007 = vmatpush1.msra.mxu0 0.0
    %1008 = vmatprep.subr.mxu0 0.0
    %1009 = vmatpush1.msra.mxu0 0.0
    %1010 = vmatprep.subr.mxu0 0.0
    %1011 = vmatpush1.msra.mxu0 0.0
    %1012 = vmatprep.subr.mxu0 0.0
    %1013 = vmatpush1.msra.mxu0 0.0
    %1014 = vmatprep.subr.mxu0 0.0
    %1015 = vmatpush1.msra.mxu0 0.0
    %1016 = vmatprep.subr.mxu0 0.0
    %1017 = vmatpush1.msra.mxu0 0.0
    %1018 = vmatprep.subr.mxu0 0.0
    %1019 = vmatpush1.msra.mxu0 0.0
    %1020 = vmatprep.subr.mxu0 0.0
    %1021 = vmatpush1.msra.mxu0 0.0
    %1022 = vmatprep.subr.mxu0 0.0
    %1023 = vmatpush1.msra.mxu0 0.0
    %1024 = vmatprep.subr.mxu0 0.0
    %1025 = vmatpush1.msra.mxu0 0.0
    %1026 = vmatprep.mubr.f32.mxu0 0.0
    %1027 = vmatmul.mubr.f32.gmra.mrb[0].mxu0 %v957
    %v1028 = vpop.f32.mrb[0].mxu0
    %v1029 = vadd.f32 0.0, %v1028
    %v1030 = vpop.f32.mrb[0].mxu0
    %1031 = vdwg.mxu0
    %v1032 = vld [vmem:[%s7] sm:$0xff]
    %v1033 = vld [vmem:[%s7 + $0x8] sm:$0xff]
    %v1034 = vld [vmem:[%s7 + $0x10] sm:$0xff]
    %v1035 = vld [vmem:[%s7 + $0x18] sm:$0xff]
    %v1036 = vld [vmem:[%s7 + $0x20] sm:$0xff]
    %v1037 = vld [vmem:[%s7 + $0x28] sm:$0xff]
    %v1038 = vld [vmem:[%s7 + $0x30] sm:$0xff]
    %v1039 = vld [vmem:[%s7 + $0x38] sm:$0xff]
    %v1040 = vld [vmem:[%s7 + $0x40] sm:$0xff]
    %v1041 = vld [vmem:[%s7 + $0x48] sm:$0xff]
    %s1042 = scalar_lea.vmem [#allocation9], 8
    %v1043 = vld [vmem:[%s1042] sm:$0xff]
    %v1045 = vsel %vm955, %v1043, 0
    %1047 = vmatprep.subr.mxu0 0.0
    %1048 = vmatpush1.msra.mxu0 %v951
    %1049 = vmatprep.subr.mxu0 0.0
    %1050 = vmatpush1.msra.mxu0 %v952
    %1051 = vmatprep.subr.mxu0 0.0
    %1052 = vmatpush1.msra.mxu0 %v960
    %1053 = vmatprep.subr.mxu0 0.0
    %1054 = vmatpush1.msra.mxu0 0.0
    %1055 = vmatprep.subr.mxu0 0.0
    %1056 = vmatpush1.msra.mxu0 0.0
    %1057 = vmatprep.subr.mxu0 0.0
    %1058 = vmatpush1.msra.mxu0 0.0
    %1059 = vmatprep.subr.mxu0 0.0
    %1060 = vmatpush1.msra.mxu0 0.0
    %1061 = vmatprep.subr.mxu0 0.0
    %1062 = vmatpush1.msra.mxu0 0.0
    %1063 = vmatprep.subr.mxu0 0.0
    %1064 = vmatpush1.msra.mxu0 0.0
    %1065 = vmatprep.subr.mxu0 0.0
    %1066 = vmatpush1.msra.mxu0 0.0
    %1067 = vmatprep.subr.mxu0 0.0
    %1068 = vmatpush1.msra.mxu0 0.0
    %1069 = vmatprep.subr.mxu0 0.0
    %1070 = vmatpush1.msra.mxu0 0.0
    %1071 = vmatprep.subr.mxu0 0.0
    %1072 = vmatpush1.msra.mxu0 0.0
    %1073 = vmatprep.subr.mxu0 0.0
    %1074 = vmatpush1.msra.mxu0 0.0
    %1075 = vmatprep.subr.mxu0 0.0
    %1076 = vmatpush1.msra.mxu0 0.0
    %1077 = vmatprep.subr.mxu0 0.0
    %1078 = vmatpush1.msra.mxu0 0.0
    %1079 = vmatprep.subr.mxu0 0.0
    %1080 = vmatpush1.msra.mxu0 0.0
    %1081 = vmatprep.subr.mxu0 0.0
    %1082 = vmatpush1.msra.mxu0 0.0
    %1083 = vmatprep.subr.mxu0 0.0
    %1084 = vmatpush1.msra.mxu0 0.0
    %1085 = vmatprep.subr.mxu0 0.0
    %1086 = vmatpush1.msra.mxu0 0.0
    %1087 = vmatprep.subr.mxu0 0.0
    %1088 = vmatpush1.msra.mxu0 0.0
    %1089 = vmatprep.subr.mxu0 0.0
    %1090 = vmatpush1.msra.mxu0 0.0
    %1091 = vmatprep.subr.mxu0 0.0
    %1092 = vmatpush1.msra.mxu0 0.0
    %1093 = vmatprep.subr.mxu0 0.0
    %1094 = vmatpush1.msra.mxu0 0.0
    %1095 = vmatprep.subr.mxu0 0.0
    %1096 = vmatpush1.msra.mxu0 0.0
    %1097 = vmatprep.subr.mxu0 0.0
    %1098 = vmatpush1.msra.mxu0 0.0
    %1099 = vmatprep.subr.mxu0 0.0
    %1100 = vmatpush1.msra.mxu0 0.0
    %1101 = vmatprep.subr.mxu0 0.0
    %1102 = vmatpush1.msra.mxu0 0.0
    %1103 = vmatprep.subr.mxu0 0.0
    %1104 = vmatpush1.msra.mxu0 0.0
    %1105 = vmatprep.subr.mxu0 0.0
    %1106 = vmatpush1.msra.mxu0 0.0
    %1107 = vmatprep.subr.mxu0 0.0
    %1108 = vmatpush1.msra.mxu0 0.0
    %1109 = vmatprep.subr.mxu0 0.0
    %1110 = vmatpush1.msra.mxu0 0.0
    %1111 = vmatprep.mubr.f32.mxu0 0.0
    %1112 = vmatmul.mubr.f32.gmra.mrb[0].mxu0 %v1045
    %v1113 = vpop.f32.mrb[0].mxu0
    %v1114 = vadd.f32 0.0, %v1113
    %v1115 = vpop.f32.mrb[0].mxu0
    %1116 = vdwg.mxu0
    %s1117 = scalar_lea.vmem %s7, 80
    %v1118 = vld [vmem:[%s1117] sm:$0xff]
    %v1119 = vld [vmem:[%s1117 + $0x8] sm:$0xff]
    %v1120 = vld [vmem:[%s1117 + $0x10] sm:$0xff]
    %v1121 = vld [vmem:[%s1117 + $0x18] sm:$0xff]
    %v1122 = vld [vmem:[%s1117 + $0x20] sm:$0xff]
    %v1123 = vld [vmem:[%s1117 + $0x28] sm:$0xff]
    %v1124 = vld [vmem:[%s1117 + $0x30] sm:$0xff]
    %v1125 = vld [vmem:[%s1117 + $0x38] sm:$0xff]
    %v1126 = vld [vmem:[%s1117 + $0x40] sm:$0xff]
    %v1127 = vld [vmem:[%s1117 + $0x48] sm:$0xff]
    %v1129 = vsel %vm201, %v1114, 0
    %1131 = vmatprep.subr.mxu0 0.0
    %1132 = vmatpush1.msra.mxu0 %v1118
    %1133 = vmatprep.subr.mxu0 0.0
    %1134 = vmatpush1.msra.mxu0 %v1119
    %1135 = vmatprep.subr.mxu0 0.0
    %1136 = vmatpush1.msra.mxu0 %v1120
    %1137 = vmatprep.subr.mxu0 0.0
    %1138 = vmatpush1.msra.mxu0 %v1121
    %1139 = vmatprep.subr.mxu0 0.0
    %1140 = vmatpush1.msra.mxu0 %v1122
    %1141 = vmatprep.subr.mxu0 0.0
    %1142 = vmatpush1.msra.mxu0 %v1123
    %1143 = vmatprep.subr.mxu0 0.0
    %1144 = vmatpush1.msra.mxu0 %v1124
    %1145 = vmatprep.subr.mxu0 0.0
    %1146 = vmatpush1.msra.mxu0 %v1125
    %1147 = vmatprep.subr.mxu0 0.0
    %1148 = vmatpush1.msra.mxu0 %v1126
    %1149 = vmatprep.subr.mxu0 0.0
    %1150 = vmatpush1.msra.mxu0 %v1127
    %1151 = vmatprep.subr.mxu0 0.0
    %1152 = vmatpush1.msra.mxu0 0.0
    %1153 = vmatprep.subr.mxu0 0.0
    %1154 = vmatpush1.msra.mxu0 0.0
    %1155 = vmatprep.subr.mxu0 0.0
    %1156 = vmatpush1.msra.mxu0 0.0
    %1157 = vmatprep.subr.mxu0 0.0
    %1158 = vmatpush1.msra.mxu0 0.0
    %1159 = vmatprep.subr.mxu0 0.0
    %1160 = vmatpush1.msra.mxu0 0.0
    %1161 = vmatprep.subr.mxu0 0.0
    %1162 = vmatpush1.msra.mxu0 0.0
    %1163 = vmatprep.subr.mxu0 0.0
    %1164 = vmatpush1.msra.mxu0 0.0
    %1165 = vmatprep.subr.mxu0 0.0
    %1166 = vmatpush1.msra.mxu0 0.0
    %1167 = vmatprep.subr.mxu0 0.0
    %1168 = vmatpush1.msra.mxu0 0.0
    %1169 = vmatprep.subr.mxu0 0.0
    %1170 = vmatpush1.msra.mxu0 0.0
    %1171 = vmatprep.subr.mxu0 0.0
    %1172 = vmatpush1.msra.mxu0 0.0
    %1173 = vmatprep.subr.mxu0 0.0
    %1174 = vmatpush1.msra.mxu0 0.0
    %1175 = vmatprep.subr.mxu0 0.0
    %1176 = vmatpush1.msra.mxu0 0.0
    %1177 = vmatprep.subr.mxu0 0.0
    %1178 = vmatpush1.msra.mxu0 0.0
    %1179 = vmatprep.subr.mxu0 0.0
    %1180 = vmatpush1.msra.mxu0 0.0
    %1181 = vmatprep.subr.mxu0 0.0
    %1182 = vmatpush1.msra.mxu0 0.0
    %1183 = vmatprep.subr.mxu0 0.0
    %1184 = vmatpush1.msra.mxu0 0.0
    %1185 = vmatprep.subr.mxu0 0.0
    %1186 = vmatpush1.msra.mxu0 0.0
    %1187 = vmatprep.subr.mxu0 0.0
    %1188 = vmatpush1.msra.mxu0 0.0
    %1189 = vmatprep.subr.mxu0 0.0
    %1190 = vmatpush1.msra.mxu0 0.0
    %1191 = vmatprep.subr.mxu0 0.0
    %1192 = vmatpush1.msra.mxu0 0.0
    %1193 = vmatprep.subr.mxu0 0.0
    %1194 = vmatpush1.msra.mxu0 0.0
    %1195 = vmatprep.mubr.f32.mxu0 0.0
    %1196 = vmatmul.mubr.f32.gmra.mrb[0].mxu0 %v1129
    %v1197 = vpop.f32.mrb[0].mxu0
    %v1198 = vadd.f32 0.0, %v1197
    %v1199 = vpop.f32.mrb[0].mxu0
    %1200 = vdwg.mxu0
    %v1202 = vsel %vm201, %v1029, 0
    %1204 = vmatprep.subr.mxu0 0.0
    %1205 = vmatpush1.msra.mxu0 %v1032
    %1206 = vmatprep.subr.mxu0 0.0
    %1207 = vmatpush1.msra.mxu0 %v1033
    %1208 = vmatprep.subr.mxu0 0.0
    %1209 = vmatpush1.msra.mxu0 %v1034
    %1210 = vmatprep.subr.mxu0 0.0
    %1211 = vmatpush1.msra.mxu0 %v1035
    %1212 = vmatprep.subr.mxu0 0.0
    %1213 = vmatpush1.msra.mxu0 %v1036
    %1214 = vmatprep.subr.mxu0 0.0
    %1215 = vmatpush1.msra.mxu0 %v1037
    %1216 = vmatprep.subr.mxu0 0.0
    %1217 = vmatpush1.msra.mxu0 %v1038
    %1218 = vmatprep.subr.mxu0 0.0
    %1219 = vmatpush1.msra.mxu0 %v1039
    %1220 = vmatprep.subr.mxu0 0.0
    %1221 = vmatpush1.msra.mxu0 %v1040
    %1222 = vmatprep.subr.mxu0 0.0
    %1223 = vmatpush1.msra.mxu0 %v1041
    %1224 = vmatprep.subr.mxu0 0.0
    %1225 = vmatpush1.msra.mxu0 0.0
    %1226 = vmatprep.subr.mxu0 0.0
    %1227 = vmatpush1.msra.mxu0 0.0
    %1228 = vmatprep.subr.mxu0 0.0
    %1229 = vmatpush1.msra.mxu0 0.0
    %1230 = vmatprep.subr.mxu0 0.0
    %1231 = vmatpush1.msra.mxu0 0.0
    %1232 = vmatprep.subr.mxu0 0.0
    %1233 = vmatpush1.msra.mxu0 0.0
    %1234 = vmatprep.subr.mxu0 0.0
    %1235 = vmatpush1.msra.mxu0 0.0
    %1236 = vmatprep.subr.mxu0 0.0
    %1237 = vmatpush1.msra.mxu0 0.0
    %1238 = vmatprep.subr.mxu0 0.0
    %1239 = vmatpush1.msra.mxu0 0.0
    %1240 = vmatprep.subr.mxu0 0.0
    %1241 = vmatpush1.msra.mxu0 0.0
    %1242 = vmatprep.subr.mxu0 0.0
    %1243 = vmatpush1.msra.mxu0 0.0
    %1244 = vmatprep.subr.mxu0 0.0
    %1245 = vmatpush1.msra.mxu0 0.0
    %1246 = vmatprep.subr.mxu0 0.0
    %1247 = vmatpush1.msra.mxu0 0.0
    %1248 = vmatprep.subr.mxu0 0.0
    %1249 = vmatpush1.msra.mxu0 0.0
    %1250 = vmatprep.subr.mxu0 0.0
    %1251 = vmatpush1.msra.mxu0 0.0
    %1252 = vmatprep.subr.mxu0 0.0
    %1253 = vmatpush1.msra.mxu0 0.0
    %1254 = vmatprep.subr.mxu0 0.0
    %1255 = vmatpush1.msra.mxu0 0.0
    %1256 = vmatprep.subr.mxu0 0.0
    %1257 = vmatpush1.msra.mxu0 0.0
    %1258 = vmatprep.subr.mxu0 0.0
    %1259 = vmatpush1.msra.mxu0 0.0
    %1260 = vmatprep.subr.mxu0 0.0
    %1261 = vmatpush1.msra.mxu0 0.0
    %1262 = vmatprep.subr.mxu0 0.0
    %1263 = vmatpush1.msra.mxu0 0.0
    %1264 = vmatprep.subr.mxu0 0.0
    %1265 = vmatpush1.msra.mxu0 0.0
    %1266 = vmatprep.subr.mxu0 0.0
    %1267 = vmatpush1.msra.mxu0 0.0
    %1268 = vmatprep.mubr.f32.mxu0 0.0
    %1269 = vmatmul.mubr.f32.gmra.mrb[0].mxu0 %v1202
    %v1270 = vpop.f32.mrb[0].mxu0
    %v1271 = vadd.f32 %v1198, %v1270
    %v1272 = vpop.f32.mrb[0].mxu0
    %1273 = vdwg.mxu0
    %s1274 = scalar_lea.vmem [#allocation9], 16
    %v1275 = vld [vmem:[%s1274] sm:$0xff]
    %v1277 = vsel %vm955, %v1275, 0
    %1279 = vmatprep.subr.mxu0 0.0
    %1280 = vmatpush1.msra.mxu0 %v951
    %1281 = vmatprep.subr.mxu0 0.0
    %1282 = vmatpush1.msra.mxu0 %v952
    %1283 = vmatprep.subr.mxu0 0.0
    %1284 = vmatpush1.msra.mxu0 %v960
    %1285 = vmatprep.subr.mxu0 0.0
    %1286 = vmatpush1.msra.mxu0 0.0
    %1287 = vmatprep.subr.mxu0 0.0
    %1288 = vmatpush1.msra.mxu0 0.0
    %1289 = vmatprep.subr.mxu0 0.0
    %1290 = vmatpush1.msra.mxu0 0.0
    %1291 = vmatprep.subr.mxu0 0.0
    %1292 = vmatpush1.msra.mxu0 0.0
    %1293 = vmatprep.subr.mxu0 0.0
    %1294 = vmatpush1.msra.mxu0 0.0
    %1295 = vmatprep.subr.mxu0 0.0
    %1296 = vmatpush1.msra.mxu0 0.0
    %1297 = vmatprep.subr.mxu0 0.0
    %1298 = vmatpush1.msra.mxu0 0.0
    %1299 = vmatprep.subr.mxu0 0.0
    %1300 = vmatpush1.msra.mxu0 0.0
    %1301 = vmatprep.subr.mxu0 0.0
    %1302 = vmatpush1.msra.mxu0 0.0
    %1303 = vmatprep.subr.mxu0 0.0
    %1304 = vmatpush1.msra.mxu0 0.0
    %1305 = vmatprep.subr.mxu0 0.0
    %1306 = vmatpush1.msra.mxu0 0.0
    %1307 = vmatprep.subr.mxu0 0.0
    %1308 = vmatpush1.msra.mxu0 0.0
    %1309 = vmatprep.subr.mxu0 0.0
    %1310 = vmatpush1.msra.mxu0 0.0
    %1311 = vmatprep.subr.mxu0 0.0
    %1312 = vmatpush1.msra.mxu0 0.0
    %1313 = vmatprep.subr.mxu0 0.0
    %1314 = vmatpush1.msra.mxu0 0.0
    %1315 = vmatprep.subr.mxu0 0.0
    %1316 = vmatpush1.msra.mxu0 0.0
    %1317 = vmatprep.subr.mxu0 0.0
    %1318 = vmatpush1.msra.mxu0 0.0
    %1319 = vmatprep.subr.mxu0 0.0
    %1320 = vmatpush1.msra.mxu0 0.0
    %1321 = vmatprep.subr.mxu0 0.0
    %1322 = vmatpush1.msra.mxu0 0.0
    %1323 = vmatprep.subr.mxu0 0.0
    %1324 = vmatpush1.msra.mxu0 0.0
    %1325 = vmatprep.subr.mxu0 0.0
    %1326 = vmatpush1.msra.mxu0 0.0
    %1327 = vmatprep.subr.mxu0 0.0
    %1328 = vmatpush1.msra.mxu0 0.0
    %1329 = vmatprep.subr.mxu0 0.0
    %1330 = vmatpush1.msra.mxu0 0.0
    %1331 = vmatprep.subr.mxu0 0.0
    %1332 = vmatpush1.msra.mxu0 0.0
    %1333 = vmatprep.subr.mxu0 0.0
    %1334 = vmatpush1.msra.mxu0 0.0
    %1335 = vmatprep.subr.mxu0 0.0
    %1336 = vmatpush1.msra.mxu0 0.0
    %1337 = vmatprep.subr.mxu0 0.0
    %1338 = vmatpush1.msra.mxu0 0.0
    %1339 = vmatprep.subr.mxu0 0.0
    %1340 = vmatpush1.msra.mxu0 0.0
    %1341 = vmatprep.subr.mxu0 0.0
    %1342 = vmatpush1.msra.mxu0 0.0
    %1343 = vmatprep.mubr.f32.mxu0 0.0
    %1344 = vmatmul.mubr.f32.gmra.mrb[0].mxu0 %v1277
    %v1345 = vpop.f32.mrb[0].mxu0
    %v1346 = vadd.f32 0.0, %v1345
    %v1347 = vpop.f32.mrb[0].mxu0
    %1348 = vdwg.mxu0
    %s1349 = scalar_lea.vmem %s7, 160
    %v1350 = vld [vmem:[%s1349] sm:$0xff]
    %v1351 = vld [vmem:[%s1349 + $0x8] sm:$0xff]
    %v1352 = vld [vmem:[%s1349 + $0x10] sm:$0xff]
    %v1353 = vld [vmem:[%s1349 + $0x18] sm:$0xff]
    %v1354 = vld [vmem:[%s1349 + $0x20] sm:$0xff]
    %v1355 = vld [vmem:[%s1349 + $0x28] sm:$0xff]
    %v1356 = vld [vmem:[%s1349 + $0x30] sm:$0xff]
    %v1357 = vld [vmem:[%s1349 + $0x38] sm:$0xff]
    %v1358 = vld [vmem:[%s1349 + $0x40] sm:$0xff]
    %v1359 = vld [vmem:[%s1349 + $0x48] sm:$0xff]
    %v1361 = vsel %vm201, %v1346, 0
    %1363 = vmatprep.subr.mxu0 0.0
    %1364 = vmatpush1.msra.mxu0 %v1350
    %1365 = vmatprep.subr.mxu0 0.0
    %1366 = vmatpush1.msra.mxu0 %v1351
    %1367 = vmatprep.subr.mxu0 0.0
    %1368 = vmatpush1.msra.mxu0 %v1352
    %1369 = vmatprep.subr.mxu0 0.0
    %1370 = vmatpush1.msra.mxu0 %v1353
    %1371 = vmatprep.subr.mxu0 0.0
    %1372 = vmatpush1.msra.mxu0 %v1354
    %1373 = vmatprep.subr.mxu0 0.0
    %1374 = vmatpush1.msra.mxu0 %v1355
    %1375 = vmatprep.subr.mxu0 0.0
    %1376 = vmatpush1.msra.mxu0 %v1356
    %1377 = vmatprep.subr.mxu0 0.0
    %1378 = vmatpush1.msra.mxu0 %v1357
    %1379 = vmatprep.subr.mxu0 0.0
    %1380 = vmatpush1.msra.mxu0 %v1358
    %1381 = vmatprep.subr.mxu0 0.0
    %1382 = vmatpush1.msra.mxu0 %v1359
    %1383 = vmatprep.subr.mxu0 0.0
    %1384 = vmatpush1.msra.mxu0 0.0
    %1385 = vmatprep.subr.mxu0 0.0
    %1386 = vmatpush1.msra.mxu0 0.0
    %1387 = vmatprep.subr.mxu0 0.0
    %1388 = vmatpush1.msra.mxu0 0.0
    %1389 = vmatprep.subr.mxu0 0.0
    %1390 = vmatpush1.msra.mxu0 0.0
    %1391 = vmatprep.subr.mxu0 0.0
    %1392 = vmatpush1.msra.mxu0 0.0
    %1393 = vmatprep.subr.mxu0 0.0
    %1394 = vmatpush1.msra.mxu0 0.0
    %1395 = vmatprep.subr.mxu0 0.0
    %1396 = vmatpush1.msra.mxu0 0.0
    %1397 = vmatprep.subr.mxu0 0.0
    %1398 = vmatpush1.msra.mxu0 0.0
    %1399 = vmatprep.subr.mxu0 0.0
    %1400 = vmatpush1.msra.mxu0 0.0
    %1401 = vmatprep.subr.mxu0 0.0
    %1402 = vmatpush1.msra.mxu0 0.0
    %1403 = vmatprep.subr.mxu0 0.0
    %1404 = vmatpush1.msra.mxu0 0.0
    %1405 = vmatprep.subr.mxu0 0.0
    %1406 = vmatpush1.msra.mxu0 0.0
    %1407 = vmatprep.subr.mxu0 0.0
    %1408 = vmatpush1.msra.mxu0 0.0
    %1409 = vmatprep.subr.mxu0 0.0
    %1410 = vmatpush1.msra.mxu0 0.0
    %1411 = vmatprep.subr.mxu0 0.0
    %1412 = vmatpush1.msra.mxu0 0.0
    %1413 = vmatprep.subr.mxu0 0.0
    %1414 = vmatpush1.msra.mxu0 0.0
    %1415 = vmatprep.subr.mxu0 0.0
    %1416 = vmatpush1.msra.mxu0 0.0
    %1417 = vmatprep.subr.mxu0 0.0
    %1418 = vmatpush1.msra.mxu0 0.0
    %1419 = vmatprep.subr.mxu0 0.0
    %1420 = vmatpush1.msra.mxu0 0.0
    %1421 = vmatprep.subr.mxu0 0.0
    %1422 = vmatpush1.msra.mxu0 0.0
    %1423 = vmatprep.subr.mxu0 0.0
    %1424 = vmatpush1.msra.mxu0 0.0
    %1425 = vmatprep.subr.mxu0 0.0
    %1426 = vmatpush1.msra.mxu0 0.0
    %1427 = vmatprep.mubr.f32.mxu0 0.0
    %1428 = vmatmul.mubr.f32.gmra.mrb[0].mxu0 %v1361
    %v1429 = vpop.f32.mrb[0].mxu0
    %v1430 = vadd.f32 0.0, %v1429
    %v1431 = vpop.f32.mrb[0].mxu0
    %1432 = vdwg.mxu0
    %v1433 = vadd.f32 %v1271, %v1430
    %s1434 = scalar_lea.vmem [#allocation9], 24
    %v1435 = vld [vmem:[%s1434] sm:$0xff]
    %v1437 = vsel %vm955, %v1435, 0
    %1439 = vmatprep.subr.mxu0 0.0
    %1440 = vmatpush1.msra.mxu0 %v951
    %1441 = vmatprep.subr.mxu0 0.0
    %1442 = vmatpush1.msra.mxu0 %v952
    %1443 = vmatprep.subr.mxu0 0.0
    %1444 = vmatpush1.msra.mxu0 %v960
    %1445 = vmatprep.subr.mxu0 0.0
    %1446 = vmatpush1.msra.mxu0 0.0
    %1447 = vmatprep.subr.mxu0 0.0
    %1448 = vmatpush1.msra.mxu0 0.0
    %1449 = vmatprep.subr.mxu0 0.0
    %1450 = vmatpush1.msra.mxu0 0.0
    %1451 = vmatprep.subr.mxu0 0.0
    %1452 = vmatpush1.msra.mxu0 0.0
    %1453 = vmatprep.subr.mxu0 0.0
    %1454 = vmatpush1.msra.mxu0 0.0
    %1455 = vmatprep.subr.mxu0 0.0
    %1456 = vmatpush1.msra.mxu0 0.0
    %1457 = vmatprep.subr.mxu0 0.0
    %1458 = vmatpush1.msra.mxu0 0.0
    %1459 = vmatprep.subr.mxu0 0.0
    %1460 = vmatpush1.msra.mxu0 0.0
    %1461 = vmatprep.subr.mxu0 0.0
    %1462 = vmatpush1.msra.mxu0 0.0
    %1463 = vmatprep.subr.mxu0 0.0
    %1464 = vmatpush1.msra.mxu0 0.0
    %1465 = vmatprep.subr.mxu0 0.0
    %1466 = vmatpush1.msra.mxu0 0.0
    %1467 = vmatprep.subr.mxu0 0.0
    %1468 = vmatpush1.msra.mxu0 0.0
    %1469 = vmatprep.subr.mxu0 0.0
    %1470 = vmatpush1.msra.mxu0 0.0
    %1471 = vmatprep.subr.mxu0 0.0
    %1472 = vmatpush1.msra.mxu0 0.0
    %1473 = vmatprep.subr.mxu0 0.0
    %1474 = vmatpush1.msra.mxu0 0.0
    %1475 = vmatprep.subr.mxu0 0.0
    %1476 = vmatpush1.msra.mxu0 0.0
    %1477 = vmatprep.subr.mxu0 0.0
    %1478 = vmatpush1.msra.mxu0 0.0
    %1479 = vmatprep.subr.mxu0 0.0
    %1480 = vmatpush1.msra.mxu0 0.0
    %1481 = vmatprep.subr.mxu0 0.0
    %1482 = vmatpush1.msra.mxu0 0.0
    %1483 = vmatprep.subr.mxu0 0.0
    %1484 = vmatpush1.msra.mxu0 0.0
    %1485 = vmatprep.subr.mxu0 0.0
    %1486 = vmatpush1.msra.mxu0 0.0
    %1487 = vmatprep.subr.mxu0 0.0
    %1488 = vmatpush1.msra.mxu0 0.0
    %1489 = vmatprep.subr.mxu0 0.0
    %1490 = vmatpush1.msra.mxu0 0.0
    %1491 = vmatprep.subr.mxu0 0.0
    %1492 = vmatpush1.msra.mxu0 0.0
    %1493 = vmatprep.subr.mxu0 0.0
    %1494 = vmatpush1.msra.mxu0 0.0
    %1495 = vmatprep.subr.mxu0 0.0
    %1496 = vmatpush1.msra.mxu0 0.0
    %1497 = vmatprep.subr.mxu0 0.0
    %1498 = vmatpush1.msra.mxu0 0.0
    %1499 = vmatprep.subr.mxu0 0.0
    %1500 = vmatpush1.msra.mxu0 0.0
    %1501 = vmatprep.subr.mxu0 0.0
    %1502 = vmatpush1.msra.mxu0 0.0
    %1503 = vmatprep.mubr.f32.mxu0 0.0
    %1504 = vmatmul.mubr.f32.gmra.mrb[0].mxu0 %v1437
    %v1505 = vpop.f32.mrb[0].mxu0
    %v1506 = vadd.f32 0.0, %v1505
    %v1507 = vpop.f32.mrb[0].mxu0
    %1508 = vdwg.mxu0
    %s1509 = scalar_lea.vmem %s7, 240
    %v1510 = vld [vmem:[%s1509] sm:$0xff]
    %v1511 = vld [vmem:[%s1509 + $0x8] sm:$0xff]
    %v1512 = vld [vmem:[%s1509 + $0x10] sm:$0xff]
    %v1513 = vld [vmem:[%s1509 + $0x18] sm:$0xff]
    %v1514 = vld [vmem:[%s1509 + $0x20] sm:$0xff]
    %v1515 = vld [vmem:[%s1509 + $0x28] sm:$0xff]
    %v1516 = vld [vmem:[%s1509 + $0x30] sm:$0xff]
    %v1517 = vld [vmem:[%s1509 + $0x38] sm:$0xff]
    %v1518 = vld [vmem:[%s1509 + $0x40] sm:$0xff]
    %v1519 = vld [vmem:[%s1509 + $0x48] sm:$0xff]
    %v1521 = vsel %vm201, %v1506, 0
    %1523 = vmatprep.subr.mxu0 0.0
    %1524 = vmatpush1.msra.mxu0 %v1510
    %1525 = vmatprep.subr.mxu0 0.0
    %1526 = vmatpush1.msra.mxu0 %v1511
    %1527 = vmatprep.subr.mxu0 0.0
    %1528 = vmatpush1.msra.mxu0 %v1512
    %1529 = vmatprep.subr.mxu0 0.0
    %1530 = vmatpush1.msra.mxu0 %v1513
    %1531 = vmatprep.subr.mxu0 0.0
    %1532 = vmatpush1.msra.mxu0 %v1514
    %1533 = vmatprep.subr.mxu0 0.0
    %1534 = vmatpush1.msra.mxu0 %v1515
    %1535 = vmatprep.subr.mxu0 0.0
    %1536 = vmatpush1.msra.mxu0 %v1516
    %1537 = vmatprep.subr.mxu0 0.0
    %1538 = vmatpush1.msra.mxu0 %v1517
    %1539 = vmatprep.subr.mxu0 0.0
    %1540 = vmatpush1.msra.mxu0 %v1518
    %1541 = vmatprep.subr.mxu0 0.0
    %1542 = vmatpush1.msra.mxu0 %v1519
    %1543 = vmatprep.subr.mxu0 0.0
    %1544 = vmatpush1.msra.mxu0 0.0
    %1545 = vmatprep.subr.mxu0 0.0
    %1546 = vmatpush1.msra.mxu0 0.0
    %1547 = vmatprep.subr.mxu0 0.0
    %1548 = vmatpush1.msra.mxu0 0.0
    %1549 = vmatprep.subr.mxu0 0.0
    %1550 = vmatpush1.msra.mxu0 0.0
    %1551 = vmatprep.subr.mxu0 0.0
    %1552 = vmatpush1.msra.mxu0 0.0
    %1553 = vmatprep.subr.mxu0 0.0
    %1554 = vmatpush1.msra.mxu0 0.0
    %1555 = vmatprep.subr.mxu0 0.0
    %1556 = vmatpush1.msra.mxu0 0.0
    %1557 = vmatprep.subr.mxu0 0.0
    %1558 = vmatpush1.msra.mxu0 0.0
    %1559 = vmatprep.subr.mxu0 0.0
    %1560 = vmatpush1.msra.mxu0 0.0
    %1561 = vmatprep.subr.mxu0 0.0
    %1562 = vmatpush1.msra.mxu0 0.0
    %1563 = vmatprep.subr.mxu0 0.0
    %1564 = vmatpush1.msra.mxu0 0.0
    %1565 = vmatprep.subr.mxu0 0.0
    %1566 = vmatpush1.msra.mxu0 0.0
    %1567 = vmatprep.subr.mxu0 0.0
    %1568 = vmatpush1.msra.mxu0 0.0
    %1569 = vmatprep.subr.mxu0 0.0
    %1570 = vmatpush1.msra.mxu0 0.0
    %1571 = vmatprep.subr.mxu0 0.0
    %1572 = vmatpush1.msra.mxu0 0.0
    %1573 = vmatprep.subr.mxu0 0.0
    %1574 = vmatpush1.msra.mxu0 0.0
    %1575 = vmatprep.subr.mxu0 0.0
    %1576 = vmatpush1.msra.mxu0 0.0
    %1577 = vmatprep.subr.mxu0 0.0
    %1578 = vmatpush1.msra.mxu0 0.0
    %1579 = vmatprep.subr.mxu0 0.0
    %1580 = vmatpush1.msra.mxu0 0.0
    %1581 = vmatprep.subr.mxu0 0.0
    %1582 = vmatpush1.msra.mxu0 0.0
    %1583 = vmatprep.subr.mxu0 0.0
    %1584 = vmatpush1.msra.mxu0 0.0
    %1585 = vmatprep.subr.mxu0 0.0
    %1586 = vmatpush1.msra.mxu0 0.0
    %1587 = vmatprep.mubr.f32.mxu0 0.0
    %1588 = vmatmul.mubr.f32.gmra.mrb[0].mxu0 %v1521
    %v1589 = vpop.f32.mrb[0].mxu0
    %v1590 = vadd.f32 0.0, %v1589
    %v1591 = vpop.f32.mrb[0].mxu0
    %1592 = vdwg.mxu0
    %v1593 = vadd.f32 %v1433, %v1590
    %v1594 = vld [vmem:[%s8] sm:$0x1]
    %v1596 = vlaneseq
    %v1597 = vshrl.u32 %v1596, 7
    %v1598 = vsub.s32 0, %v1597
    %v1599 = vrot.slane %v1594, %v1598
    %v1601 = vadd.f32 %v1593, %v1599
    %s1602 = sld [smem:[#allocation21 + $0x1]]
    %vm1603 = vcmp.ge.f32.partialorder %v1601, 0.0
    %v1604 = vstv %s1602
    %v1605 = vmul.f32 %v1604, %v1601
    %v1606 = vsel %vm1603, %v1601, %v1605
    %1608 = vrot.lane.b32.xlu0 %v1606, 16
    %v1609 = vpop.permute.xlu0 %1608
    %vm1611 = vcmask 650368
    %1612 = vst.msk [vmem:[#allocation3 + $0x1] sm:$0xf] %vm1611, %v1609
    %vm1613 = vcmask 654468
    %1614 = vst.msk [vmem:[#allocation3 + $0x3] sm:$0xf0] %vm1613, %v1609
    %v1615 = vld [vmem:[#allocation3] sm:$0xff]
    %v1616 = vld [vmem:[#allocation3 + $0x8] sm:$0xf]
    %v1617 = vld [vmem:[#allocation10] sm:$0xf]
    %vm1618 = vcmask 97280
    %v1620 = vsel %vm1618, %v1617, 0
    %v1623 = vsel %vm224, %v1616, 0
    %1625 = vmatprep.subr.mxu0 0.0
    %1626 = vmatpush1.msra.mxu0 %v1615
    %1627 = vmatprep.subr.mxu0 0.0
    %1628 = vmatpush1.msra.mxu0 %v1623
    %1629 = vmatprep.subr.mxu0 0.0
    %1630 = vmatpush1.msra.mxu0 0.0
    %1631 = vmatprep.subr.mxu0 0.0
    %1632 = vmatpush1.msra.mxu0 0.0
    %1633 = vmatprep.subr.mxu0 0.0
    %1634 = vmatpush1.msra.mxu0 0.0
    %1635 = vmatprep.subr.mxu0 0.0
    %1636 = vmatpush1.msra.mxu0 0.0
    %1637 = vmatprep.subr.mxu0 0.0
    %1638 = vmatpush1.msra.mxu0 0.0
    %1639 = vmatprep.subr.mxu0 0.0
    %1640 = vmatpush1.msra.mxu0 0.0
    %1641 = vmatprep.subr.mxu0 0.0
    %1642 = vmatpush1.msra.mxu0 0.0
    %1643 = vmatprep.subr.mxu0 0.0
    %1644 = vmatpush1.msra.mxu0 0.0
    %1645 = vmatprep.subr.mxu0 0.0
    %1646 = vmatpush1.msra.mxu0 0.0
    %1647 = vmatprep.subr.mxu0 0.0
    %1648 = vmatpush1.msra.mxu0 0.0
    %1649 = vmatprep.subr.mxu0 0.0
    %1650 = vmatpush1.msra.mxu0 0.0
    %1651 = vmatprep.subr.mxu0 0.0
    %1652 = vmatpush1.msra.mxu0 0.0
    %1653 = vmatprep.subr.mxu0 0.0
    %1654 = vmatpush1.msra.mxu0 0.0
    %1655 = vmatprep.subr.mxu0 0.0
    %1656 = vmatpush1.msra.mxu0 0.0
    %1657 = vmatprep.subr.mxu0 0.0
    %1658 = vmatpush1.msra.mxu0 0.0
    %1659 = vmatprep.subr.mxu0 0.0
    %1660 = vmatpush1.msra.mxu0 0.0
    %1661 = vmatprep.subr.mxu0 0.0
    %1662 = vmatpush1.msra.mxu0 0.0
    %1663 = vmatprep.subr.mxu0 0.0
    %1664 = vmatpush1.msra.mxu0 0.0
    %1665 = vmatprep.subr.mxu0 0.0
    %1666 = vmatpush1.msra.mxu0 0.0
    %1667 = vmatprep.subr.mxu0 0.0
    %1668 = vmatpush1.msra.mxu0 0.0
    %1669 = vmatprep.subr.mxu0 0.0
    %1670 = vmatpush1.msra.mxu0 0.0
    %1671 = vmatprep.subr.mxu0 0.0
    %1672 = vmatpush1.msra.mxu0 0.0
    %1673 = vmatprep.subr.mxu0 0.0
    %1674 = vmatpush1.msra.mxu0 0.0
    %1675 = vmatprep.subr.mxu0 0.0
    %1676 = vmatpush1.msra.mxu0 0.0
    %1677 = vmatprep.subr.mxu0 0.0
    %1678 = vmatpush1.msra.mxu0 0.0
    %1679 = vmatprep.subr.mxu0 0.0
    %1680 = vmatpush1.msra.mxu0 0.0
    %1681 = vmatprep.subr.mxu0 0.0
    %1682 = vmatpush1.msra.mxu0 0.0
    %1683 = vmatprep.subr.mxu0 0.0
    %1684 = vmatpush1.msra.mxu0 0.0
    %1685 = vmatprep.subr.mxu0 0.0
    %1686 = vmatpush1.msra.mxu0 0.0
    %1687 = vmatprep.subr.mxu0 0.0
    %1688 = vmatpush1.msra.mxu0 0.0
    %1689 = vmatprep.mubr.f32.mxu0 0.0
    %1690 = vmatmul.mubr.f32.gmra.mrb[0].mxu0 %v1620
    %v1691 = vpop.f32.mrb[0].mxu0
    %v1692 = vadd.f32 0.0, %v1691
    %v1693 = vpop.f32.mrb[0].mxu0
    %1694 = vdwg.mxu0
    %v1695 = vld [vmem:[%s10] sm:$0xff]
    %v1696 = vld [vmem:[%s10 + $0x8] sm:$0xff]
    %v1697 = vld [vmem:[%s10 + $0x10] sm:$0xff]
    %v1698 = vld [vmem:[%s10 + $0x18] sm:$0xff]
    %v1699 = vld [vmem:[%s10 + $0x20] sm:$0xff]
    %v1700 = vld [vmem:[%s10 + $0x28] sm:$0xff]
    %v1701 = vld [vmem:[%s10 + $0x30] sm:$0xff]
    %v1702 = vld [vmem:[%s10 + $0x38] sm:$0xff]
    %v1703 = vld [vmem:[%s10 + $0x40] sm:$0xff]
    %v1704 = vld [vmem:[%s10 + $0x48] sm:$0xff]
    %v1705 = vld [vmem:[%s10 + $0x50] sm:$0xff]
    %v1706 = vld [vmem:[%s10 + $0x58] sm:$0xff]
    %s1707 = scalar_lea.vmem [#allocation10], 4
    %v1708 = vld [vmem:[%s1707] sm:$0xf]
    %v1710 = vsel %vm1618, %v1708, 0
    %1712 = vmatprep.subr.mxu0 0.0
    %1713 = vmatpush1.msra.mxu0 %v1615
    %1714 = vmatprep.subr.mxu0 0.0
    %1715 = vmatpush1.msra.mxu0 %v1623
    %1716 = vmatprep.subr.mxu0 0.0
    %1717 = vmatpush1.msra.mxu0 0.0
    %1718 = vmatprep.subr.mxu0 0.0
    %1719 = vmatpush1.msra.mxu0 0.0
    %1720 = vmatprep.subr.mxu0 0.0
    %1721 = vmatpush1.msra.mxu0 0.0
    %1722 = vmatprep.subr.mxu0 0.0
    %1723 = vmatpush1.msra.mxu0 0.0
    %1724 = vmatprep.subr.mxu0 0.0
    %1725 = vmatpush1.msra.mxu0 0.0
    %1726 = vmatprep.subr.mxu0 0.0
    %1727 = vmatpush1.msra.mxu0 0.0
    %1728 = vmatprep.subr.mxu0 0.0
    %1729 = vmatpush1.msra.mxu0 0.0
    %1730 = vmatprep.subr.mxu0 0.0
    %1731 = vmatpush1.msra.mxu0 0.0
    %1732 = vmatprep.subr.mxu0 0.0
    %1733 = vmatpush1.msra.mxu0 0.0
    %1734 = vmatprep.subr.mxu0 0.0
    %1735 = vmatpush1.msra.mxu0 0.0
    %1736 = vmatprep.subr.mxu0 0.0
    %1737 = vmatpush1.msra.mxu0 0.0
    %1738 = vmatprep.subr.mxu0 0.0
    %1739 = vmatpush1.msra.mxu0 0.0
    %1740 = vmatprep.subr.mxu0 0.0
    %1741 = vmatpush1.msra.mxu0 0.0
    %1742 = vmatprep.subr.mxu0 0.0
    %1743 = vmatpush1.msra.mxu0 0.0
    %1744 = vmatprep.subr.mxu0 0.0
    %1745 = vmatpush1.msra.mxu0 0.0
    %1746 = vmatprep.subr.mxu0 0.0
    %1747 = vmatpush1.msra.mxu0 0.0
    %1748 = vmatprep.subr.mxu0 0.0
    %1749 = vmatpush1.msra.mxu0 0.0
    %1750 = vmatprep.subr.mxu0 0.0
    %1751 = vmatpush1.msra.mxu0 0.0
    %1752 = vmatprep.subr.mxu0 0.0
    %1753 = vmatpush1.msra.mxu0 0.0
    %1754 = vmatprep.subr.mxu0 0.0
    %1755 = vmatpush1.msra.mxu0 0.0
    %1756 = vmatprep.subr.mxu0 0.0
    %1757 = vmatpush1.msra.mxu0 0.0
    %1758 = vmatprep.subr.mxu0 0.0
    %1759 = vmatpush1.msra.mxu0 0.0
    %1760 = vmatprep.subr.mxu0 0.0
    %1761 = vmatpush1.msra.mxu0 0.0
    %1762 = vmatprep.subr.mxu0 0.0
    %1763 = vmatpush1.msra.mxu0 0.0
    %1764 = vmatprep.subr.mxu0 0.0
    %1765 = vmatpush1.msra.mxu0 0.0
    %1766 = vmatprep.subr.mxu0 0.0
    %1767 = vmatpush1.msra.mxu0 0.0
    %1768 = vmatprep.subr.mxu0 0.0
    %1769 = vmatpush1.msra.mxu0 0.0
    %1770 = vmatprep.subr.mxu0 0.0
    %1771 = vmatpush1.msra.mxu0 0.0
    %1772 = vmatprep.subr.mxu0 0.0
    %1773 = vmatpush1.msra.mxu0 0.0
    %1774 = vmatprep.subr.mxu0 0.0
    %1775 = vmatpush1.msra.mxu0 0.0
    %1776 = vmatprep.mubr.f32.mxu0 0.0
    %1777 = vmatmul.mubr.f32.gmra.mrb[0].mxu0 %v1710
    %v1778 = vpop.f32.mrb[0].mxu0
    %v1779 = vadd.f32 0.0, %v1778
    %v1780 = vpop.f32.mrb[0].mxu0
    %1781 = vdwg.mxu0
    %s1782 = scalar_lea.vmem %s10, 96
    %v1783 = vld [vmem:[%s1782] sm:$0xff]
    %v1784 = vld [vmem:[%s1782 + $0x8] sm:$0xff]
    %v1785 = vld [vmem:[%s1782 + $0x10] sm:$0xff]
    %v1786 = vld [vmem:[%s1782 + $0x18] sm:$0xff]
    %v1787 = vld [vmem:[%s1782 + $0x20] sm:$0xff]
    %v1788 = vld [vmem:[%s1782 + $0x28] sm:$0xff]
    %v1789 = vld [vmem:[%s1782 + $0x30] sm:$0xff]
    %v1790 = vld [vmem:[%s1782 + $0x38] sm:$0xff]
    %v1791 = vld [vmem:[%s1782 + $0x40] sm:$0xff]
    %v1792 = vld [vmem:[%s1782 + $0x48] sm:$0xff]
    %v1793 = vld [vmem:[%s1782 + $0x50] sm:$0xff]
    %v1794 = vld [vmem:[%s1782 + $0x58] sm:$0xff]
    %v1796 = vsel %vm206, %v1779, 0
    %1798 = vmatprep.subr.mxu0 0.0
    %1799 = vmatpush1.msra.mxu0 %v1783
    %1800 = vmatprep.subr.mxu0 0.0
    %1801 = vmatpush1.msra.mxu0 %v1784
    %1802 = vmatprep.subr.mxu0 0.0
    %1803 = vmatpush1.msra.mxu0 %v1785
    %1804 = vmatprep.subr.mxu0 0.0
    %1805 = vmatpush1.msra.mxu0 %v1786
    %1806 = vmatprep.subr.mxu0 0.0
    %1807 = vmatpush1.msra.mxu0 %v1787
    %1808 = vmatprep.subr.mxu0 0.0
    %1809 = vmatpush1.msra.mxu0 %v1788
    %1810 = vmatprep.subr.mxu0 0.0
    %1811 = vmatpush1.msra.mxu0 %v1789
    %1812 = vmatprep.subr.mxu0 0.0
    %1813 = vmatpush1.msra.mxu0 %v1790
    %1814 = vmatprep.subr.mxu0 0.0
    %1815 = vmatpush1.msra.mxu0 %v1791
    %1816 = vmatprep.subr.mxu0 0.0
    %1817 = vmatpush1.msra.mxu0 %v1792
    %1818 = vmatprep.subr.mxu0 0.0
    %1819 = vmatpush1.msra.mxu0 %v1793
    %1820 = vmatprep.subr.mxu0 0.0
    %1821 = vmatpush1.msra.mxu0 %v1794
    %1822 = vmatprep.subr.mxu0 0.0
    %1823 = vmatpush1.msra.mxu0 0.0
    %1824 = vmatprep.subr.mxu0 0.0
    %1825 = vmatpush1.msra.mxu0 0.0
    %1826 = vmatprep.subr.mxu0 0.0
    %1827 = vmatpush1.msra.mxu0 0.0
    %1828 = vmatprep.subr.mxu0 0.0
    %1829 = vmatpush1.msra.mxu0 0.0
    %1830 = vmatprep.subr.mxu0 0.0
    %1831 = vmatpush1.msra.mxu0 0.0
    %1832 = vmatprep.subr.mxu0 0.0
    %1833 = vmatpush1.msra.mxu0 0.0
    %1834 = vmatprep.subr.mxu0 0.0
    %1835 = vmatpush1.msra.mxu0 0.0
    %1836 = vmatprep.subr.mxu0 0.0
    %1837 = vmatpush1.msra.mxu0 0.0
    %1838 = vmatprep.subr.mxu0 0.0
    %1839 = vmatpush1.msra.mxu0 0.0
    %1840 = vmatprep.subr.mxu0 0.0
    %1841 = vmatpush1.msra.mxu0 0.0
    %1842 = vmatprep.subr.mxu0 0.0
    %1843 = vmatpush1.msra.mxu0 0.0
    %1844 = vmatprep.subr.mxu0 0.0
    %1845 = vmatpush1.msra.mxu0 0.0
    %1846 = vmatprep.subr.mxu0 0.0
    %1847 = vmatpush1.msra.mxu0 0.0
    %1848 = vmatprep.subr.mxu0 0.0
    %1849 = vmatpush1.msra.mxu0 0.0
    %1850 = vmatprep.subr.mxu0 0.0
    %1851 = vmatpush1.msra.mxu0 0.0
    %1852 = vmatprep.subr.mxu0 0.0
    %1853 = vmatpush1.msra.mxu0 0.0
    %1854 = vmatprep.subr.mxu0 0.0
    %1855 = vmatpush1.msra.mxu0 0.0
    %1856 = vmatprep.subr.mxu0 0.0
    %1857 = vmatpush1.msra.mxu0 0.0
    %1858 = vmatprep.subr.mxu0 0.0
    %1859 = vmatpush1.msra.mxu0 0.0
    %1860 = vmatprep.subr.mxu0 0.0
    %1861 = vmatpush1.msra.mxu0 0.0
    %1862 = vmatprep.mubr.f32.mxu0 0.0
    %1863 = vmatmul.mubr.f32.gmra.mrb[0].mxu0 %v1796
    %v1864 = vpop.f32.mrb[0].mxu0
    %v1865 = vadd.f32 0.0, %v1864
    %v1866 = vpop.f32.mrb[0].mxu0
    %1867 = vdwg.mxu0
    %v1869 = vsel %vm206, %v1692, 0
    %1871 = vmatprep.subr.mxu0 0.0
    %1872 = vmatpush1.msra.mxu0 %v1695
    %1873 = vmatprep.subr.mxu0 0.0
    %1874 = vmatpush1.msra.mxu0 %v1696
    %1875 = vmatprep.subr.mxu0 0.0
    %1876 = vmatpush1.msra.mxu0 %v1697
    %1877 = vmatprep.subr.mxu0 0.0
    %1878 = vmatpush1.msra.mxu0 %v1698
    %1879 = vmatprep.subr.mxu0 0.0
    %1880 = vmatpush1.msra.mxu0 %v1699
    %1881 = vmatprep.subr.mxu0 0.0
    %1882 = vmatpush1.msra.mxu0 %v1700
    %1883 = vmatprep.subr.mxu0 0.0
    %1884 = vmatpush1.msra.mxu0 %v1701
    %1885 = vmatprep.subr.mxu0 0.0
    %1886 = vmatpush1.msra.mxu0 %v1702
    %1887 = vmatprep.subr.mxu0 0.0
    %1888 = vmatpush1.msra.mxu0 %v1703
    %1889 = vmatprep.subr.mxu0 0.0
    %1890 = vmatpush1.msra.mxu0 %v1704
    %1891 = vmatprep.subr.mxu0 0.0
    %1892 = vmatpush1.msra.mxu0 %v1705
    %1893 = vmatprep.subr.mxu0 0.0
    %1894 = vmatpush1.msra.mxu0 %v1706
    %1895 = vmatprep.subr.mxu0 0.0
    %1896 = vmatpush1.msra.mxu0 0.0
    %1897 = vmatprep.subr.mxu0 0.0
    %1898 = vmatpush1.msra.mxu0 0.0
    %1899 = vmatprep.subr.mxu0 0.0
    %1900 = vmatpush1.msra.mxu0 0.0
    %1901 = vmatprep.subr.mxu0 0.0
    %1902 = vmatpush1.msra.mxu0 0.0
    %1903 = vmatprep.subr.mxu0 0.0
    %1904 = vmatpush1.msra.mxu0 0.0
    %1905 = vmatprep.subr.mxu0 0.0
    %1906 = vmatpush1.msra.mxu0 0.0
    %1907 = vmatprep.subr.mxu0 0.0
    %1908 = vmatpush1.msra.mxu0 0.0
    %1909 = vmatprep.subr.mxu0 0.0
    %1910 = vmatpush1.msra.mxu0 0.0
    %1911 = vmatprep.subr.mxu0 0.0
    %1912 = vmatpush1.msra.mxu0 0.0
    %1913 = vmatprep.subr.mxu0 0.0
    %1914 = vmatpush1.msra.mxu0 0.0
    %1915 = vmatprep.subr.mxu0 0.0
    %1916 = vmatpush1.msra.mxu0 0.0
    %1917 = vmatprep.subr.mxu0 0.0
    %1918 = vmatpush1.msra.mxu0 0.0
    %1919 = vmatprep.subr.mxu0 0.0
    %1920 = vmatpush1.msra.mxu0 0.0
    %1921 = vmatprep.subr.mxu0 0.0
    %1922 = vmatpush1.msra.mxu0 0.0
    %1923 = vmatprep.subr.mxu0 0.0
    %1924 = vmatpush1.msra.mxu0 0.0
    %1925 = vmatprep.subr.mxu0 0.0
    %1926 = vmatpush1.msra.mxu0 0.0
    %1927 = vmatprep.subr.mxu0 0.0
    %1928 = vmatpush1.msra.mxu0 0.0
    %1929 = vmatprep.subr.mxu0 0.0
    %1930 = vmatpush1.msra.mxu0 0.0
    %1931 = vmatprep.subr.mxu0 0.0
    %1932 = vmatpush1.msra.mxu0 0.0
    %1933 = vmatprep.subr.mxu0 0.0
    %1934 = vmatpush1.msra.mxu0 0.0
    %1935 = vmatprep.mubr.f32.mxu0 0.0
    %1936 = vmatmul.mubr.f32.gmra.mrb[0].mxu0 %v1869
    %v1937 = vpop.f32.mrb[0].mxu0
    %v1938 = vadd.f32 %v1865, %v1937
    %v1939 = vpop.f32.mrb[0].mxu0
    %1940 = vdwg.mxu0
    %s1941 = scalar_lea.vmem [#allocation10], 8
    %v1942 = vld [vmem:[%s1941] sm:$0xf]
    %v1944 = vsel %vm1618, %v1942, 0
    %1946 = vmatprep.subr.mxu0 0.0
    %1947 = vmatpush1.msra.mxu0 %v1615
    %1948 = vmatprep.subr.mxu0 0.0
    %1949 = vmatpush1.msra.mxu0 %v1623
    %1950 = vmatprep.subr.mxu0 0.0
    %1951 = vmatpush1.msra.mxu0 0.0
    %1952 = vmatprep.subr.mxu0 0.0
    %1953 = vmatpush1.msra.mxu0 0.0
    %1954 = vmatprep.subr.mxu0 0.0
    %1955 = vmatpush1.msra.mxu0 0.0
    %1956 = vmatprep.subr.mxu0 0.0
    %1957 = vmatpush1.msra.mxu0 0.0
    %1958 = vmatprep.subr.mxu0 0.0
    %1959 = vmatpush1.msra.mxu0 0.0
    %1960 = vmatprep.subr.mxu0 0.0
    %1961 = vmatpush1.msra.mxu0 0.0
    %1962 = vmatprep.subr.mxu0 0.0
    %1963 = vmatpush1.msra.mxu0 0.0
    %1964 = vmatprep.subr.mxu0 0.0
    %1965 = vmatpush1.msra.mxu0 0.0
    %1966 = vmatprep.subr.mxu0 0.0
    %1967 = vmatpush1.msra.mxu0 0.0
    %1968 = vmatprep.subr.mxu0 0.0
    %1969 = vmatpush1.msra.mxu0 0.0
    %1970 = vmatprep.subr.mxu0 0.0
    %1971 = vmatpush1.msra.mxu0 0.0
    %1972 = vmatprep.subr.mxu0 0.0
    %1973 = vmatpush1.msra.mxu0 0.0
    %1974 = vmatprep.subr.mxu0 0.0
    %1975 = vmatpush1.msra.mxu0 0.0
    %1976 = vmatprep.subr.mxu0 0.0
    %1977 = vmatpush1.msra.mxu0 0.0
    %1978 = vmatprep.subr.mxu0 0.0
    %1979 = vmatpush1.msra.mxu0 0.0
    %1980 = vmatprep.subr.mxu0 0.0
    %1981 = vmatpush1.msra.mxu0 0.0
    %1982 = vmatprep.subr.mxu0 0.0
    %1983 = vmatpush1.msra.mxu0 0.0
    %1984 = vmatprep.subr.mxu0 0.0
    %1985 = vmatpush1.msra.mxu0 0.0
    %1986 = vmatprep.subr.mxu0 0.0
    %1987 = vmatpush1.msra.mxu0 0.0
    %1988 = vmatprep.subr.mxu0 0.0
    %1989 = vmatpush1.msra.mxu0 0.0
    %1990 = vmatprep.subr.mxu0 0.0
    %1991 = vmatpush1.msra.mxu0 0.0
    %1992 = vmatprep.subr.mxu0 0.0
    %1993 = vmatpush1.msra.mxu0 0.0
    %1994 = vmatprep.subr.mxu0 0.0
    %1995 = vmatpush1.msra.mxu0 0.0
    %1996 = vmatprep.subr.mxu0 0.0
    %1997 = vmatpush1.msra.mxu0 0.0
    %1998 = vmatprep.subr.mxu0 0.0
    %1999 = vmatpush1.msra.mxu0 0.0
    %2000 = vmatprep.subr.mxu0 0.0
    %2001 = vmatpush1.msra.mxu0 0.0
    %2002 = vmatprep.subr.mxu0 0.0
    %2003 = vmatpush1.msra.mxu0 0.0
    %2004 = vmatprep.subr.mxu0 0.0
    %2005 = vmatpush1.msra.mxu0 0.0
    %2006 = vmatprep.subr.mxu0 0.0
    %2007 = vmatpush1.msra.mxu0 0.0
    %2008 = vmatprep.subr.mxu0 0.0
    %2009 = vmatpush1.msra.mxu0 0.0
    %2010 = vmatprep.mubr.f32.mxu0 0.0
    %2011 = vmatmul.mubr.f32.gmra.mrb[0].mxu0 %v1944
    %v2012 = vpop.f32.mrb[0].mxu0
    %v2013 = vadd.f32 0.0, %v2012
    %v2014 = vpop.f32.mrb[0].mxu0
    %2015 = vdwg.mxu0
    %s2016 = scalar_lea.vmem %s10, 192
    %v2017 = vld [vmem:[%s2016] sm:$0xff]
    %v2018 = vld [vmem:[%s2016 + $0x8] sm:$0xff]
    %v2019 = vld [vmem:[%s2016 + $0x10] sm:$0xff]
    %v2020 = vld [vmem:[%s2016 + $0x18] sm:$0xff]
    %v2021 = vld [vmem:[%s2016 + $0x20] sm:$0xff]
    %v2022 = vld [vmem:[%s2016 + $0x28] sm:$0xff]
    %v2023 = vld [vmem:[%s2016 + $0x30] sm:$0xff]
    %v2024 = vld [vmem:[%s2016 + $0x38] sm:$0xff]
    %v2025 = vld [vmem:[%s2016 + $0x40] sm:$0xff]
    %v2026 = vld [vmem:[%s2016 + $0x48] sm:$0xff]
    %v2027 = vld [vmem:[%s2016 + $0x50] sm:$0xff]
    %v2028 = vld [vmem:[%s2016 + $0x58] sm:$0xff]
    %v2030 = vsel %vm206, %v2013, 0
    %2032 = vmatprep.subr.mxu0 0.0
    %2033 = vmatpush1.msra.mxu0 %v2017
    %2034 = vmatprep.subr.mxu0 0.0
    %2035 = vmatpush1.msra.mxu0 %v2018
    %2036 = vmatprep.subr.mxu0 0.0
    %2037 = vmatpush1.msra.mxu0 %v2019
    %2038 = vmatprep.subr.mxu0 0.0
    %2039 = vmatpush1.msra.mxu0 %v2020
    %2040 = vmatprep.subr.mxu0 0.0
    %2041 = vmatpush1.msra.mxu0 %v2021
    %2042 = vmatprep.subr.mxu0 0.0
    %2043 = vmatpush1.msra.mxu0 %v2022
    %2044 = vmatprep.subr.mxu0 0.0
    %2045 = vmatpush1.msra.mxu0 %v2023
    %2046 = vmatprep.subr.mxu0 0.0
    %2047 = vmatpush1.msra.mxu0 %v2024
    %2048 = vmatprep.subr.mxu0 0.0
    %2049 = vmatpush1.msra.mxu0 %v2025
    %2050 = vmatprep.subr.mxu0 0.0
    %2051 = vmatpush1.msra.mxu0 %v2026
    %2052 = vmatprep.subr.mxu0 0.0
    %2053 = vmatpush1.msra.mxu0 %v2027
    %2054 = vmatprep.subr.mxu0 0.0
    %2055 = vmatpush1.msra.mxu0 %v2028
    %2056 = vmatprep.subr.mxu0 0.0
    %2057 = vmatpush1.msra.mxu0 0.0
    %2058 = vmatprep.subr.mxu0 0.0
    %2059 = vmatpush1.msra.mxu0 0.0
    %2060 = vmatprep.subr.mxu0 0.0
    %2061 = vmatpush1.msra.mxu0 0.0
    %2062 = vmatprep.subr.mxu0 0.0
    %2063 = vmatpush1.msra.mxu0 0.0
    %2064 = vmatprep.subr.mxu0 0.0
    %2065 = vmatpush1.msra.mxu0 0.0
    %2066 = vmatprep.subr.mxu0 0.0
    %2067 = vmatpush1.msra.mxu0 0.0
    %2068 = vmatprep.subr.mxu0 0.0
    %2069 = vmatpush1.msra.mxu0 0.0
    %2070 = vmatprep.subr.mxu0 0.0
    %2071 = vmatpush1.msra.mxu0 0.0
    %2072 = vmatprep.subr.mxu0 0.0
    %2073 = vmatpush1.msra.mxu0 0.0
    %2074 = vmatprep.subr.mxu0 0.0
    %2075 = vmatpush1.msra.mxu0 0.0
    %2076 = vmatprep.subr.mxu0 0.0
    %2077 = vmatpush1.msra.mxu0 0.0
    %2078 = vmatprep.subr.mxu0 0.0
    %2079 = vmatpush1.msra.mxu0 0.0
    %2080 = vmatprep.subr.mxu0 0.0
    %2081 = vmatpush1.msra.mxu0 0.0
    %2082 = vmatprep.subr.mxu0 0.0
    %2083 = vmatpush1.msra.mxu0 0.0
    %2084 = vmatprep.subr.mxu0 0.0
    %2085 = vmatpush1.msra.mxu0 0.0
    %2086 = vmatprep.subr.mxu0 0.0
    %2087 = vmatpush1.msra.mxu0 0.0
    %2088 = vmatprep.subr.mxu0 0.0
    %2089 = vmatpush1.msra.mxu0 0.0
    %2090 = vmatprep.subr.mxu0 0.0
    %2091 = vmatpush1.msra.mxu0 0.0
    %2092 = vmatprep.subr.mxu0 0.0
    %2093 = vmatpush1.msra.mxu0 0.0
    %2094 = vmatprep.subr.mxu0 0.0
    %2095 = vmatpush1.msra.mxu0 0.0
    %2096 = vmatprep.mubr.f32.mxu0 0.0
    %2097 = vmatmul.mubr.f32.gmra.mrb[0].mxu0 %v2030
    %v2098 = vpop.f32.mrb[0].mxu0
    %v2099 = vadd.f32 0.0, %v2098
    %v2100 = vpop.f32.mrb[0].mxu0
    %2101 = vdwg.mxu0
    %v2102 = vadd.f32 %v1938, %v2099
    %s2103 = scalar_lea.vmem [#allocation10], 12
    %v2104 = vld [vmem:[%s2103] sm:$0xf]
    %v2106 = vsel %vm1618, %v2104, 0
    %2108 = vmatprep.subr.mxu0 0.0
    %2109 = vmatpush1.msra.mxu0 %v1615
    %2110 = vmatprep.subr.mxu0 0.0
    %2111 = vmatpush1.msra.mxu0 %v1623
    %2112 = vmatprep.subr.mxu0 0.0
    %2113 = vmatpush1.msra.mxu0 0.0
    %2114 = vmatprep.subr.mxu0 0.0
    %2115 = vmatpush1.msra.mxu0 0.0
    %2116 = vmatprep.subr.mxu0 0.0
    %2117 = vmatpush1.msra.mxu0 0.0
    %2118 = vmatprep.subr.mxu0 0.0
    %2119 = vmatpush1.msra.mxu0 0.0
    %2120 = vmatprep.subr.mxu0 0.0
    %2121 = vmatpush1.msra.mxu0 0.0
    %2122 = vmatprep.subr.mxu0 0.0
    %2123 = vmatpush1.msra.mxu0 0.0
    %2124 = vmatprep.subr.mxu0 0.0
    %2125 = vmatpush1.msra.mxu0 0.0
    %2126 = vmatprep.subr.mxu0 0.0
    %2127 = vmatpush1.msra.mxu0 0.0
    %2128 = vmatprep.subr.mxu0 0.0
    %2129 = vmatpush1.msra.mxu0 0.0
    %2130 = vmatprep.subr.mxu0 0.0
    %2131 = vmatpush1.msra.mxu0 0.0
    %2132 = vmatprep.subr.mxu0 0.0
    %2133 = vmatpush1.msra.mxu0 0.0
    %2134 = vmatprep.subr.mxu0 0.0
    %2135 = vmatpush1.msra.mxu0 0.0
    %2136 = vmatprep.subr.mxu0 0.0
    %2137 = vmatpush1.msra.mxu0 0.0
    %2138 = vmatprep.subr.mxu0 0.0
    %2139 = vmatpush1.msra.mxu0 0.0
    %2140 = vmatprep.subr.mxu0 0.0
    %2141 = vmatpush1.msra.mxu0 0.0
    %2142 = vmatprep.subr.mxu0 0.0
    %2143 = vmatpush1.msra.mxu0 0.0
    %2144 = vmatprep.subr.mxu0 0.0
    %2145 = vmatpush1.msra.mxu0 0.0
    %2146 = vmatprep.subr.mxu0 0.0
    %2147 = vmatpush1.msra.mxu0 0.0
    %2148 = vmatprep.subr.mxu0 0.0
    %2149 = vmatpush1.msra.mxu0 0.0
    %2150 = vmatprep.subr.mxu0 0.0
    %2151 = vmatpush1.msra.mxu0 0.0
    %2152 = vmatprep.subr.mxu0 0.0
    %2153 = vmatpush1.msra.mxu0 0.0
    %2154 = vmatprep.subr.mxu0 0.0
    %2155 = vmatpush1.msra.mxu0 0.0
    %2156 = vmatprep.subr.mxu0 0.0
    %2157 = vmatpush1.msra.mxu0 0.0
    %2158 = vmatprep.subr.mxu0 0.0
    %2159 = vmatpush1.msra.mxu0 0.0
    %2160 = vmatprep.subr.mxu0 0.0
    %2161 = vmatpush1.msra.mxu0 0.0
    %2162 = vmatprep.subr.mxu0 0.0
    %2163 = vmatpush1.msra.mxu0 0.0
    %2164 = vmatprep.subr.mxu0 0.0
    %2165 = vmatpush1.msra.mxu0 0.0
    %2166 = vmatprep.subr.mxu0 0.0
    %2167 = vmatpush1.msra.mxu0 0.0
    %2168 = vmatprep.subr.mxu0 0.0
    %2169 = vmatpush1.msra.mxu0 0.0
    %2170 = vmatprep.subr.mxu0 0.0
    %2171 = vmatpush1.msra.mxu0 0.0
    %2172 = vmatprep.mubr.f32.mxu0 0.0
    %2173 = vmatmul.mubr.f32.gmra.mrb[0].mxu0 %v2106
    %v2174 = vpop.f32.mrb[0].mxu0
    %v2175 = vadd.f32 0.0, %v2174
    %v2176 = vpop.f32.mrb[0].mxu0
    %2177 = vdwg.mxu0
    %s2178 = scalar_lea.vmem %s10, 288
    %v2179 = vld [vmem:[%s2178] sm:$0xff]
    %v2180 = vld [vmem:[%s2178 + $0x8] sm:$0xff]
    %v2181 = vld [vmem:[%s2178 + $0x10] sm:$0xff]
    %v2182 = vld [vmem:[%s2178 + $0x18] sm:$0xff]
    %v2183 = vld [vmem:[%s2178 + $0x20] sm:$0xff]
    %v2184 = vld [vmem:[%s2178 + $0x28] sm:$0xff]
    %v2185 = vld [vmem:[%s2178 + $0x30] sm:$0xff]
    %v2186 = vld [vmem:[%s2178 + $0x38] sm:$0xff]
    %v2187 = vld [vmem:[%s2178 + $0x40] sm:$0xff]
    %v2188 = vld [vmem:[%s2178 + $0x48] sm:$0xff]
    %v2189 = vld [vmem:[%s2178 + $0x50] sm:$0xff]
    %v2190 = vld [vmem:[%s2178 + $0x58] sm:$0xff]
    %v2192 = vsel %vm206, %v2175, 0
    %2194 = vmatprep.subr.mxu0 0.0
    %2195 = vmatpush1.msra.mxu0 %v2179
    %2196 = vmatprep.subr.mxu0 0.0
    %2197 = vmatpush1.msra.mxu0 %v2180
    %2198 = vmatprep.subr.mxu0 0.0
    %2199 = vmatpush1.msra.mxu0 %v2181
    %2200 = vmatprep.subr.mxu0 0.0
    %2201 = vmatpush1.msra.mxu0 %v2182
    %2202 = vmatprep.subr.mxu0 0.0
    %2203 = vmatpush1.msra.mxu0 %v2183
    %2204 = vmatprep.subr.mxu0 0.0
    %2205 = vmatpush1.msra.mxu0 %v2184
    %2206 = vmatprep.subr.mxu0 0.0
    %2207 = vmatpush1.msra.mxu0 %v2185
    %2208 = vmatprep.subr.mxu0 0.0
    %2209 = vmatpush1.msra.mxu0 %v2186
    %2210 = vmatprep.subr.mxu0 0.0
    %2211 = vmatpush1.msra.mxu0 %v2187
    %2212 = vmatprep.subr.mxu0 0.0
    %2213 = vmatpush1.msra.mxu0 %v2188
    %2214 = vmatprep.subr.mxu0 0.0
    %2215 = vmatpush1.msra.mxu0 %v2189
    %2216 = vmatprep.subr.mxu0 0.0
    %2217 = vmatpush1.msra.mxu0 %v2190
    %2218 = vmatprep.subr.mxu0 0.0
    %2219 = vmatpush1.msra.mxu0 0.0
    %2220 = vmatprep.subr.mxu0 0.0
    %2221 = vmatpush1.msra.mxu0 0.0
    %2222 = vmatprep.subr.mxu0 0.0
    %2223 = vmatpush1.msra.mxu0 0.0
    %2224 = vmatprep.subr.mxu0 0.0
    %2225 = vmatpush1.msra.mxu0 0.0
    %2226 = vmatprep.subr.mxu0 0.0
    %2227 = vmatpush1.msra.mxu0 0.0
    %2228 = vmatprep.subr.mxu0 0.0
    %2229 = vmatpush1.msra.mxu0 0.0
    %2230 = vmatprep.subr.mxu0 0.0
    %2231 = vmatpush1.msra.mxu0 0.0
    %2232 = vmatprep.subr.mxu0 0.0
    %2233 = vmatpush1.msra.mxu0 0.0
    %2234 = vmatprep.subr.mxu0 0.0
    %2235 = vmatpush1.msra.mxu0 0.0
    %2236 = vmatprep.subr.mxu0 0.0
    %2237 = vmatpush1.msra.mxu0 0.0
    %2238 = vmatprep.subr.mxu0 0.0
    %2239 = vmatpush1.msra.mxu0 0.0
    %2240 = vmatprep.subr.mxu0 0.0
    %2241 = vmatpush1.msra.mxu0 0.0
    %2242 = vmatprep.subr.mxu0 0.0
    %2243 = vmatpush1.msra.mxu0 0.0
    %2244 = vmatprep.subr.mxu0 0.0
    %2245 = vmatpush1.msra.mxu0 0.0
    %2246 = vmatprep.subr.mxu0 0.0
    %2247 = vmatpush1.msra.mxu0 0.0
    %2248 = vmatprep.subr.mxu0 0.0
    %2249 = vmatpush1.msra.mxu0 0.0
    %2250 = vmatprep.subr.mxu0 0.0
    %2251 = vmatpush1.msra.mxu0 0.0
    %2252 = vmatprep.subr.mxu0 0.0
    %2253 = vmatpush1.msra.mxu0 0.0
    %2254 = vmatprep.subr.mxu0 0.0
    %2255 = vmatpush1.msra.mxu0 0.0
    %2256 = vmatprep.subr.mxu0 0.0
    %2257 = vmatpush1.msra.mxu0 0.0
    %2258 = vmatprep.mubr.f32.mxu0 0.0
    %2259 = vmatmul.mubr.f32.gmra.mrb[0].mxu0 %v2192
    %v2260 = vpop.f32.mrb[0].mxu0
    %v2261 = vadd.f32 0.0, %v2260
    %v2262 = vpop.f32.mrb[0].mxu0
    %2263 = vdwg.mxu0
    %v2264 = vadd.f32 %v2102, %v2261
    %v2265 = vld [vmem:[#allocation12] sm:$0x1]
    %v2267 = vlaneseq
    %v2268 = vshrl.u32 %v2267, 7
    %v2269 = vsub.s32 0, %v2268
    %v2270 = vrot.slane %v2265, %v2269
    %v2272 = vadd.f32 %v2264, %v2270
    %s2273 = sld [smem:[#allocation21 + $0x2]]
    %vm2274 = vcmp.ge.f32.partialorder %v2272, 0.0
    %v2275 = vstv %s2273
    %v2276 = vmul.f32 %v2275, %v2272
    %v2277 = vsel %vm2274, %v2272, %v2276
    %v2278 = vld [vmem:[#allocation13] sm:$0x3]
    %vm2279 = vcmask 31744
    %v2281 = vsel %vm2279, %v2278, 0
    %v2284 = vsel %vm224, %v2277, 0
    %2286 = vmatprep.subr.mxu0 0.0
    %2287 = vmatpush1.msra.mxu0 %v2284
    %2288 = vmatprep.subr.mxu0 0.0
    %2289 = vmatpush1.msra.mxu0 0.0
    %2290 = vmatprep.subr.mxu0 0.0
    %2291 = vmatpush1.msra.mxu0 0.0
    %2292 = vmatprep.subr.mxu0 0.0
    %2293 = vmatpush1.msra.mxu0 0.0
    %2294 = vmatprep.subr.mxu0 0.0
    %2295 = vmatpush1.msra.mxu0 0.0
    %2296 = vmatprep.subr.mxu0 0.0
    %2297 = vmatpush1.msra.mxu0 0.0
    %2298 = vmatprep.subr.mxu0 0.0
    %2299 = vmatpush1.msra.mxu0 0.0
    %2300 = vmatprep.subr.mxu0 0.0
    %2301 = vmatpush1.msra.mxu0 0.0
    %2302 = vmatprep.subr.mxu0 0.0
    %2303 = vmatpush1.msra.mxu0 0.0
    %2304 = vmatprep.subr.mxu0 0.0
    %2305 = vmatpush1.msra.mxu0 0.0
    %2306 = vmatprep.subr.mxu0 0.0
    %2307 = vmatpush1.msra.mxu0 0.0
    %2308 = vmatprep.subr.mxu0 0.0
    %2309 = vmatpush1.msra.mxu0 0.0
    %2310 = vmatprep.subr.mxu0 0.0
    %2311 = vmatpush1.msra.mxu0 0.0
    %2312 = vmatprep.subr.mxu0 0.0
    %2313 = vmatpush1.msra.mxu0 0.0
    %2314 = vmatprep.subr.mxu0 0.0
    %2315 = vmatpush1.msra.mxu0 0.0
    %2316 = vmatprep.subr.mxu0 0.0
    %2317 = vmatpush1.msra.mxu0 0.0
    %2318 = vmatprep.subr.mxu0 0.0
    %2319 = vmatpush1.msra.mxu0 0.0
    %2320 = vmatprep.subr.mxu0 0.0
    %2321 = vmatpush1.msra.mxu0 0.0
    %2322 = vmatprep.subr.mxu0 0.0
    %2323 = vmatpush1.msra.mxu0 0.0
    %2324 = vmatprep.subr.mxu0 0.0
    %2325 = vmatpush1.msra.mxu0 0.0
    %2326 = vmatprep.subr.mxu0 0.0
    %2327 = vmatpush1.msra.mxu0 0.0
    %2328 = vmatprep.subr.mxu0 0.0
    %2329 = vmatpush1.msra.mxu0 0.0
    %2330 = vmatprep.subr.mxu0 0.0
    %2331 = vmatpush1.msra.mxu0 0.0
    %2332 = vmatprep.subr.mxu0 0.0
    %2333 = vmatpush1.msra.mxu0 0.0
    %2334 = vmatprep.subr.mxu0 0.0
    %2335 = vmatpush1.msra.mxu0 0.0
    %2336 = vmatprep.subr.mxu0 0.0
    %2337 = vmatpush1.msra.mxu0 0.0
    %2338 = vmatprep.subr.mxu0 0.0
    %2339 = vmatpush1.msra.mxu0 0.0
    %2340 = vmatprep.subr.mxu0 0.0
    %2341 = vmatpush1.msra.mxu0 0.0
    %2342 = vmatprep.subr.mxu0 0.0
    %2343 = vmatpush1.msra.mxu0 0.0
    %2344 = vmatprep.subr.mxu0 0.0
    %2345 = vmatpush1.msra.mxu0 0.0
    %2346 = vmatprep.subr.mxu0 0.0
    %2347 = vmatpush1.msra.mxu0 0.0
    %2348 = vmatprep.subr.mxu0 0.0
    %2349 = vmatpush1.msra.mxu0 0.0
    %2350 = vmatprep.mubr.f32.mxu0 0.0
    %2351 = vmatmul.mubr.f32.gmra.mrb[0].mxu0 %v2281
    %v2352 = vpop.f32.mrb[0].mxu0
    %v2353 = vadd.f32 0.0, %v2352
    %v2354 = vpop.f32.mrb[0].mxu0
    %2355 = vdwg.mxu0
    %v2356 = vld [vmem:[%s13] sm:$0xff]
    %v2357 = vld [vmem:[%s13 + $0x8] sm:$0xff]
    %v2358 = vld [vmem:[%s13 + $0x10] sm:$0xff]
    %v2359 = vld [vmem:[%s13 + $0x18] sm:$0xff]
    %v2360 = vld [vmem:[%s13 + $0x20] sm:$0xff]
    %v2361 = vld [vmem:[%s13 + $0x28] sm:$0xff]
    %v2362 = vld [vmem:[%s13 + $0x30] sm:$0xff]
    %v2363 = vld [vmem:[%s13 + $0x38] sm:$0xff]
    %s2364 = scalar_lea.vmem [#allocation13], 2
    %v2365 = vld [vmem:[%s2364] sm:$0x3]
    %v2367 = vsel %vm2279, %v2365, 0
    %2369 = vmatprep.subr.mxu0 0.0
    %2370 = vmatpush1.msra.mxu0 %v2284
    %2371 = vmatprep.subr.mxu0 0.0
    %2372 = vmatpush1.msra.mxu0 0.0
    %2373 = vmatprep.subr.mxu0 0.0
    %2374 = vmatpush1.msra.mxu0 0.0
    %2375 = vmatprep.subr.mxu0 0.0
    %2376 = vmatpush1.msra.mxu0 0.0
    %2377 = vmatprep.subr.mxu0 0.0
    %2378 = vmatpush1.msra.mxu0 0.0
    %2379 = vmatprep.subr.mxu0 0.0
    %2380 = vmatpush1.msra.mxu0 0.0
    %2381 = vmatprep.subr.mxu0 0.0
    %2382 = vmatpush1.msra.mxu0 0.0
    %2383 = vmatprep.subr.mxu0 0.0
    %2384 = vmatpush1.msra.mxu0 0.0
    %2385 = vmatprep.subr.mxu0 0.0
    %2386 = vmatpush1.msra.mxu0 0.0
    %2387 = vmatprep.subr.mxu0 0.0
    %2388 = vmatpush1.msra.mxu0 0.0
    %2389 = vmatprep.subr.mxu0 0.0
    %2390 = vmatpush1.msra.mxu0 0.0
    %2391 = vmatprep.subr.mxu0 0.0
    %2392 = vmatpush1.msra.mxu0 0.0
    %2393 = vmatprep.subr.mxu0 0.0
    %2394 = vmatpush1.msra.mxu0 0.0
    %2395 = vmatprep.subr.mxu0 0.0
    %2396 = vmatpush1.msra.mxu0 0.0
    %2397 = vmatprep.subr.mxu0 0.0
    %2398 = vmatpush1.msra.mxu0 0.0
    %2399 = vmatprep.subr.mxu0 0.0
    %2400 = vmatpush1.msra.mxu0 0.0
    %2401 = vmatprep.subr.mxu0 0.0
    %2402 = vmatpush1.msra.mxu0 0.0
    %2403 = vmatprep.subr.mxu0 0.0
    %2404 = vmatpush1.msra.mxu0 0.0
    %2405 = vmatprep.subr.mxu0 0.0
    %2406 = vmatpush1.msra.mxu0 0.0
    %2407 = vmatprep.subr.mxu0 0.0
    %2408 = vmatpush1.msra.mxu0 0.0
    %2409 = vmatprep.subr.mxu0 0.0
    %2410 = vmatpush1.msra.mxu0 0.0
    %2411 = vmatprep.subr.mxu0 0.0
    %2412 = vmatpush1.msra.mxu0 0.0
    %2413 = vmatprep.subr.mxu0 0.0
    %2414 = vmatpush1.msra.mxu0 0.0
    %2415 = vmatprep.subr.mxu0 0.0
    %2416 = vmatpush1.msra.mxu0 0.0
    %2417 = vmatprep.subr.mxu0 0.0
    %2418 = vmatpush1.msra.mxu0 0.0
    %2419 = vmatprep.subr.mxu0 0.0
    %2420 = vmatpush1.msra.mxu0 0.0
    %2421 = vmatprep.subr.mxu0 0.0
    %2422 = vmatpush1.msra.mxu0 0.0
    %2423 = vmatprep.subr.mxu0 0.0
    %2424 = vmatpush1.msra.mxu0 0.0
    %2425 = vmatprep.subr.mxu0 0.0
    %2426 = vmatpush1.msra.mxu0 0.0
    %2427 = vmatprep.subr.mxu0 0.0
    %2428 = vmatpush1.msra.mxu0 0.0
    %2429 = vmatprep.subr.mxu0 0.0
    %2430 = vmatpush1.msra.mxu0 0.0
    %2431 = vmatprep.subr.mxu0 0.0
    %2432 = vmatpush1.msra.mxu0 0.0
    %2433 = vmatprep.mubr.f32.mxu0 0.0
    %2434 = vmatmul.mubr.f32.gmra.mrb[0].mxu0 %v2367
    %v2435 = vpop.f32.mrb[0].mxu0
    %v2436 = vadd.f32 0.0, %v2435
    %v2437 = vpop.f32.mrb[0].mxu0
    %2438 = vdwg.mxu0
    %v2439 = vld [vmem:[%s13 + $0x40] sm:$0xff]
    %v2440 = vld [vmem:[%s13 + $0x48] sm:$0xff]
    %v2441 = vld [vmem:[%s13 + $0x50] sm:$0xff]
    %v2442 = vld [vmem:[%s13 + $0x58] sm:$0xff]
    %v2443 = vld [vmem:[%s13 + $0x60] sm:$0xff]
    %v2444 = vld [vmem:[%s13 + $0x68] sm:$0xff]
    %v2445 = vld [vmem:[%s13 + $0x70] sm:$0xff]
    %v2446 = vld [vmem:[%s13 + $0x78] sm:$0xff]
    %vm2447 = vcmask 523264
    %v2449 = vsel %vm2447, %v2436, 0
    %2451 = vmatprep.subr.mxu0 0.0
    %2452 = vmatpush1.msra.mxu0 %v2439
    %2453 = vmatprep.subr.mxu0 0.0
    %2454 = vmatpush1.msra.mxu0 %v2440
    %2455 = vmatprep.subr.mxu0 0.0
    %2456 = vmatpush1.msra.mxu0 %v2441
    %2457 = vmatprep.subr.mxu0 0.0
    %2458 = vmatpush1.msra.mxu0 %v2442
    %2459 = vmatprep.subr.mxu0 0.0
    %2460 = vmatpush1.msra.mxu0 %v2443
    %2461 = vmatprep.subr.mxu0 0.0
    %2462 = vmatpush1.msra.mxu0 %v2444
    %2463 = vmatprep.subr.mxu0 0.0
    %2464 = vmatpush1.msra.mxu0 %v2445
    %2465 = vmatprep.subr.mxu0 0.0
    %2466 = vmatpush1.msra.mxu0 %v2446
    %2467 = vmatprep.subr.mxu0 0.0
    %2468 = vmatpush1.msra.mxu0 0.0
    %2469 = vmatprep.subr.mxu0 0.0
    %2470 = vmatpush1.msra.mxu0 0.0
    %2471 = vmatprep.subr.mxu0 0.0
    %2472 = vmatpush1.msra.mxu0 0.0
    %2473 = vmatprep.subr.mxu0 0.0
    %2474 = vmatpush1.msra.mxu0 0.0
    %2475 = vmatprep.subr.mxu0 0.0
    %2476 = vmatpush1.msra.mxu0 0.0
    %2477 = vmatprep.subr.mxu0 0.0
    %2478 = vmatpush1.msra.mxu0 0.0
    %2479 = vmatprep.subr.mxu0 0.0
    %2480 = vmatpush1.msra.mxu0 0.0
    %2481 = vmatprep.subr.mxu0 0.0
    %2482 = vmatpush1.msra.mxu0 0.0
    %2483 = vmatprep.subr.mxu0 0.0
    %2484 = vmatpush1.msra.mxu0 0.0
    %2485 = vmatprep.subr.mxu0 0.0
    %2486 = vmatpush1.msra.mxu0 0.0
    %2487 = vmatprep.subr.mxu0 0.0
    %2488 = vmatpush1.msra.mxu0 0.0
    %2489 = vmatprep.subr.mxu0 0.0
    %2490 = vmatpush1.msra.mxu0 0.0
    %2491 = vmatprep.subr.mxu0 0.0
    %2492 = vmatpush1.msra.mxu0 0.0
    %2493 = vmatprep.subr.mxu0 0.0
    %2494 = vmatpush1.msra.mxu0 0.0
    %2495 = vmatprep.subr.mxu0 0.0
    %2496 = vmatpush1.msra.mxu0 0.0
    %2497 = vmatprep.subr.mxu0 0.0
    %2498 = vmatpush1.msra.mxu0 0.0
    %2499 = vmatprep.subr.mxu0 0.0
    %2500 = vmatpush1.msra.mxu0 0.0
    %2501 = vmatprep.subr.mxu0 0.0
    %2502 = vmatpush1.msra.mxu0 0.0
    %2503 = vmatprep.subr.mxu0 0.0
    %2504 = vmatpush1.msra.mxu0 0.0
    %2505 = vmatprep.subr.mxu0 0.0
    %2506 = vmatpush1.msra.mxu0 0.0
    %2507 = vmatprep.subr.mxu0 0.0
    %2508 = vmatpush1.msra.mxu0 0.0
    %2509 = vmatprep.subr.mxu0 0.0
    %2510 = vmatpush1.msra.mxu0 0.0
    %2511 = vmatprep.subr.mxu0 0.0
    %2512 = vmatpush1.msra.mxu0 0.0
    %2513 = vmatprep.subr.mxu0 0.0
    %2514 = vmatpush1.msra.mxu0 0.0
    %2515 = vmatprep.mubr.f32.mxu0 0.0
    %2516 = vmatmul.mubr.f32.gmra.mrb[0].mxu0 %v2449
    %v2517 = vpop.f32.mrb[0].mxu0
    %v2518 = vadd.f32 0.0, %v2517
    %v2519 = vpop.f32.mrb[0].mxu0
    %2520 = vdwg.mxu0
    %v2522 = vsel %vm2447, %v2353, 0
    %2524 = vmatprep.subr.mxu0 0.0
    %2525 = vmatpush1.msra.mxu0 %v2356
    %2526 = vmatprep.subr.mxu0 0.0
    %2527 = vmatpush1.msra.mxu0 %v2357
    %2528 = vmatprep.subr.mxu0 0.0
    %2529 = vmatpush1.msra.mxu0 %v2358
    %2530 = vmatprep.subr.mxu0 0.0
    %2531 = vmatpush1.msra.mxu0 %v2359
    %2532 = vmatprep.subr.mxu0 0.0
    %2533 = vmatpush1.msra.mxu0 %v2360
    %2534 = vmatprep.subr.mxu0 0.0
    %2535 = vmatpush1.msra.mxu0 %v2361
    %2536 = vmatprep.subr.mxu0 0.0
    %2537 = vmatpush1.msra.mxu0 %v2362
    %2538 = vmatprep.subr.mxu0 0.0
    %2539 = vmatpush1.msra.mxu0 %v2363
    %2540 = vmatprep.subr.mxu0 0.0
    %2541 = vmatpush1.msra.mxu0 0.0
    %2542 = vmatprep.subr.mxu0 0.0
    %2543 = vmatpush1.msra.mxu0 0.0
    %2544 = vmatprep.subr.mxu0 0.0
    %2545 = vmatpush1.msra.mxu0 0.0
    %2546 = vmatprep.subr.mxu0 0.0
    %2547 = vmatpush1.msra.mxu0 0.0
    %2548 = vmatprep.subr.mxu0 0.0
    %2549 = vmatpush1.msra.mxu0 0.0
    %2550 = vmatprep.subr.mxu0 0.0
    %2551 = vmatpush1.msra.mxu0 0.0
    %2552 = vmatprep.subr.mxu0 0.0
    %2553 = vmatpush1.msra.mxu0 0.0
    %2554 = vmatprep.subr.mxu0 0.0
    %2555 = vmatpush1.msra.mxu0 0.0
    %2556 = vmatprep.subr.mxu0 0.0
    %2557 = vmatpush1.msra.mxu0 0.0
    %2558 = vmatprep.subr.mxu0 0.0
    %2559 = vmatpush1.msra.mxu0 0.0
    %2560 = vmatprep.subr.mxu0 0.0
    %2561 = vmatpush1.msra.mxu0 0.0
    %2562 = vmatprep.subr.mxu0 0.0
    %2563 = vmatpush1.msra.mxu0 0.0
    %2564 = vmatprep.subr.mxu0 0.0
    %2565 = vmatpush1.msra.mxu0 0.0
    %2566 = vmatprep.subr.mxu0 0.0
    %2567 = vmatpush1.msra.mxu0 0.0
    %2568 = vmatprep.subr.mxu0 0.0
    %2569 = vmatpush1.msra.mxu0 0.0
    %2570 = vmatprep.subr.mxu0 0.0
    %2571 = vmatpush1.msra.mxu0 0.0
    %2572 = vmatprep.subr.mxu0 0.0
    %2573 = vmatpush1.msra.mxu0 0.0
    %2574 = vmatprep.subr.mxu0 0.0
    %2575 = vmatpush1.msra.mxu0 0.0
    %2576 = vmatprep.subr.mxu0 0.0
    %2577 = vmatpush1.msra.mxu0 0.0
    %2578 = vmatprep.subr.mxu0 0.0
    %2579 = vmatpush1.msra.mxu0 0.0
    %2580 = vmatprep.subr.mxu0 0.0
    %2581 = vmatpush1.msra.mxu0 0.0
    %2582 = vmatprep.subr.mxu0 0.0
    %2583 = vmatpush1.msra.mxu0 0.0
    %2584 = vmatprep.subr.mxu0 0.0
    %2585 = vmatpush1.msra.mxu0 0.0
    %2586 = vmatprep.subr.mxu0 0.0
    %2587 = vmatpush1.msra.mxu0 0.0
    %2588 = vmatprep.mubr.f32.mxu0 0.0
    %2589 = vmatmul.mubr.f32.gmra.mrb[0].mxu0 %v2522
    %v2590 = vpop.f32.mrb[0].mxu0
    %v2591 = vadd.f32 %v2518, %v2590
    %v2592 = vpop.f32.mrb[0].mxu0
    %2593 = vdwg.mxu0
    %v2594 = vld [vmem:[#allocation15] sm:$0x1]
    %v2596 = vlaneseq
    %v2597 = vshrl.u32 %v2596, 7
    %v2598 = vsub.s32 0, %v2597
    %v2599 = vrot.slane %v2594, %v2598
    %v2601 = vadd.f32 %v2591, %v2599
    %s2602 = sld [smem:[#allocation21 + $0x3]]
    %vm2603 = vcmp.ge.f32.partialorder %v2601, 0.0
    %v2604 = vstv %s2602
    %v2605 = vmul.f32 %v2604, %v2601
    %v2606 = vsel %vm2603, %v2601, %v2605
    %v2607 = vld [vmem:[#allocation16] sm:$0xff]
    %v2608 = vld [vmem:[#allocation16 + $0x8] sm:$0xff]
    %v2609 = vld [vmem:[%s1] sm:$0x3]
    %v2610 = vld [vmem:[#allocation18] sm:$0x7]
    %vm2611 = vcmask 23552
    %v2613 = vsel %vm2611, %v2609, 0
    %vm2615 = vcmask 1042432
    %v2617 = vsel %vm2615, %v2610, 0
    %2619 = vmatprep.subr.mxu0 0.0
    %2620 = vmatpush1.msra.mxu0 %v2617
    %2621 = vmatprep.subr.mxu0 0.0
    %2622 = vmatpush1.msra.mxu0 0.0
    %2623 = vmatprep.subr.mxu0 0.0
    %2624 = vmatpush1.msra.mxu0 0.0
    %2625 = vmatprep.subr.mxu0 0.0
    %2626 = vmatpush1.msra.mxu0 0.0
    %2627 = vmatprep.subr.mxu0 0.0
    %2628 = vmatpush1.msra.mxu0 0.0
    %2629 = vmatprep.subr.mxu0 0.0
    %2630 = vmatpush1.msra.mxu0 0.0
    %2631 = vmatprep.subr.mxu0 0.0
    %2632 = vmatpush1.msra.mxu0 0.0
    %2633 = vmatprep.subr.mxu0 0.0
    %2634 = vmatpush1.msra.mxu0 0.0
    %2635 = vmatprep.subr.mxu0 0.0
    %2636 = vmatpush1.msra.mxu0 0.0
    %2637 = vmatprep.subr.mxu0 0.0
    %2638 = vmatpush1.msra.mxu0 0.0
    %2639 = vmatprep.subr.mxu0 0.0
    %2640 = vmatpush1.msra.mxu0 0.0
    %2641 = vmatprep.subr.mxu0 0.0
    %2642 = vmatpush1.msra.mxu0 0.0
    %2643 = vmatprep.subr.mxu0 0.0
    %2644 = vmatpush1.msra.mxu0 0.0
    %2645 = vmatprep.subr.mxu0 0.0
    %2646 = vmatpush1.msra.mxu0 0.0
    %2647 = vmatprep.subr.mxu0 0.0
    %2648 = vmatpush1.msra.mxu0 0.0
    %2649 = vmatprep.subr.mxu0 0.0
    %2650 = vmatpush1.msra.mxu0 0.0
    %2651 = vmatprep.subr.mxu0 0.0
    %2652 = vmatpush1.msra.mxu0 0.0
    %2653 = vmatprep.subr.mxu0 0.0
    %2654 = vmatpush1.msra.mxu0 0.0
    %2655 = vmatprep.subr.mxu0 0.0
    %2656 = vmatpush1.msra.mxu0 0.0
    %2657 = vmatprep.subr.mxu0 0.0
    %2658 = vmatpush1.msra.mxu0 0.0
    %2659 = vmatprep.subr.mxu0 0.0
    %2660 = vmatpush1.msra.mxu0 0.0
    %2661 = vmatprep.subr.mxu0 0.0
    %2662 = vmatpush1.msra.mxu0 0.0
    %2663 = vmatprep.subr.mxu0 0.0
    %2664 = vmatpush1.msra.mxu0 0.0
    %2665 = vmatprep.subr.mxu0 0.0
    %2666 = vmatpush1.msra.mxu0 0.0
    %2667 = vmatprep.subr.mxu0 0.0
    %2668 = vmatpush1.msra.mxu0 0.0
    %2669 = vmatprep.subr.mxu0 0.0
    %2670 = vmatpush1.msra.mxu0 0.0
    %2671 = vmatprep.subr.mxu0 0.0
    %2672 = vmatpush1.msra.mxu0 0.0
    %2673 = vmatprep.subr.mxu0 0.0
    %2674 = vmatpush1.msra.mxu0 0.0
    %2675 = vmatprep.subr.mxu0 0.0
    %2676 = vmatpush1.msra.mxu0 0.0
    %2677 = vmatprep.subr.mxu0 0.0
    %2678 = vmatpush1.msra.mxu0 0.0
    %2679 = vmatprep.subr.mxu0 0.0
    %2680 = vmatpush1.msra.mxu0 0.0
    %2681 = vmatprep.subr.mxu0 0.0
    %2682 = vmatpush1.msra.mxu0 0.0
    %2683 = vmatprep.mubr.f32.mxu0 0.0
    %2684 = vmatmul.mubr.f32.gmra.mrb[0].mxu0 %v2613
    %v2685 = vpop.f32.mrb[0].mxu0
    %v2686 = vadd.f32 0.0, %v2685
    %v2687 = vpop.f32.mrb[0].mxu0
    %2688 = vdwg.mxu0
    %vm2689 = vcmask 130048
    %v2691 = vsel %vm2689, %v2606, 0
    %2693 = vmatprep.subr.mxu0 0.0
    %2694 = vmatpush1.msra.mxu0 %v2607
    %2695 = vmatprep.subr.mxu0 0.0
    %2696 = vmatpush1.msra.mxu0 %v2608
    %2697 = vmatprep.subr.mxu0 0.0
    %2698 = vmatpush1.msra.mxu0 0.0
    %2699 = vmatprep.subr.mxu0 0.0
    %2700 = vmatpush1.msra.mxu0 0.0
    %2701 = vmatprep.subr.mxu0 0.0
    %2702 = vmatpush1.msra.mxu0 0.0
    %2703 = vmatprep.subr.mxu0 0.0
    %2704 = vmatpush1.msra.mxu0 0.0
    %2705 = vmatprep.subr.mxu0 0.0
    %2706 = vmatpush1.msra.mxu0 0.0
    %2707 = vmatprep.subr.mxu0 0.0
    %2708 = vmatpush1.msra.mxu0 0.0
    %2709 = vmatprep.subr.mxu0 0.0
    %2710 = vmatpush1.msra.mxu0 0.0
    %2711 = vmatprep.subr.mxu0 0.0
    %2712 = vmatpush1.msra.mxu0 0.0
    %2713 = vmatprep.subr.mxu0 0.0
    %2714 = vmatpush1.msra.mxu0 0.0
    %2715 = vmatprep.subr.mxu0 0.0
    %2716 = vmatpush1.msra.mxu0 0.0
    %2717 = vmatprep.subr.mxu0 0.0
    %2718 = vmatpush1.msra.mxu0 0.0
    %2719 = vmatprep.subr.mxu0 0.0
    %2720 = vmatpush1.msra.mxu0 0.0
    %2721 = vmatprep.subr.mxu0 0.0
    %2722 = vmatpush1.msra.mxu0 0.0
    %2723 = vmatprep.subr.mxu0 0.0
    %2724 = vmatpush1.msra.mxu0 0.0
    %2725 = vmatprep.subr.mxu0 0.0
    %2726 = vmatpush1.msra.mxu0 0.0
    %2727 = vmatprep.subr.mxu0 0.0
    %2728 = vmatpush1.msra.mxu0 0.0
    %2729 = vmatprep.subr.mxu0 0.0
    %2730 = vmatpush1.msra.mxu0 0.0
    %2731 = vmatprep.subr.mxu0 0.0
    %2732 = vmatpush1.msra.mxu0 0.0
    %2733 = vmatprep.subr.mxu0 0.0
    %2734 = vmatpush1.msra.mxu0 0.0
    %2735 = vmatprep.subr.mxu0 0.0
    %2736 = vmatpush1.msra.mxu0 0.0
    %2737 = vmatprep.subr.mxu0 0.0
    %2738 = vmatpush1.msra.mxu0 0.0
    %2739 = vmatprep.subr.mxu0 0.0
    %2740 = vmatpush1.msra.mxu0 0.0
    %2741 = vmatprep.subr.mxu0 0.0
    %2742 = vmatpush1.msra.mxu0 0.0
    %2743 = vmatprep.subr.mxu0 0.0
    %2744 = vmatpush1.msra.mxu0 0.0
    %2745 = vmatprep.subr.mxu0 0.0
    %2746 = vmatpush1.msra.mxu0 0.0
    %2747 = vmatprep.subr.mxu0 0.0
    %2748 = vmatpush1.msra.mxu0 0.0
    %2749 = vmatprep.subr.mxu0 0.0
    %2750 = vmatpush1.msra.mxu0 0.0
    %2751 = vmatprep.subr.mxu0 0.0
    %2752 = vmatpush1.msra.mxu0 0.0
    %2753 = vmatprep.subr.mxu0 0.0
    %2754 = vmatpush1.msra.mxu0 0.0
    %2755 = vmatprep.subr.mxu0 0.0
    %2756 = vmatpush1.msra.mxu0 0.0
    %2757 = vmatprep.mubr.f32.mxu0 0.0
    %2758 = vmatmul.mubr.f32.gmra.mrb[0].mxu0 %v2691
    %v2759 = vpop.f32.mrb[0].mxu0
    %v2760 = vadd.f32 %v2686, %v2759
    %v2761 = vpop.f32.mrb[0].mxu0
    %2762 = vdwg.mxu0
    %v2763 = vld [vmem:[#allocation19] sm:$0x1]
    %v2765 = vlaneseq
    %v2766 = vshrl.u32 %v2765, 7
    %v2767 = vsub.s32 0, %v2766
    %v2768 = vrot.slane %v2763, %v2767
    %v2770 = vadd.f32 %v2760, %v2768
    %v2771 = vld [vmem:[#allocation4] sm:$0x3]
    %v2772 = vmul.f32 %v2770, 0.5
    %v2773 = vmul.f32 %v2772, 1.442695
    %v2774 = vpow.pop %v2773
    %2776 = vrot.lane.b32.xlu0 %v2774, 112
    %v2777 = vpop.permute.xlu0 %2776
    %v2779 = vmul.f32 %v2771, %v2777
    %v2780 = vadd.f32 %v2779, %v2770
    %vm2781 = vcmask 123904
    %2782 = vst.msk [vmem:[%s19] sm:$0x3] %vm2781, %v2780
    %2784 = vrot.lane.b32.xlu0 %v2770, 16
    %v2785 = vpop.permute.xlu0 %2784
    %vm2787 = vcmask 386176
    %2788 = vst.msk [vmem:[%s19] sm:$0x3] %vm2787, %v2785
    // Predicated region
    $region122: #{forward.1} parent=1 // pred_check
      _
    $region123: #{forward.1} parent=1 // pred_check_branch
      %2790 = sbr.rel (0) target = $region125
    $region124: #{forward.1} parent=1 // pred_region
      _
    $region125: #{forward.1} parent=1 // pred_fallthru
      _
    // Predicated region
    $region126: #{forward.1} parent=1 // pred_check
      _
    $region127: #{forward.1} parent=1 // pred_check_branch
      %2792 = sbr.rel (0) target = $region129
    $region128: #{forward.1} parent=1 // pred_region
      _
    $region129: #{forward.1} parent=1 // pred_fallthru
      _
    %2793 = vsyncpa [#allocation5], 1
    %2794 = vsyncpa [#allocation8], 1
    %2795 = vsyncpa [#allocation11], 1
    %2796 = vsyncpa [#allocation14], 1
    %2797 = vsyncpa [#allocation17], 1
    %2798 = vsyncpa [#allocation20], 1
    %2799 = vsyncpa [#allocation6], 1

</llo_original>
